<compile_context>
chip_gen: v7x
topology: tpu7x:2x2x1
jax: 0.10.0
libtpu: 0.0.40
codegen_flags: <defaults>
</compile_context>

<pallas_src>
import functools

import jax
import jax.numpy as jnp
from jax import lax
from jax.experimental import pallas as pl
from jax.experimental.pallas import tpu as pltpu

_HEAD = 8  # sublane-aligned scratch head; junk landing zone for the j==0 left blur tap


# ------------------------------- fused Pallas kernel -------------------------------

def _fused_kernel(x_hbm, w_ref, shift_ref, o_ref,
                  x_vmem, sem, conv_ref, hb_ref=None, *,
                  kh, kw, stride, w1, wo, tr, cr, wpitch, p2,
                  in_flat, img_flat, blk_flat, rblocks,
                  right_reflect, bottom_reflect):
    """One (batch, row-block, Cout-tile) step of conv -> blur(stride) -> BN shift -> ReLU.

    x_hbm    : [N*HpE*Wpitch, Cin]  (HBM, bf16)  flat zero-padded input, manual halo DMA
    w_ref    : [KH*KW, Cin, TC]     (VMEM, bf16) conv weights with the BN scale folded in
    shift_ref: [1, TC]              (VMEM, f32)  BN shift with the conv bias folded in
    o_ref    : [TR, Wo, TC]         (VMEM, f32)  this block's output rows, channels-last
    x_vmem   : [IN_FLAT, Cin]       (VMEM, bf16) halo'd input window of this row block
    conv_ref : [HEAD+P2, TC]        (VMEM, f32)  stride-1 conv result, flat with row pitch Wpitch
    hb_ref   : [CR, Wo, TC]         (VMEM, f32)  horizontally blurred rows (stride != 1 only)
    """
    b, rb, ct = pl.program_id(0), pl.program_id(1), pl.program_id(2)

    # ---- fetch this (batch, row-block)'s input window once per Cout sweep (ct is innermost
    #      and "arbitrary", so ct == 0 always runs first on whichever core owns this block).
    @pl.when(ct == 0)
    def _():
        start = pl.multiple_of(b * img_flat + rb * blk_flat, 8)
        cp = pltpu.make_async_copy(x_hbm.at[pl.ds(start, in_flat)], x_vmem, sem.at[0])
        cp.start()
        cp.wait()

    # ---- conv(stride=1): kh*kw accumulated MXU dots on row-shifted flat views (no im2col).
    for k in range(kh * kw):
        a, bb = divmod(k, kw)
        d = a * wpitch + bb
        part = jnp.dot(x_vmem[pl.ds(d, p2), :], w_ref[k],
                       preferred_element_type=jnp.float32)
        if k == 0:
            conv_ref[_HEAD:_HEAD + p2, :] = part
        else:
            conv_ref[_HEAD:_HEAD + p2, :] += part

    shift = shift_ref[...]                                          # [1, TC]

    if stride == 1:
        # No anti-alias pass: shift + ReLU straight off the conv rows (row starts 8-aligned).
        for t in range(tr):
            row = conv_ref[pl.ds(_HEAD + t * wpitch, w1), :]
            o_ref[t, :, :] = jnp.maximum(row + shift, 0.0)
        return

    # ---- horizontal [1,2,1]/4 blur with stride; reflect columns are poked into junk slots of
    #      the flat scratch so the main strided reads stay uniform (kept f32: v5e-safe).
    for i in range(cr):
        rbase = _HEAD + i * wpitch
        conv_ref[rbase - 1, :] = conv_ref[rbase + 1, :]             # col -1  -> col 1
        if right_reflect:
            conv_ref[rbase + w1, :] = conv_ref[rbase + w1 - 2, :]   # col w1  -> col w1-2
        hb_ref[i, :, :] = (0.25 * conv_ref[pl.ds(rbase - 1, wo, stride=stride), :]
                           + 0.50 * conv_ref[pl.ds(rbase, wo, stride=stride), :]
                           + 0.25 * conv_ref[pl.ds(rbase + 1, wo, stride=stride), :])

    # ---- vertical reflect rows (only the first / last row block ever see them).
    @pl.when(rb == 0)
    def _():
        hb_ref[0, :, :] = hb_ref[2, :, :]                           # conv row -1 -> row 1
    if bottom_reflect:
        @pl.when(rb == rblocks - 1)
        def _():
            hb_ref[cr - 1, :, :] = hb_ref[cr - 3, :, :]             # conv row h1 -> row h1-2

    # ---- vertical [1,2,1]/4 blur with stride + BN shift + ReLU, lane-dense store.
    out = (0.25 * hb_ref[pl.ds(0, tr, stride=stride), :, :]
           + 0.50 * hb_ref[pl.ds(1, tr, stride=stride), :, :]
           + 0.25 * hb_ref[pl.ds(2, tr, stride=stride), :, :])
    o_ref[...] = jnp.maximum(out + shift, 0.0)


# ------------------------------------ module glue -----------------------------------

def init_params(key, cin, cout, ksize):
    k1, k2, k3, k4, k5, k6 = jax.random.split(key, 6)
    return dict(
        w=0.1 * jax.random.normal(k1, (cout, cin, ksize, ksize), jnp.float32),
        b=0.1 * jax.random.normal(k2, (cout,), jnp.float32),
        gamma=1.0 + 0.1 * jax.random.normal(k3, (cout,), jnp.float32),
        beta=0.1 * jax.random.normal(k4, (cout,), jnp.float32),
        running_mean=0.1 * jax.random.normal(k5, (cout,), jnp.float32),
        running_var=jax.random.uniform(k6, (cout,), jnp.float32, 0.5, 1.5),
    )


def _device_defaults(cout):
    """Generation-aware Cout tile and VMEM limit (safe fallbacks if queries fail)."""
    kind = ""
    try:
        kind = jax.devices()[0].device_kind.lower()
    except Exception:
        pass
    c_tile = 256 if ("v6" in kind and cout % 256 == 0) else 128
    cap = None
    try:
        info_fn = getattr(pltpu, "get_tpu_info", None)
        if info_fn is not None:
            cap = getattr(info_fn(), "vmem_capacity_bytes", None)
    except Exception:
        cap = None
    vmem_limit = int(cap * 3 // 4) if cap else (48 << 20)   # ~96 MiB v5e/v6e, ~48 MiB v7x
    return c_tile, vmem_limit


def anti_alias_conv_bn_relu(x_nchw, p, *, stride=1, padding=0, eps=1e-5,
                            c_tile=None, row_tile=16, vmem_limit_bytes=None):
    w, bias = p["w"], p["b"]
    cout, cin, kh, kw = w.shape
    n, c, h, wd = x_nchw.shape
    assert c == cin

    hp, wp = h + 2 * padding, wd + 2 * padding
    h1, w1 = hp - kh + 1, wp - kw + 1                       # stride-1 conv output size
    if stride != 1:
        assert h1 >= 2 and w1 >= 2                          # blur reflect pad needs >= 2
        ho, wo = (h1 - 1) // stride + 1, (w1 - 1) // stride + 1
    else:
        ho, wo = h1, w1

    d_tile, d_vmem = _device_defaults(cout)
    if c_tile is None:
        c_tile = d_tile
    if vmem_limit_bytes is None:
        vmem_limit_bytes = d_vmem
    tc = min(c_tile, cout)
    if cout % tc:
        tc = cout        # NOTE: tc == cout < 128 leaves MXU lanes idle (fine for tiny test Cout)

    # ---- output-row tiling (halo re-compute); tr must divide Ho.
    tr = min(row_tile, ho)
    while ho % tr:
        tr -= 1
    rblocks = ho // tr
    if stride != 1:
        cr = (tr - 1) * stride + 3      # conv rows per block incl. the +-1 blur halo
        extra = 1                       # 1 extra zero row top+bottom keeps halo windows in range
    else:
        cr = tr
        extra = 0
    in_rows = cr + kh - 1

    # ---- pad + flatten the input; row pitch padded to a multiple of 8 (>= 1 slack column).
    wpitch = (max(wp + 1, w1 + 2) + 7) // 8 * 8
    hpe = hp + 2 * extra
    x = jnp.transpose(x_nchw, (0, 2, 3, 1))                 # NHWC
    xp = jnp.pad(x, ((0, 0),
                     (padding + extra, padding + extra),
                     (padding, wpitch - wd - padding),
                     (0, 0)))
    xflat = xp.reshape(n * hpe * wpitch, cin).astype(jnp.bfloat16)

    in_flat = in_rows * wpitch
    p2 = (cr - 1) * wpitch + w1 + 1
    blk_flat = tr * stride * wpitch
    img_flat = hpe * wpitch

    # ---- fold BN(eval) scale into the conv weights (f32, then ONE bf16 cast); fold the conv
    #      bias + running mean into the per-channel shift (the blur sums to 1, so both commute).
    scale = p["gamma"] / jnp.sqrt(p["running_var"] + eps)
    wf = (w * scale[:, None, None, None]).transpose(2, 3, 1, 0)      # [KH, KW, Cin, Cout]
    wf = wf.reshape(kh * kw, cin, cout).astype(jnp.bfloat16)
    shift = (p["beta"] + (bias - p["running_mean"]) * scale).reshape(1, cout).astype(jnp.float32)

    right_reflect = stride != 1 and (w1 - 1) % stride == 0
    bottom_reflect = stride != 1 and (h1 - 1) % stride == 0

    kernel = functools.partial(
        _fused_kernel, kh=kh, kw=kw, stride=stride, w1=w1, wo=wo, tr=tr, cr=cr,
        wpitch=wpitch, p2=p2, in_flat=in_flat, img_flat=img_flat, blk_flat=blk_flat,
        rblocks=rblocks, right_reflect=right_reflect, bottom_reflect=bottom_reflect)

    scratch = [pltpu.VMEM((in_flat, cin), jnp.bfloat16),     # halo'd input window (single-buffered)
               pltpu.SemaphoreType.DMA((1,)),
               pltpu.VMEM((_HEAD + p2, tc), jnp.float32)]    # flat conv accumulator
    if stride != 1:
        scratch.append(pltpu.VMEM((cr, wo, tc), jnp.float32))  # horizontally blurred rows

    out = pl.pallas_call(
        kernel,
        out_shape=jax.ShapeDtypeStruct((n, ho, wo, cout), jnp.float32),
        grid=(n, rblocks, cout // tc),
        in_specs=[
            pl.BlockSpec(memory_space=pl.ANY),                               # x: manual halo DMA
            pl.BlockSpec((kh * kw, cin, tc), lambda b, r, j: (0, 0, j)),     # folded weights
            pl.BlockSpec((1, tc), lambda b, r, j: (0, j)),                   # BN shift
        ],
        out_specs=pl.BlockSpec((None, tr, wo, tc), lambda b, r, j: (b, r, 0, j)),
        scratch_shapes=scratch,
        compiler_params=pltpu.CompilerParams(
            dimension_semantics=("parallel", "parallel", "arbitrary"),
            vmem_limit_bytes=vmem_limit_bytes),
    )(xflat, wf, shift)

    # NCHW for the PyTorch-facing API (costs one extra HBM pass over the small output only).
    return jnp.transpose(out, (0, 3, 1, 2))


# --------------------------------------- reference ----------------------------------

def reference(x_nchw, p, *, stride, padding, eps=1e-5):
    w, b = p["w"], p["b"]
    cout = w.shape[0]
    y = lax.conv_general_dilated(
        x_nchw, w, window_strides=(1, 1),
        padding=((padding, padding), (padding, padding)),
        dimension_numbers=("NCHW", "OIHW", "NCHW"),
        precision=lax.Precision.HIGHEST)
    y = y + b[None, :, None, None]
    if stride != 1:
        f1 = jnp.array([1.0, 2.0, 1.0], jnp.float32)
        filt2 = (f1[:, None] * f1[None, :]) / 16.0
        filt = jnp.tile(filt2[None, None], (cout, 1, 1, 1))
        yp = jnp.pad(y, ((0, 0), (0, 0), (1, 1), (1, 1)), mode="reflect")
        y = lax.conv_general_dilated(
            yp, filt, window_strides=(stride, stride), padding="VALID",
            dimension_numbers=("NCHW", "OIHW", "NCHW"),
            feature_group_count=cout, precision=lax.Precision.HIGHEST)
    scale = p["gamma"] / jnp.sqrt(p["running_var"] + eps)
    shift = p["beta"] - p["running_mean"] * scale
    return jnp.maximum(y * scale[None, :, None, None] + shift[None, :, None, None], 0.0)


# ------------------------------------------ main ------------------------------------

if __name__ == "__main__":
    key = jax.random.PRNGKey(0)
    kx, kx2, kp = jax.random.split(key, 3)

    N, CIN, COUT, H, W = 2, 4, 8, 16, 16
    KS, STRIDE, PAD = 3, 2, 1

    params = init_params(kp, CIN, COUT, KS)

    # The kernel feeds the MXU with bf16 activations and bf16 (BN-scale-folded) weights under
    # f32 accumulation.  Pre-condition x and w so the f32 reference sees the same effective
    # operands: x rounded to bf16, w chosen so that w * scale is exactly bf16-representable.
    scale = params["gamma"] / jnp.sqrt(params["running_var"] + 1e-5)
    wsc = (params["w"] * scale[:, None, None, None]).astype(jnp.bfloat16).astype(jnp.float32)
    params["w"] = wsc / scale[:, None, None, None]

    def check(x, stride, padding, row_tile):
        out = jax.block_until_ready(
            anti_alias_conv_bn_relu(x, params, stride=stride, padding=padding,
                                    row_tile=row_tile))
        ref = jax.block_until_ready(reference(x, params, stride=stride, padding=padding))
        assert out.shape == ref.shape, (out.shape, ref.shape)
        err = float(jnp.max(jnp.abs(out - ref)))
        assert jnp.allclose(out, ref, rtol=2e-3, atol=2e-3), err

    x = jax.random.normal(kx, (N, CIN, H, W), jnp.float32)
    x = x.astype(jnp.bfloat16).astype(jnp.float32)

    # stride != 1: conv -> anti-alias BlurPool -> BN -> ReLU ; 2 output-row blocks (halo path).
    check(x, STRIDE, PAD, row_tile=4)
    # stride == 1: conv -> BN -> ReLU (no blur) ; 4 output-row blocks.
    check(x, 1, PAD, row_tile=4)
    # odd spatial size: exercises the right/bottom reflect branches of the blur.
    x_odd = jax.random.normal(kx2, (N, CIN, H - 1, W - 1), jnp.float32)
    x_odd = x_odd.astype(jnp.bfloat16).astype(jnp.float32)
    check(x_odd, STRIDE, PAD, row_tile=4)

    print("KERNEL_OK")
</pallas_src>

<mosaic_0001>
module attributes {stable_mosaic.version = 11 : i64} {
  func.func @_fused_kernel(%arg0: i32, %arg1: i32, %arg2: i32, %arg3: memref<960x4xbf16, #tpu.memory_space<any>>, %arg4: memref<9x4x8xbf16, #tpu.memory_space<vmem>>, %arg5: memref<1x8xf32, #tpu.memory_space<vmem>>, %arg6: memref<1x4x8x8xf32, #tpu.memory_space<vmem>>, %arg7: memref<264x4xbf16, #tpu.memory_space<vmem>>, %arg8: memref<1x!tpu.dma_semaphore, #tpu.memory_space<semaphore_mem>>, %arg9: memref<217x8xf32, #tpu.memory_space<vmem>>, %arg10: memref<9x8x8xf32, #tpu.memory_space<vmem>>) attributes {dimension_semantics = [#tpu.dimension_semantics<parallel>, #tpu.dimension_semantics<parallel>, #tpu.dimension_semantics<arbitrary>], iteration_bounds = array<i64: 2, 2, 1>, scalar_prefetch = 0 : i64, scratch_operands = 4 : i64, tpu.core_type = #tpu.core_type<tc>, window_params = [{}, {transform_indices = @transform_1, window_bounds = array<i64: 9, 4, 8>}, {transform_indices = @transform_2, window_bounds = array<i64: 1, 8>}, {transform_indices = @transform_3, window_bounds = array<i64: 1, 4, 8, 8>}]} {
    %c0_i32 = arith.constant 0 : i32
    %0 = arith.cmpi eq, %arg2, %c0_i32 : i32
    %1 = arith.extui %0 : i1 to i32
    %c0_i32_0 = arith.constant 0 : i32
    %2 = arith.cmpi ne, %1, %c0_i32_0 : i32
    scf.if %2 {
      %c480_i32 = arith.constant 480 : i32
      %258 = arith.muli %arg0, %c480_i32 : i32
      %c192_i32 = arith.constant 192 : i32
      %259 = arith.muli %arg1, %c192_i32 : i32
      %260 = arith.addi %258, %259 : i32
      %261 = tpu.assume_multiple %260, 8 : i32
      %c0_i32_213 = arith.constant 0 : i32
      %c0_i32_214 = arith.constant 0 : i32
      %262 = tpu.memref_slice %arg3[%261, %c0_i32_214] : memref<960x4xbf16, #tpu.memory_space<any>> -> memref<264x4xbf16, #tpu.memory_space<any>>
      %263 = tpu.memref_slice %arg8[%c0_i32_213] : memref<1x!tpu.dma_semaphore, #tpu.memory_space<semaphore_mem>> -> memref<1x!tpu.dma_semaphore, #tpu.memory_space<semaphore_mem>>
      %264 = tpu.memref_squeeze %263 : memref<1x!tpu.dma_semaphore, #tpu.memory_space<semaphore_mem>> -> memref<!tpu.dma_semaphore, #tpu.memory_space<semaphore_mem>>
      tpu.enqueue_dma source(%262 : memref<264x4xbf16, #tpu.memory_space<any>>) target(%arg7 : memref<264x4xbf16, #tpu.memory_space<vmem>>) target_semaphore(%264 : memref<!tpu.dma_semaphore, #tpu.memory_space<semaphore_mem>>)
      %c0_i32_215 = arith.constant 0 : i32
      %c0_i32_216 = arith.constant 0 : i32
      %265 = tpu.memref_slice %arg3[%261, %c0_i32_216] : memref<960x4xbf16, #tpu.memory_space<any>> -> memref<264x4xbf16, #tpu.memory_space<any>>
      %266 = tpu.memref_slice %arg8[%c0_i32_215] : memref<1x!tpu.dma_semaphore, #tpu.memory_space<semaphore_mem>> -> memref<1x!tpu.dma_semaphore, #tpu.memory_space<semaphore_mem>>
      %267 = tpu.memref_squeeze %266 : memref<1x!tpu.dma_semaphore, #tpu.memory_space<semaphore_mem>> -> memref<!tpu.dma_semaphore, #tpu.memory_space<semaphore_mem>>
      tpu.wait_dma2 semaphore(%267 : memref<!tpu.dma_semaphore, #tpu.memory_space<semaphore_mem>>) src(%265 : memref<264x4xbf16, #tpu.memory_space<any>>) dst(%arg7 : memref<264x4xbf16, #tpu.memory_space<vmem>>)
    } else {
    }
    %c0 = arith.constant 0 : index
    %c0_1 = arith.constant 0 : index
    %3 = vector.load %arg7[%c0, %c0_1] : memref<264x4xbf16, #tpu.memory_space<vmem>>, vector<209x4xbf16>
    %c0_2 = arith.constant 0 : index
    %c0_3 = arith.constant 0 : index
    %c0_4 = arith.constant 0 : index
    %4 = vector.load %arg4[%c0_2, %c0_3, %c0_4] : memref<9x4x8xbf16, #tpu.memory_space<vmem>>, vector<1x4x8xbf16>
    %5 = vector.shape_cast %4 : vector<1x4x8xbf16> to vector<4x8xbf16>
    %cst = arith.constant dense<0.000000e+00> : vector<209x8xf32>
    %6 = tpu.matmul %3, %5, %cst {dimension_numbers = #tpu.dot_dimension_numbers<[1], [0], [0], [1], [0, 0, 1, 1], [], []>} : vector<209x4xbf16>, vector<4x8xbf16>, vector<209x8xf32> -> vector<209x8xf32>
    %c8 = arith.constant 8 : index
    %c0_5 = arith.constant 0 : index
    %7 = vector.load %arg9[%c8, %c0_5] : memref<217x8xf32, #tpu.memory_space<vmem>>, vector<209x8xf32>
    tpu.vector_store %arg9[%c8, %c0_5], %6 {strides = array<i32>} : memref<217x8xf32, #tpu.memory_space<vmem>>, vector<209x8xf32>,
    %c1 = arith.constant 1 : index
    %c0_6 = arith.constant 0 : index
    %8 = vector.load %arg7[%c1, %c0_6] : memref<264x4xbf16, #tpu.memory_space<vmem>>, vector<209x4xbf16>
    %c1_7 = arith.constant 1 : index
    %c0_8 = arith.constant 0 : index
    %c0_9 = arith.constant 0 : index
    %9 = vector.load %arg4[%c1_7, %c0_8, %c0_9] : memref<9x4x8xbf16, #tpu.memory_space<vmem>>, vector<1x4x8xbf16>
    %10 = vector.shape_cast %9 : vector<1x4x8xbf16> to vector<4x8xbf16>
    %cst_10 = arith.constant dense<0.000000e+00> : vector<209x8xf32>
    %11 = tpu.matmul %8, %10, %cst_10 {dimension_numbers = #tpu.dot_dimension_numbers<[1], [0], [0], [1], [0, 0, 1, 1], [], []>} : vector<209x4xbf16>, vector<4x8xbf16>, vector<209x8xf32> -> vector<209x8xf32>
    %c8_11 = arith.constant 8 : index
    %c0_12 = arith.constant 0 : index
    %12 = vector.load %arg9[%c8_11, %c0_12] : memref<217x8xf32, #tpu.memory_space<vmem>>, vector<209x8xf32>
    %13 = arith.addf %12, %11 : vector<209x8xf32>
    %c8_13 = arith.constant 8 : index
    %c0_14 = arith.constant 0 : index
    %14 = vector.load %arg9[%c8_13, %c0_14] : memref<217x8xf32, #tpu.memory_space<vmem>>, vector<209x8xf32>
    tpu.vector_store %arg9[%c8_13, %c0_14], %13 {strides = array<i32>} : memref<217x8xf32, #tpu.memory_space<vmem>>, vector<209x8xf32>,
    %c2 = arith.constant 2 : index
    %c0_15 = arith.constant 0 : index
    %15 = vector.load %arg7[%c2, %c0_15] : memref<264x4xbf16, #tpu.memory_space<vmem>>, vector<209x4xbf16>
    %c2_16 = arith.constant 2 : index
    %c0_17 = arith.constant 0 : index
    %c0_18 = arith.constant 0 : index
    %16 = vector.load %arg4[%c2_16, %c0_17, %c0_18] : memref<9x4x8xbf16, #tpu.memory_space<vmem>>, vector<1x4x8xbf16>
    %17 = vector.shape_cast %16 : vector<1x4x8xbf16> to vector<4x8xbf16>
    %cst_19 = arith.constant dense<0.000000e+00> : vector<209x8xf32>
    %18 = tpu.matmul %15, %17, %cst_19 {dimension_numbers = #tpu.dot_dimension_numbers<[1], [0], [0], [1], [0, 0, 1, 1], [], []>} : vector<209x4xbf16>, vector<4x8xbf16>, vector<209x8xf32> -> vector<209x8xf32>
    %c8_20 = arith.constant 8 : index
    %c0_21 = arith.constant 0 : index
    %19 = vector.load %arg9[%c8_20, %c0_21] : memref<217x8xf32, #tpu.memory_space<vmem>>, vector<209x8xf32>
    %20 = arith.addf %19, %18 : vector<209x8xf32>
    %c8_22 = arith.constant 8 : index
    %c0_23 = arith.constant 0 : index
    %21 = vector.load %arg9[%c8_22, %c0_23] : memref<217x8xf32, #tpu.memory_space<vmem>>, vector<209x8xf32>
    tpu.vector_store %arg9[%c8_22, %c0_23], %20 {strides = array<i32>} : memref<217x8xf32, #tpu.memory_space<vmem>>, vector<209x8xf32>,
    %c24 = arith.constant 24 : index
    %c0_24 = arith.constant 0 : index
    %22 = vector.load %arg7[%c24, %c0_24] : memref<264x4xbf16, #tpu.memory_space<vmem>>, vector<209x4xbf16>
    %c3 = arith.constant 3 : index
    %c0_25 = arith.constant 0 : index
    %c0_26 = arith.constant 0 : index
    %23 = vector.load %arg4[%c3, %c0_25, %c0_26] : memref<9x4x8xbf16, #tpu.memory_space<vmem>>, vector<1x4x8xbf16>
    %24 = vector.shape_cast %23 : vector<1x4x8xbf16> to vector<4x8xbf16>
    %cst_27 = arith.constant dense<0.000000e+00> : vector<209x8xf32>
    %25 = tpu.matmul %22, %24, %cst_27 {dimension_numbers = #tpu.dot_dimension_numbers<[1], [0], [0], [1], [0, 0, 1, 1], [], []>} : vector<209x4xbf16>, vector<4x8xbf16>, vector<209x8xf32> -> vector<209x8xf32>
    %c8_28 = arith.constant 8 : index
    %c0_29 = arith.constant 0 : index
    %26 = vector.load %arg9[%c8_28, %c0_29] : memref<217x8xf32, #tpu.memory_space<vmem>>, vector<209x8xf32>
    %27 = arith.addf %26, %25 : vector<209x8xf32>
    %c8_30 = arith.constant 8 : index
    %c0_31 = arith.constant 0 : index
    %28 = vector.load %arg9[%c8_30, %c0_31] : memref<217x8xf32, #tpu.memory_space<vmem>>, vector<209x8xf32>
    tpu.vector_store %arg9[%c8_30, %c0_31], %27 {strides = array<i32>} : memref<217x8xf32, #tpu.memory_space<vmem>>, vector<209x8xf32>,
    %c25 = arith.constant 25 : index
    %c0_32 = arith.constant 0 : index
    %29 = vector.load %arg7[%c25, %c0_32] : memref<264x4xbf16, #tpu.memory_space<vmem>>, vector<209x4xbf16>
    %c4 = arith.constant 4 : index
    %c0_33 = arith.constant 0 : index
    %c0_34 = arith.constant 0 : index
    %30 = vector.load %arg4[%c4, %c0_33, %c0_34] : memref<9x4x8xbf16, #tpu.memory_space<vmem>>, vector<1x4x8xbf16>
    %31 = vector.shape_cast %30 : vector<1x4x8xbf16> to vector<4x8xbf16>
    %cst_35 = arith.constant dense<0.000000e+00> : vector<209x8xf32>
    %32 = tpu.matmul %29, %31, %cst_35 {dimension_numbers = #tpu.dot_dimension_numbers<[1], [0], [0], [1], [0, 0, 1, 1], [], []>} : vector<209x4xbf16>, vector<4x8xbf16>, vector<209x8xf32> -> vector<209x8xf32>
    %c8_36 = arith.constant 8 : index
    %c0_37 = arith.constant 0 : index
    %33 = vector.load %arg9[%c8_36, %c0_37] : memref<217x8xf32, #tpu.memory_space<vmem>>, vector<209x8xf32>
    %34 = arith.addf %33, %32 : vector<209x8xf32>
    %c8_38 = arith.constant 8 : index
    %c0_39 = arith.constant 0 : index
    %35 = vector.load %arg9[%c8_38, %c0_39] : memref<217x8xf32, #tpu.memory_space<vmem>>, vector<209x8xf32>
    tpu.vector_store %arg9[%c8_38, %c0_39], %34 {strides = array<i32>} : memref<217x8xf32, #tpu.memory_space<vmem>>, vector<209x8xf32>,
    %c26 = arith.constant 26 : index
    %c0_40 = arith.constant 0 : index
    %36 = vector.load %arg7[%c26, %c0_40] : memref<264x4xbf16, #tpu.memory_space<vmem>>, vector<209x4xbf16>
    %c5 = arith.constant 5 : index
    %c0_41 = arith.constant 0 : index
    %c0_42 = arith.constant 0 : index
    %37 = vector.load %arg4[%c5, %c0_41, %c0_42] : memref<9x4x8xbf16, #tpu.memory_space<vmem>>, vector<1x4x8xbf16>
    %38 = vector.shape_cast %37 : vector<1x4x8xbf16> to vector<4x8xbf16>
    %cst_43 = arith.constant dense<0.000000e+00> : vector<209x8xf32>
    %39 = tpu.matmul %36, %38, %cst_43 {dimension_numbers = #tpu.dot_dimension_numbers<[1], [0], [0], [1], [0, 0, 1, 1], [], []>} : vector<209x4xbf16>, vector<4x8xbf16>, vector<209x8xf32> -> vector<209x8xf32>
    %c8_44 = arith.constant 8 : index
    %c0_45 = arith.constant 0 : index
    %40 = vector.load %arg9[%c8_44, %c0_45] : memref<217x8xf32, #tpu.memory_space<vmem>>, vector<209x8xf32>
    %41 = arith.addf %40, %39 : vector<209x8xf32>
    %c8_46 = arith.constant 8 : index
    %c0_47 = arith.constant 0 : index
    %42 = vector.load %arg9[%c8_46, %c0_47] : memref<217x8xf32, #tpu.memory_space<vmem>>, vector<209x8xf32>
    tpu.vector_store %arg9[%c8_46, %c0_47], %41 {strides = array<i32>} : memref<217x8xf32, #tpu.memory_space<vmem>>, vector<209x8xf32>,
    %c48 = arith.constant 48 : index
    %c0_48 = arith.constant 0 : index
    %43 = vector.load %arg7[%c48, %c0_48] : memref<264x4xbf16, #tpu.memory_space<vmem>>, vector<209x4xbf16>
    %c6 = arith.constant 6 : index
    %c0_49 = arith.constant 0 : index
    %c0_50 = arith.constant 0 : index
    %44 = vector.load %arg4[%c6, %c0_49, %c0_50] : memref<9x4x8xbf16, #tpu.memory_space<vmem>>, vector<1x4x8xbf16>
    %45 = vector.shape_cast %44 : vector<1x4x8xbf16> to vector<4x8xbf16>
    %cst_51 = arith.constant dense<0.000000e+00> : vector<209x8xf32>
    %46 = tpu.matmul %43, %45, %cst_51 {dimension_numbers = #tpu.dot_dimension_numbers<[1], [0], [0], [1], [0, 0, 1, 1], [], []>} : vector<209x4xbf16>, vector<4x8xbf16>, vector<209x8xf32> -> vector<209x8xf32>
    %c8_52 = arith.constant 8 : index
    %c0_53 = arith.constant 0 : index
    %47 = vector.load %arg9[%c8_52, %c0_53] : memref<217x8xf32, #tpu.memory_space<vmem>>, vector<209x8xf32>
    %48 = arith.addf %47, %46 : vector<209x8xf32>
    %c8_54 = arith.constant 8 : index
    %c0_55 = arith.constant 0 : index
    %49 = vector.load %arg9[%c8_54, %c0_55] : memref<217x8xf32, #tpu.memory_space<vmem>>, vector<209x8xf32>
    tpu.vector_store %arg9[%c8_54, %c0_55], %48 {strides = array<i32>} : memref<217x8xf32, #tpu.memory_space<vmem>>, vector<209x8xf32>,
    %c49 = arith.constant 49 : index
    %c0_56 = arith.constant 0 : index
    %50 = vector.load %arg7[%c49, %c0_56] : memref<264x4xbf16, #tpu.memory_space<vmem>>, vector<209x4xbf16>
    %c7 = arith.constant 7 : index
    %c0_57 = arith.constant 0 : index
    %c0_58 = arith.constant 0 : index
    %51 = vector.load %arg4[%c7, %c0_57, %c0_58] : memref<9x4x8xbf16, #tpu.memory_space<vmem>>, vector<1x4x8xbf16>
    %52 = vector.shape_cast %51 : vector<1x4x8xbf16> to vector<4x8xbf16>
    %cst_59 = arith.constant dense<0.000000e+00> : vector<209x8xf32>
    %53 = tpu.matmul %50, %52, %cst_59 {dimension_numbers = #tpu.dot_dimension_numbers<[1], [0], [0], [1], [0, 0, 1, 1], [], []>} : vector<209x4xbf16>, vector<4x8xbf16>, vector<209x8xf32> -> vector<209x8xf32>
    %c8_60 = arith.constant 8 : index
    %c0_61 = arith.constant 0 : index
    %54 = vector.load %arg9[%c8_60, %c0_61] : memref<217x8xf32, #tpu.memory_space<vmem>>, vector<209x8xf32>
    %55 = arith.addf %54, %53 : vector<209x8xf32>
    %c8_62 = arith.constant 8 : index
    %c0_63 = arith.constant 0 : index
    %56 = vector.load %arg9[%c8_62, %c0_63] : memref<217x8xf32, #tpu.memory_space<vmem>>, vector<209x8xf32>
    tpu.vector_store %arg9[%c8_62, %c0_63], %55 {strides = array<i32>} : memref<217x8xf32, #tpu.memory_space<vmem>>, vector<209x8xf32>,
    %c50 = arith.constant 50 : index
    %c0_64 = arith.constant 0 : index
    %57 = vector.load %arg7[%c50, %c0_64] : memref<264x4xbf16, #tpu.memory_space<vmem>>, vector<209x4xbf16>
    %c8_65 = arith.constant 8 : index
    %c0_66 = arith.constant 0 : index
    %c0_67 = arith.constant 0 : index
    %58 = vector.load %arg4[%c8_65, %c0_66, %c0_67] : memref<9x4x8xbf16, #tpu.memory_space<vmem>>, vector<1x4x8xbf16>
    %59 = vector.shape_cast %58 : vector<1x4x8xbf16> to vector<4x8xbf16>
    %cst_68 = arith.constant dense<0.000000e+00> : vector<209x8xf32>
    %60 = tpu.matmul %57, %59, %cst_68 {dimension_numbers = #tpu.dot_dimension_numbers<[1], [0], [0], [1], [0, 0, 1, 1], [], []>} : vector<209x4xbf16>, vector<4x8xbf16>, vector<209x8xf32> -> vector<209x8xf32>
    %c8_69 = arith.constant 8 : index
    %c0_70 = arith.constant 0 : index
    %61 = vector.load %arg9[%c8_69, %c0_70] : memref<217x8xf32, #tpu.memory_space<vmem>>, vector<209x8xf32>
    %62 = arith.addf %61, %60 : vector<209x8xf32>
    %c8_71 = arith.constant 8 : index
    %c0_72 = arith.constant 0 : index
    %63 = vector.load %arg9[%c8_71, %c0_72] : memref<217x8xf32, #tpu.memory_space<vmem>>, vector<209x8xf32>
    tpu.vector_store %arg9[%c8_71, %c0_72], %62 {strides = array<i32>} : memref<217x8xf32, #tpu.memory_space<vmem>>, vector<209x8xf32>,
    %c0_73 = arith.constant 0 : index
    %c0_74 = arith.constant 0 : index
    %64 = vector.load %arg5[%c0_73, %c0_74] : memref<1x8xf32, #tpu.memory_space<vmem>>, vector<1x8xf32>
    %c9 = arith.constant 9 : index
    %c0_75 = arith.constant 0 : index
    %65 = vector.load %arg9[%c9, %c0_75] : memref<217x8xf32, #tpu.memory_space<vmem>>, vector<1x8xf32>
    %66 = vector.shape_cast %65 : vector<1x8xf32> to vector<8xf32>
    %c7_76 = arith.constant 7 : index
    %c0_77 = arith.constant 0 : index
    %67 = vector.load %arg9[%c7_76, %c0_77] : memref<217x8xf32, #tpu.memory_space<vmem>>, vector<1x8xf32>
    %68 = vector.shape_cast %67 : vector<1x8xf32> to vector<8xf32>
    %69 = vector.shape_cast %66 : vector<8xf32> to vector<1x8xf32>
    tpu.vector_store %arg9[%c7_76, %c0_77], %69 {strides = array<i32>} : memref<217x8xf32, #tpu.memory_space<vmem>>, vector<1x8xf32>,
    %c7_78 = arith.constant 7 : index
    %c0_79 = arith.constant 0 : index
    %70 = tpu.strided_load %arg9[%c7_78, %c0_79] {strides = array<i32: 2, 1>} : memref<217x8xf32, #tpu.memory_space<vmem>>, vector<8x8xf32>
    %cst_80 = arith.constant 2.500000e-01 : f32
    %71 = vector.broadcast %cst_80 : f32 to vector<8x8xf32>
    %72 = arith.mulf %71, %70 : vector<8x8xf32>
    %c8_81 = arith.constant 8 : index
    %c0_82 = arith.constant 0 : index
    %73 = tpu.strided_load %arg9[%c8_81, %c0_82] {strides = array<i32: 2, 1>} : memref<217x8xf32, #tpu.memory_space<vmem>>, vector<8x8xf32>
    %cst_83 = arith.constant 5.000000e-01 : f32
    %74 = vector.broadcast %cst_83 : f32 to vector<8x8xf32>
    %75 = arith.mulf %74, %73 : vector<8x8xf32>
    %76 = arith.addf %72, %75 : vector<8x8xf32>
    %c9_84 = arith.constant 9 : index
    %c0_85 = arith.constant 0 : index
    %77 = tpu.strided_load %arg9[%c9_84, %c0_85] {strides = array<i32: 2, 1>} : memref<217x8xf32, #tpu.memory_space<vmem>>, vector<8x8xf32>
    %cst_86 = arith.constant 2.500000e-01 : f32
    %78 = vector.broadcast %cst_86 : f32 to vector<8x8xf32>
    %79 = arith.mulf %78, %77 : vector<8x8xf32>
    %80 = arith.addf %76, %79 : vector<8x8xf32>
    %c0_87 = arith.constant 0 : index
    %c0_88 = arith.constant 0 : index
    %c0_89 = arith.constant 0 : index
    %81 = vector.load %arg10[%c0_87, %c0_88, %c0_89] : memref<9x8x8xf32, #tpu.memory_space<vmem>>, vector<1x8x8xf32>
    %82 = vector.shape_cast %81 : vector<1x8x8xf32> to vector<8x8xf32>
    %83 = vector.shape_cast %80 : vector<8x8xf32> to vector<1x8x8xf32>
    tpu.vector_store %arg10[%c0_87, %c0_88, %c0_89], %83 {strides = array<i32>} : memref<9x8x8xf32, #tpu.memory_space<vmem>>, vector<1x8x8xf32>,
    %c33 = arith.constant 33 : index
    %c0_90 = arith.constant 0 : index
    %84 = vector.load %arg9[%c33, %c0_90] : memref<217x8xf32, #tpu.memory_space<vmem>>, vector<1x8xf32>
    %85 = vector.shape_cast %84 : vector<1x8xf32> to vector<8xf32>
    %c31 = arith.constant 31 : index
    %c0_91 = arith.constant 0 : index
    %86 = vector.load %arg9[%c31, %c0_91] : memref<217x8xf32, #tpu.memory_space<vmem>>, vector<1x8xf32>
    %87 = vector.shape_cast %86 : vector<1x8xf32> to vector<8xf32>
    %88 = vector.shape_cast %85 : vector<8xf32> to vector<1x8xf32>
    tpu.vector_store %arg9[%c31, %c0_91], %88 {strides = array<i32>} : memref<217x8xf32, #tpu.memory_space<vmem>>, vector<1x8xf32>,
    %c31_92 = arith.constant 31 : index
    %c0_93 = arith.constant 0 : index
    %89 = tpu.strided_load %arg9[%c31_92, %c0_93] {strides = array<i32: 2, 1>} : memref<217x8xf32, #tpu.memory_space<vmem>>, vector<8x8xf32>
    %cst_94 = arith.constant 2.500000e-01 : f32
    %90 = vector.broadcast %cst_94 : f32 to vector<8x8xf32>
    %91 = arith.mulf %90, %89 : vector<8x8xf32>
    %c32 = arith.constant 32 : index
    %c0_95 = arith.constant 0 : index
    %92 = tpu.strided_load %arg9[%c32, %c0_95] {strides = array<i32: 2, 1>} : memref<217x8xf32, #tpu.memory_space<vmem>>, vector<8x8xf32>
    %cst_96 = arith.constant 5.000000e-01 : f32
    %93 = vector.broadcast %cst_96 : f32 to vector<8x8xf32>
    %94 = arith.mulf %93, %92 : vector<8x8xf32>
    %95 = arith.addf %91, %94 : vector<8x8xf32>
    %c33_97 = arith.constant 33 : index
    %c0_98 = arith.constant 0 : index
    %96 = tpu.strided_load %arg9[%c33_97, %c0_98] {strides = array<i32: 2, 1>} : memref<217x8xf32, #tpu.memory_space<vmem>>, vector<8x8xf32>
    %cst_99 = arith.constant 2.500000e-01 : f32
    %97 = vector.broadcast %cst_99 : f32 to vector<8x8xf32>
    %98 = arith.mulf %97, %96 : vector<8x8xf32>
    %99 = arith.addf %95, %98 : vector<8x8xf32>
    %c1_100 = arith.constant 1 : index
    %c0_101 = arith.constant 0 : index
    %c0_102 = arith.constant 0 : index
    %100 = vector.load %arg10[%c1_100, %c0_101, %c0_102] : memref<9x8x8xf32, #tpu.memory_space<vmem>>, vector<1x8x8xf32>
    %101 = vector.shape_cast %100 : vector<1x8x8xf32> to vector<8x8xf32>
    %102 = vector.shape_cast %99 : vector<8x8xf32> to vector<1x8x8xf32>
    tpu.vector_store %arg10[%c1_100, %c0_101, %c0_102], %102 {strides = array<i32>} : memref<9x8x8xf32, #tpu.memory_space<vmem>>, vector<1x8x8xf32>,
    %c57 = arith.constant 57 : index
    %c0_103 = arith.constant 0 : index
    %103 = vector.load %arg9[%c57, %c0_103] : memref<217x8xf32, #tpu.memory_space<vmem>>, vector<1x8xf32>
    %104 = vector.shape_cast %103 : vector<1x8xf32> to vector<8xf32>
    %c55 = arith.constant 55 : index
    %c0_104 = arith.constant 0 : index
    %105 = vector.load %arg9[%c55, %c0_104] : memref<217x8xf32, #tpu.memory_space<vmem>>, vector<1x8xf32>
    %106 = vector.shape_cast %105 : vector<1x8xf32> to vector<8xf32>
    %107 = vector.shape_cast %104 : vector<8xf32> to vector<1x8xf32>
    tpu.vector_store %arg9[%c55, %c0_104], %107 {strides = array<i32>} : memref<217x8xf32, #tpu.memory_space<vmem>>, vector<1x8xf32>,
    %c55_105 = arith.constant 55 : index
    %c0_106 = arith.constant 0 : index
    %108 = tpu.strided_load %arg9[%c55_105, %c0_106] {strides = array<i32: 2, 1>} : memref<217x8xf32, #tpu.memory_space<vmem>>, vector<8x8xf32>
    %cst_107 = arith.constant 2.500000e-01 : f32
    %109 = vector.broadcast %cst_107 : f32 to vector<8x8xf32>
    %110 = arith.mulf %109, %108 : vector<8x8xf32>
    %c56 = arith.constant 56 : index
    %c0_108 = arith.constant 0 : index
    %111 = tpu.strided_load %arg9[%c56, %c0_108] {strides = array<i32: 2, 1>} : memref<217x8xf32, #tpu.memory_space<vmem>>, vector<8x8xf32>
    %cst_109 = arith.constant 5.000000e-01 : f32
    %112 = vector.broadcast %cst_109 : f32 to vector<8x8xf32>
    %113 = arith.mulf %112, %111 : vector<8x8xf32>
    %114 = arith.addf %110, %113 : vector<8x8xf32>
    %c57_110 = arith.constant 57 : index
    %c0_111 = arith.constant 0 : index
    %115 = tpu.strided_load %arg9[%c57_110, %c0_111] {strides = array<i32: 2, 1>} : memref<217x8xf32, #tpu.memory_space<vmem>>, vector<8x8xf32>
    %cst_112 = arith.constant 2.500000e-01 : f32
    %116 = vector.broadcast %cst_112 : f32 to vector<8x8xf32>
    %117 = arith.mulf %116, %115 : vector<8x8xf32>
    %118 = arith.addf %114, %117 : vector<8x8xf32>
    %c2_113 = arith.constant 2 : index
    %c0_114 = arith.constant 0 : index
    %c0_115 = arith.constant 0 : index
    %119 = vector.load %arg10[%c2_113, %c0_114, %c0_115] : memref<9x8x8xf32, #tpu.memory_space<vmem>>, vector<1x8x8xf32>
    %120 = vector.shape_cast %119 : vector<1x8x8xf32> to vector<8x8xf32>
    %121 = vector.shape_cast %118 : vector<8x8xf32> to vector<1x8x8xf32>
    tpu.vector_store %arg10[%c2_113, %c0_114, %c0_115], %121 {strides = array<i32>} : memref<9x8x8xf32, #tpu.memory_space<vmem>>, vector<1x8x8xf32>,
    %c81 = arith.constant 81 : index
    %c0_116 = arith.constant 0 : index
    %122 = vector.load %arg9[%c81, %c0_116] : memref<217x8xf32, #tpu.memory_space<vmem>>, vector<1x8xf32>
    %123 = vector.shape_cast %122 : vector<1x8xf32> to vector<8xf32>
    %c79 = arith.constant 79 : index
    %c0_117 = arith.constant 0 : index
    %124 = vector.load %arg9[%c79, %c0_117] : memref<217x8xf32, #tpu.memory_space<vmem>>, vector<1x8xf32>
    %125 = vector.shape_cast %124 : vector<1x8xf32> to vector<8xf32>
    %126 = vector.shape_cast %123 : vector<8xf32> to vector<1x8xf32>
    tpu.vector_store %arg9[%c79, %c0_117], %126 {strides = array<i32>} : memref<217x8xf32, #tpu.memory_space<vmem>>, vector<1x8xf32>,
    %c79_118 = arith.constant 79 : index
    %c0_119 = arith.constant 0 : index
    %127 = tpu.strided_load %arg9[%c79_118, %c0_119] {strides = array<i32: 2, 1>} : memref<217x8xf32, #tpu.memory_space<vmem>>, vector<8x8xf32>
    %cst_120 = arith.constant 2.500000e-01 : f32
    %128 = vector.broadcast %cst_120 : f32 to vector<8x8xf32>
    %129 = arith.mulf %128, %127 : vector<8x8xf32>
    %c80 = arith.constant 80 : index
    %c0_121 = arith.constant 0 : index
    %130 = tpu.strided_load %arg9[%c80, %c0_121] {strides = array<i32: 2, 1>} : memref<217x8xf32, #tpu.memory_space<vmem>>, vector<8x8xf32>
    %cst_122 = arith.constant 5.000000e-01 : f32
    %131 = vector.broadcast %cst_122 : f32 to vector<8x8xf32>
    %132 = arith.mulf %131, %130 : vector<8x8xf32>
    %133 = arith.addf %129, %132 : vector<8x8xf32>
    %c81_123 = arith.constant 81 : index
    %c0_124 = arith.constant 0 : index
    %134 = tpu.strided_load %arg9[%c81_123, %c0_124] {strides = array<i32: 2, 1>} : memref<217x8xf32, #tpu.memory_space<vmem>>, vector<8x8xf32>
    %cst_125 = arith.constant 2.500000e-01 : f32
    %135 = vector.broadcast %cst_125 : f32 to vector<8x8xf32>
    %136 = arith.mulf %135, %134 : vector<8x8xf32>
    %137 = arith.addf %133, %136 : vector<8x8xf32>
    %c3_126 = arith.constant 3 : index
    %c0_127 = arith.constant 0 : index
    %c0_128 = arith.constant 0 : index
    %138 = vector.load %arg10[%c3_126, %c0_127, %c0_128] : memref<9x8x8xf32, #tpu.memory_space<vmem>>, vector<1x8x8xf32>
    %139 = vector.shape_cast %138 : vector<1x8x8xf32> to vector<8x8xf32>
    %140 = vector.shape_cast %137 : vector<8x8xf32> to vector<1x8x8xf32>
    tpu.vector_store %arg10[%c3_126, %c0_127, %c0_128], %140 {strides = array<i32>} : memref<9x8x8xf32, #tpu.memory_space<vmem>>, vector<1x8x8xf32>,
    %c105 = arith.constant 105 : index
    %c0_129 = arith.constant 0 : index
    %141 = vector.load %arg9[%c105, %c0_129] : memref<217x8xf32, #tpu.memory_space<vmem>>, vector<1x8xf32>
    %142 = vector.shape_cast %141 : vector<1x8xf32> to vector<8xf32>
    %c103 = arith.constant 103 : index
    %c0_130 = arith.constant 0 : index
    %143 = vector.load %arg9[%c103, %c0_130] : memref<217x8xf32, #tpu.memory_space<vmem>>, vector<1x8xf32>
    %144 = vector.shape_cast %143 : vector<1x8xf32> to vector<8xf32>
    %145 = vector.shape_cast %142 : vector<8xf32> to vector<1x8xf32>
    tpu.vector_store %arg9[%c103, %c0_130], %145 {strides = array<i32>} : memref<217x8xf32, #tpu.memory_space<vmem>>, vector<1x8xf32>,
    %c103_131 = arith.constant 103 : index
    %c0_132 = arith.constant 0 : index
    %146 = tpu.strided_load %arg9[%c103_131, %c0_132] {strides = array<i32: 2, 1>} : memref<217x8xf32, #tpu.memory_space<vmem>>, vector<8x8xf32>
    %cst_133 = arith.constant 2.500000e-01 : f32
    %147 = vector.broadcast %cst_133 : f32 to vector<8x8xf32>
    %148 = arith.mulf %147, %146 : vector<8x8xf32>
    %c104 = arith.constant 104 : index
    %c0_134 = arith.constant 0 : index
    %149 = tpu.strided_load %arg9[%c104, %c0_134] {strides = array<i32: 2, 1>} : memref<217x8xf32, #tpu.memory_space<vmem>>, vector<8x8xf32>
    %cst_135 = arith.constant 5.000000e-01 : f32
    %150 = vector.broadcast %cst_135 : f32 to vector<8x8xf32>
    %151 = arith.mulf %150, %149 : vector<8x8xf32>
    %152 = arith.addf %148, %151 : vector<8x8xf32>
    %c105_136 = arith.constant 105 : index
    %c0_137 = arith.constant 0 : index
    %153 = tpu.strided_load %arg9[%c105_136, %c0_137] {strides = array<i32: 2, 1>} : memref<217x8xf32, #tpu.memory_space<vmem>>, vector<8x8xf32>
    %cst_138 = arith.constant 2.500000e-01 : f32
    %154 = vector.broadcast %cst_138 : f32 to vector<8x8xf32>
    %155 = arith.mulf %154, %153 : vector<8x8xf32>
    %156 = arith.addf %152, %155 : vector<8x8xf32>
    %c4_139 = arith.constant 4 : index
    %c0_140 = arith.constant 0 : index
    %c0_141 = arith.constant 0 : index
    %157 = vector.load %arg10[%c4_139, %c0_140, %c0_141] : memref<9x8x8xf32, #tpu.memory_space<vmem>>, vector<1x8x8xf32>
    %158 = vector.shape_cast %157 : vector<1x8x8xf32> to vector<8x8xf32>
    %159 = vector.shape_cast %156 : vector<8x8xf32> to vector<1x8x8xf32>
    tpu.vector_store %arg10[%c4_139, %c0_140, %c0_141], %159 {strides = array<i32>} : memref<9x8x8xf32, #tpu.memory_space<vmem>>, vector<1x8x8xf32>,
    %c129 = arith.constant 129 : index
    %c0_142 = arith.constant 0 : index
    %160 = vector.load %arg9[%c129, %c0_142] : memref<217x8xf32, #tpu.memory_space<vmem>>, vector<1x8xf32>
    %161 = vector.shape_cast %160 : vector<1x8xf32> to vector<8xf32>
    %c127 = arith.constant 127 : index
    %c0_143 = arith.constant 0 : index
    %162 = vector.load %arg9[%c127, %c0_143] : memref<217x8xf32, #tpu.memory_space<vmem>>, vector<1x8xf32>
    %163 = vector.shape_cast %162 : vector<1x8xf32> to vector<8xf32>
    %164 = vector.shape_cast %161 : vector<8xf32> to vector<1x8xf32>
    tpu.vector_store %arg9[%c127, %c0_143], %164 {strides = array<i32>} : memref<217x8xf32, #tpu.memory_space<vmem>>, vector<1x8xf32>,
    %c127_144 = arith.constant 127 : index
    %c0_145 = arith.constant 0 : index
    %165 = tpu.strided_load %arg9[%c127_144, %c0_145] {strides = array<i32: 2, 1>} : memref<217x8xf32, #tpu.memory_space<vmem>>, vector<8x8xf32>
    %cst_146 = arith.constant 2.500000e-01 : f32
    %166 = vector.broadcast %cst_146 : f32 to vector<8x8xf32>
    %167 = arith.mulf %166, %165 : vector<8x8xf32>
    %c128 = arith.constant 128 : index
    %c0_147 = arith.constant 0 : index
    %168 = tpu.strided_load %arg9[%c128, %c0_147] {strides = array<i32: 2, 1>} : memref<217x8xf32, #tpu.memory_space<vmem>>, vector<8x8xf32>
    %cst_148 = arith.constant 5.000000e-01 : f32
    %169 = vector.broadcast %cst_148 : f32 to vector<8x8xf32>
    %170 = arith.mulf %169, %168 : vector<8x8xf32>
    %171 = arith.addf %167, %170 : vector<8x8xf32>
    %c129_149 = arith.constant 129 : index
    %c0_150 = arith.constant 0 : index
    %172 = tpu.strided_load %arg9[%c129_149, %c0_150] {strides = array<i32: 2, 1>} : memref<217x8xf32, #tpu.memory_space<vmem>>, vector<8x8xf32>
    %cst_151 = arith.constant 2.500000e-01 : f32
    %173 = vector.broadcast %cst_151 : f32 to vector<8x8xf32>
    %174 = arith.mulf %173, %172 : vector<8x8xf32>
    %175 = arith.addf %171, %174 : vector<8x8xf32>
    %c5_152 = arith.constant 5 : index
    %c0_153 = arith.constant 0 : index
    %c0_154 = arith.constant 0 : index
    %176 = vector.load %arg10[%c5_152, %c0_153, %c0_154] : memref<9x8x8xf32, #tpu.memory_space<vmem>>, vector<1x8x8xf32>
    %177 = vector.shape_cast %176 : vector<1x8x8xf32> to vector<8x8xf32>
    %178 = vector.shape_cast %175 : vector<8x8xf32> to vector<1x8x8xf32>
    tpu.vector_store %arg10[%c5_152, %c0_153, %c0_154], %178 {strides = array<i32>} : memref<9x8x8xf32, #tpu.memory_space<vmem>>, vector<1x8x8xf32>,
    %c153 = arith.constant 153 : index
    %c0_155 = arith.constant 0 : index
    %179 = vector.load %arg9[%c153, %c0_155] : memref<217x8xf32, #tpu.memory_space<vmem>>, vector<1x8xf32>
    %180 = vector.shape_cast %179 : vector<1x8xf32> to vector<8xf32>
    %c151 = arith.constant 151 : index
    %c0_156 = arith.constant 0 : index
    %181 = vector.load %arg9[%c151, %c0_156] : memref<217x8xf32, #tpu.memory_space<vmem>>, vector<1x8xf32>
    %182 = vector.shape_cast %181 : vector<1x8xf32> to vector<8xf32>
    %183 = vector.shape_cast %180 : vector<8xf32> to vector<1x8xf32>
    tpu.vector_store %arg9[%c151, %c0_156], %183 {strides = array<i32>} : memref<217x8xf32, #tpu.memory_space<vmem>>, vector<1x8xf32>,
    %c151_157 = arith.constant 151 : index
    %c0_158 = arith.constant 0 : index
    %184 = tpu.strided_load %arg9[%c151_157, %c0_158] {strides = array<i32: 2, 1>} : memref<217x8xf32, #tpu.memory_space<vmem>>, vector<8x8xf32>
    %cst_159 = arith.constant 2.500000e-01 : f32
    %185 = vector.broadcast %cst_159 : f32 to vector<8x8xf32>
    %186 = arith.mulf %185, %184 : vector<8x8xf32>
    %c152 = arith.constant 152 : index
    %c0_160 = arith.constant 0 : index
    %187 = tpu.strided_load %arg9[%c152, %c0_160] {strides = array<i32: 2, 1>} : memref<217x8xf32, #tpu.memory_space<vmem>>, vector<8x8xf32>
    %cst_161 = arith.constant 5.000000e-01 : f32
    %188 = vector.broadcast %cst_161 : f32 to vector<8x8xf32>
    %189 = arith.mulf %188, %187 : vector<8x8xf32>
    %190 = arith.addf %186, %189 : vector<8x8xf32>
    %c153_162 = arith.constant 153 : index
    %c0_163 = arith.constant 0 : index
    %191 = tpu.strided_load %arg9[%c153_162, %c0_163] {strides = array<i32: 2, 1>} : memref<217x8xf32, #tpu.memory_space<vmem>>, vector<8x8xf32>
    %cst_164 = arith.constant 2.500000e-01 : f32
    %192 = vector.broadcast %cst_164 : f32 to vector<8x8xf32>
    %193 = arith.mulf %192, %191 : vector<8x8xf32>
    %194 = arith.addf %190, %193 : vector<8x8xf32>
    %c6_165 = arith.constant 6 : index
    %c0_166 = arith.constant 0 : index
    %c0_167 = arith.constant 0 : index
    %195 = vector.load %arg10[%c6_165, %c0_166, %c0_167] : memref<9x8x8xf32, #tpu.memory_space<vmem>>, vector<1x8x8xf32>
    %196 = vector.shape_cast %195 : vector<1x8x8xf32> to vector<8x8xf32>
    %197 = vector.shape_cast %194 : vector<8x8xf32> to vector<1x8x8xf32>
    tpu.vector_store %arg10[%c6_165, %c0_166, %c0_167], %197 {strides = array<i32>} : memref<9x8x8xf32, #tpu.memory_space<vmem>>, vector<1x8x8xf32>,
    %c177 = arith.constant 177 : index
    %c0_168 = arith.constant 0 : index
    %198 = vector.load %arg9[%c177, %c0_168] : memref<217x8xf32, #tpu.memory_space<vmem>>, vector<1x8xf32>
    %199 = vector.shape_cast %198 : vector<1x8xf32> to vector<8xf32>
    %c175 = arith.constant 175 : index
    %c0_169 = arith.constant 0 : index
    %200 = vector.load %arg9[%c175, %c0_169] : memref<217x8xf32, #tpu.memory_space<vmem>>, vector<1x8xf32>
    %201 = vector.shape_cast %200 : vector<1x8xf32> to vector<8xf32>
    %202 = vector.shape_cast %199 : vector<8xf32> to vector<1x8xf32>
    tpu.vector_store %arg9[%c175, %c0_169], %202 {strides = array<i32>} : memref<217x8xf32, #tpu.memory_space<vmem>>, vector<1x8xf32>,
    %c175_170 = arith.constant 175 : index
    %c0_171 = arith.constant 0 : index
    %203 = tpu.strided_load %arg9[%c175_170, %c0_171] {strides = array<i32: 2, 1>} : memref<217x8xf32, #tpu.memory_space<vmem>>, vector<8x8xf32>
    %cst_172 = arith.constant 2.500000e-01 : f32
    %204 = vector.broadcast %cst_172 : f32 to vector<8x8xf32>
    %205 = arith.mulf %204, %203 : vector<8x8xf32>
    %c176 = arith.constant 176 : index
    %c0_173 = arith.constant 0 : index
    %206 = tpu.strided_load %arg9[%c176, %c0_173] {strides = array<i32: 2, 1>} : memref<217x8xf32, #tpu.memory_space<vmem>>, vector<8x8xf32>
    %cst_174 = arith.constant 5.000000e-01 : f32
    %207 = vector.broadcast %cst_174 : f32 to vector<8x8xf32>
    %208 = arith.mulf %207, %206 : vector<8x8xf32>
    %209 = arith.addf %205, %208 : vector<8x8xf32>
    %c177_175 = arith.constant 177 : index
    %c0_176 = arith.constant 0 : index
    %210 = tpu.strided_load %arg9[%c177_175, %c0_176] {strides = array<i32: 2, 1>} : memref<217x8xf32, #tpu.memory_space<vmem>>, vector<8x8xf32>
    %cst_177 = arith.constant 2.500000e-01 : f32
    %211 = vector.broadcast %cst_177 : f32 to vector<8x8xf32>
    %212 = arith.mulf %211, %210 : vector<8x8xf32>
    %213 = arith.addf %209, %212 : vector<8x8xf32>
    %c7_178 = arith.constant 7 : index
    %c0_179 = arith.constant 0 : index
    %c0_180 = arith.constant 0 : index
    %214 = vector.load %arg10[%c7_178, %c0_179, %c0_180] : memref<9x8x8xf32, #tpu.memory_space<vmem>>, vector<1x8x8xf32>
    %215 = vector.shape_cast %214 : vector<1x8x8xf32> to vector<8x8xf32>
    %216 = vector.shape_cast %213 : vector<8x8xf32> to vector<1x8x8xf32>
    tpu.vector_store %arg10[%c7_178, %c0_179, %c0_180], %216 {strides = array<i32>} : memref<9x8x8xf32, #tpu.memory_space<vmem>>, vector<1x8x8xf32>,
    %c201 = arith.constant 201 : index
    %c0_181 = arith.constant 0 : index
    %217 = vector.load %arg9[%c201, %c0_181] : memref<217x8xf32, #tpu.memory_space<vmem>>, vector<1x8xf32>
    %218 = vector.shape_cast %217 : vector<1x8xf32> to vector<8xf32>
    %c199 = arith.constant 199 : index
    %c0_182 = arith.constant 0 : index
    %219 = vector.load %arg9[%c199, %c0_182] : memref<217x8xf32, #tpu.memory_space<vmem>>, vector<1x8xf32>
    %220 = vector.shape_cast %219 : vector<1x8xf32> to vector<8xf32>
    %221 = vector.shape_cast %218 : vector<8xf32> to vector<1x8xf32>
    tpu.vector_store %arg9[%c199, %c0_182], %221 {strides = array<i32>} : memref<217x8xf32, #tpu.memory_space<vmem>>, vector<1x8xf32>,
    %c199_183 = arith.constant 199 : index
    %c0_184 = arith.constant 0 : index
    %222 = tpu.strided_load %arg9[%c199_183, %c0_184] {strides = array<i32: 2, 1>} : memref<217x8xf32, #tpu.memory_space<vmem>>, vector<8x8xf32>
    %cst_185 = arith.constant 2.500000e-01 : f32
    %223 = vector.broadcast %cst_185 : f32 to vector<8x8xf32>
    %224 = arith.mulf %223, %222 : vector<8x8xf32>
    %c200 = arith.constant 200 : index
    %c0_186 = arith.constant 0 : index
    %225 = tpu.strided_load %arg9[%c200, %c0_186] {strides = array<i32: 2, 1>} : memref<217x8xf32, #tpu.memory_space<vmem>>, vector<8x8xf32>
    %cst_187 = arith.constant 5.000000e-01 : f32
    %226 = vector.broadcast %cst_187 : f32 to vector<8x8xf32>
    %227 = arith.mulf %226, %225 : vector<8x8xf32>
    %228 = arith.addf %224, %227 : vector<8x8xf32>
    %c201_188 = arith.constant 201 : index
    %c0_189 = arith.constant 0 : index
    %229 = tpu.strided_load %arg9[%c201_188, %c0_189] {strides = array<i32: 2, 1>} : memref<217x8xf32, #tpu.memory_space<vmem>>, vector<8x8xf32>
    %cst_190 = arith.constant 2.500000e-01 : f32
    %230 = vector.broadcast %cst_190 : f32 to vector<8x8xf32>
    %231 = arith.mulf %230, %229 : vector<8x8xf32>
    %232 = arith.addf %228, %231 : vector<8x8xf32>
    %c8_191 = arith.constant 8 : index
    %c0_192 = arith.constant 0 : index
    %c0_193 = arith.constant 0 : index
    %233 = vector.load %arg10[%c8_191, %c0_192, %c0_193] : memref<9x8x8xf32, #tpu.memory_space<vmem>>, vector<1x8x8xf32>
    %234 = vector.shape_cast %233 : vector<1x8x8xf32> to vector<8x8xf32>
    %235 = vector.shape_cast %232 : vector<8x8xf32> to vector<1x8x8xf32>
    tpu.vector_store %arg10[%c8_191, %c0_192, %c0_193], %235 {strides = array<i32>} : memref<9x8x8xf32, #tpu.memory_space<vmem>>, vector<1x8x8xf32>,
    %c0_i32_194 = arith.constant 0 : i32
    %236 = arith.cmpi eq, %arg1, %c0_i32_194 : i32
    %237 = arith.extui %236 : i1 to i32
    %c0_i32_195 = arith.constant 0 : i32
    %238 = arith.cmpi ne, %237, %c0_i32_195 : i32
    scf.if %238 {
      %c2_213 = arith.constant 2 : index
      %c0_214 = arith.constant 0 : index
      %c0_215 = arith.constant 0 : index
      %258 = vector.load %arg10[%c2_213, %c0_214, %c0_215] : memref<9x8x8xf32, #tpu.memory_space<vmem>>, vector<1x8x8xf32>
      %259 = vector.shape_cast %258 : vector<1x8x8xf32> to vector<8x8xf32>
      %c0_216 = arith.constant 0 : index
      %c0_217 = arith.constant 0 : index
      %c0_218 = arith.constant 0 : index
      %260 = vector.load %arg10[%c0_216, %c0_217, %c0_218] : memref<9x8x8xf32, #tpu.memory_space<vmem>>, vector<1x8x8xf32>
      %261 = vector.shape_cast %260 : vector<1x8x8xf32> to vector<8x8xf32>
      %262 = vector.shape_cast %259 : vector<8x8xf32> to vector<1x8x8xf32>
      tpu.vector_store %arg10[%c0_216, %c0_217, %c0_218], %262 {strides = array<i32>} : memref<9x8x8xf32, #tpu.memory_space<vmem>>, vector<1x8x8xf32>,
    } else {
    }
    %c0_196 = arith.constant 0 : index
    %c0_197 = arith.constant 0 : index
    %c0_198 = arith.constant 0 : index
    %239 = tpu.strided_load %arg10[%c0_196, %c0_197, %c0_198] {strides = array<i32: 2, 1, 1>} : memref<9x8x8xf32, #tpu.memory_space<vmem>>, vector<4x8x8xf32>
    %cst_199 = arith.constant 2.500000e-01 : f32
    %240 = vector.broadcast %cst_199 : f32 to vector<4x8x8xf32>
    %241 = arith.mulf %240, %239 : vector<4x8x8xf32>
    %c1_200 = arith.constant 1 : index
    %c0_201 = arith.constant 0 : index
    %c0_202 = arith.constant 0 : index
    %242 = tpu.strided_load %arg10[%c1_200, %c0_201, %c0_202] {strides = array<i32: 2, 1, 1>} : memref<9x8x8xf32, #tpu.memory_space<vmem>>, vector<4x8x8xf32>
    %cst_203 = arith.constant 5.000000e-01 : f32
    %243 = vector.broadcast %cst_203 : f32 to vector<4x8x8xf32>
    %244 = arith.mulf %243, %242 : vector<4x8x8xf32>
    %245 = arith.addf %241, %244 : vector<4x8x8xf32>
    %c2_204 = arith.constant 2 : index
    %c0_205 = arith.constant 0 : index
    %c0_206 = arith.constant 0 : index
    %246 = tpu.strided_load %arg10[%c2_204, %c0_205, %c0_206] {strides = array<i32: 2, 1, 1>} : memref<9x8x8xf32, #tpu.memory_space<vmem>>, vector<4x8x8xf32>
    %cst_207 = arith.constant 2.500000e-01 : f32
    %247 = vector.broadcast %cst_207 : f32 to vector<4x8x8xf32>
    %248 = arith.mulf %247, %246 : vector<4x8x8xf32>
    %249 = arith.addf %245, %248 : vector<4x8x8xf32>
    %250 = vector.shape_cast %64 : vector<1x8xf32> to vector<1x1x8xf32>
    %251 = vector.broadcast %250 : vector<1x1x8xf32> to vector<4x8x8xf32>
    %252 = arith.addf %249, %251 : vector<4x8x8xf32>
    %cst_208 = arith.constant 0.000000e+00 : f32
    %253 = vector.broadcast %cst_208 : f32 to vector<4x8x8xf32>
    %254 = arith.maximumf %252, %253 : vector<4x8x8xf32>
    %c0_209 = arith.constant 0 : index
    %c0_210 = arith.constant 0 : index
    %c0_211 = arith.constant 0 : index
    %c0_212 = arith.constant 0 : index
    %255 = vector.load %arg6[%c0_209, %c0_210, %c0_211, %c0_212] : memref<1x4x8x8xf32, #tpu.memory_space<vmem>>, vector<1x4x8x8xf32>
    %256 = vector.shape_cast %255 : vector<1x4x8x8xf32> to vector<4x8x8xf32>
    %257 = vector.shape_cast %254 : vector<4x8x8xf32> to vector<1x4x8x8xf32>
    tpu.vector_store %arg6[%c0_209, %c0_210, %c0_211, %c0_212], %257 {strides = array<i32>} : memref<1x4x8x8xf32, #tpu.memory_space<vmem>>, vector<1x4x8x8xf32>,
    return
  }
  func.func @transform_1(%arg0: i32, %arg1: i32, %arg2: i32) -> (i32, i32, i32) {
    %c0_i32 = arith.constant 0 : i32
    %c0_i32_0 = arith.constant 0 : i32
    %c0_i32_1 = arith.constant 0 : i32
    return %c0_i32, %c0_i32_0, %arg2 : i32, i32, i32
  }
  func.func @transform_2(%arg0: i32, %arg1: i32, %arg2: i32) -> (i32, i32) {
    %c0_i32 = arith.constant 0 : i32
    %c0_i32_0 = arith.constant 0 : i32
    return %c0_i32, %arg2 : i32, i32
  }
  func.func @transform_3(%arg0: i32, %arg1: i32, %arg2: i32) -> (i32, i32, i32, i32) {
    %c0_i32 = arith.constant 0 : i32
    %c0_i32_0 = arith.constant 0 : i32
    return %arg0, %arg1, %c0_i32, %arg2 : i32, i32, i32, i32
  }
}

</mosaic_0001>

<llo_original>
// kernel: tpu_custom_call.1
$region0: #{tpu_custom_call.1}
  #allocation0 [shape = 'u32[]', space=smem, size = 0x4, offset = 0x4, fixed_abs, tag = 'smem constant byte address 0x4 - core index']
  #allocation1 [shape = 'u32[144,128]{1,0:T(1,128)}', space=vmem, size = 0x12000, scoped, tag = 'internal scratch']
  #allocation2 [shape = 'bf16[264,4]{1,0:T(8,128)(2,1)}', space=vmem, size = 0x10800, scoped, tag = 'scratch operand']
  #allocation3 [shape = 's32[1]{0}', space=sflag, size = 0x4, scoped, tag = 'scratch operand']
  #allocation4 [shape = 'f32[217,8]{1,0:T(8,128)}', space=vmem, size = 0x1c000, scoped, tag = 'scratch operand']
  #allocation5 [shape = 'f32[9,8,8]{2,1,0:T(8,128)}', space=vmem, size = 0x9000, scoped, tag = 'scratch operand']
  #allocation8 [shape = 's32[]', space=sflag, size = 0x4, offset = 0, fixed_abs, tag = 'sflag constant byte address 0x0 - dummy sync flag']
  %s0 = inlined_call_operand.vmem [shape: bf16[960,4], index: 0, kind: input, shape index: {}]
  %s1 = inlined_call_operand.vmem [shape: bf16[9,4,8], index: 1, kind: input, shape index: {}]
  %s2 = inlined_call_operand.vmem [shape: f32[1,8], index: 2, kind: input, shape index: {}]
  %s3 = inlined_call_operand.hbm [shape: f32[2,8,8,8], index: 3, kind: output, shape index: {}]
  %s4 = sld [smem:[#allocation0]]
  $region86: #{tpu_custom_call.1} parent=0
    _
  %s6 = ssub.s32 1, %s4
  %s7 = scalar_select 0, %s6, %s4
  $region1: #{tpu_custom_call.1} parent=0
    #allocation6 [shape = 'u8[32768]{0}', space=vmem, size = 0x8000, scoped, tag = 'output window, operand 0']
    #allocation7 [shape = 's32[2]{0}', space=sflag, size = 0x8, scoped, tag = 'scoped memory for tpu_custom_call.1']
    %8 = vsyncpa [#allocation7], 0
    %s9 = scalar_lea.sflag [#allocation7], 1
    %10 = vsyncpa %s9, 0
    loop: start=0, step=1, limit=6
    $region2: #{tpu_custom_call.1} parent=1 // loop_pre_header
      _
    $region3: #{tpu_custom_call.1} parent=1 // loop_header
      %s12 = sphi 0, %s16
      %p13 = scmp.ge.s32.totalorder %s12, 6
      %s19 = sphi 0, %s38
      %s20 = sphi 0, %s34
      %s21 = sphi 0, %s30
      %s22 = sphi 0, %s19
      %s23 = sphi 0, %s20
      %s24 = sphi 0, %s21
      %s25 = sphi 0, %s22
      %s26 = sphi 0, %s23
      %s27 = sphi 0, %s24
      %s41 = sphi 0, %s43
      %s44 = sphi 0, %s41
      %s45 = sphi 0, %s44
      %s61 = sphi 0, %s45
      %s67 = sphi 0, %s69
      %s70 = sphi 0, %s67
      %s71 = sphi 0, %s70
      %s87 = sphi 0, %s71
      %s97 = sphi 0, %s99
      %s100 = sphi 0, %s97
      %s101 = sphi 0, %s100
      %s117 = sphi 0, %s101
    $region4: #{tpu_custom_call.1} parent=1 // loop_header_branch
      %15 = sbr.rel (%p13) target = $region8
    $region5: #{tpu_custom_call.1} parent=1 // loop_body
      %s17 = ssub.s32 %s12, 1
      %s18 = ssub.s32 %s12, 2
      %s28 = sadd.s32 1, %s21
      %p29 = scmp.ge.s32.totalorder %s28, 1
      %s30 = scalar_select %p29, 0, %s28
      %s31 = sadd.s32 1, %s20
      %s32 = scalar_select %p29, %s31, %s20
      %p33 = scmp.ge.s32.totalorder %s32, 2
      %s34 = scalar_select %p33, 0, %s32
      %s35 = sadd.s32 1, %s19
      %s36 = scalar_select %p33, %s35, %s19
      %p37 = scmp.ge.s32.totalorder %s36, 2
      %s38 = scalar_select %p37, 0, %s36
      %s39 = ssub.s32 %s21, %s30
      %p40 = scmp.eq.s32.totalorder %s39, 0
      %s42 = sadd.s32 %s41, 1
      %s43 = scalar_select %p40, %s41, %s42
      %p46 = pneg %p40
      %p47 = scmp.eq.s32.totalorder %s12, 3
      %p48 = por %p46, %p47
      %p49 = scmp.ne.s32.totalorder %s41, %s44
      %p50 = scmp.eq.s32.totalorder %s12, 0
      %p51 = por %p49, %p50
      %p52 = scmp.ne.s32.totalorder %s41, %s44
      %p53 = scmp.eq.s32.totalorder %s17, 3
      %p54 = por %p52, %p53
      %p55 = scmp.ne.s32.totalorder %s44, %s45
      %p56 = scmp.eq.s32.totalorder %s17, 0
      %p57 = por %p55, %p56
      %p58 = scmp.ne.s32.totalorder %s44, %s45
      %p59 = scmp.eq.s32.totalorder %s18, 3
      %p60 = por %p58, %p59
      %p62 = scmp.ne.s32.totalorder %s45, %s61
      %p63 = scmp.eq.s32.totalorder %s18, 0
      %p64 = por %p62, %p63
      %s65 = ssub.s32 %s21, %s30
      %p66 = scmp.eq.s32.totalorder %s65, 0
      %s68 = sadd.s32 %s67, 1
      %s69 = scalar_select %p66, %s67, %s68
      %p72 = pneg %p66
      %p73 = scmp.eq.s32.totalorder %s12, 3
      %p74 = por %p72, %p73
      %p75 = scmp.ne.s32.totalorder %s67, %s70
      %p76 = scmp.eq.s32.totalorder %s12, 0
      %p77 = por %p75, %p76
      %p78 = scmp.ne.s32.totalorder %s67, %s70
      %p79 = scmp.eq.s32.totalorder %s17, 3
      %p80 = por %p78, %p79
      %p81 = scmp.ne.s32.totalorder %s70, %s71
      %p82 = scmp.eq.s32.totalorder %s17, 0
      %p83 = por %p81, %p82
      %p84 = scmp.ne.s32.totalorder %s70, %s71
      %p85 = scmp.eq.s32.totalorder %s18, 3
      %p86 = por %p84, %p85
      %p88 = scmp.ne.s32.totalorder %s71, %s87
      %p89 = scmp.eq.s32.totalorder %s18, 0
      %p90 = por %p88, %p89
      %s91 = ssub.s32 %s19, %s38
      %s92 = ssub.s32 %s20, %s34
      %s93 = sor.u32 %s91, %s92
      %s94 = ssub.s32 %s21, %s30
      %s95 = sor.u32 %s93, %s94
      %p96 = scmp.eq.s32.totalorder %s95, 0
      %s98 = sadd.s32 %s97, 1
      %s99 = scalar_select %p96, %s97, %s98
      %p102 = pneg %p96
      %p103 = scmp.eq.s32.totalorder %s12, 3
      %p104 = por %p102, %p103
      %p105 = scmp.ne.s32.totalorder %s97, %s100
      %p106 = scmp.eq.s32.totalorder %s12, 0
      %p107 = por %p105, %p106
      %p108 = scmp.ne.s32.totalorder %s97, %s100
      %p109 = scmp.eq.s32.totalorder %s17, 3
      %p110 = por %p108, %p109
      %p111 = scmp.ne.s32.totalorder %s100, %s101
      %p112 = scmp.eq.s32.totalorder %s17, 0
      %p113 = por %p111, %p112
      %p114 = scmp.ne.s32.totalorder %s100, %s101
      %p115 = scmp.eq.s32.totalorder %s18, 3
      %p116 = por %p114, %p115
      %p118 = scmp.ne.s32.totalorder %s101, %s117
      %p119 = scmp.eq.s32.totalorder %s18, 0
      %p120 = por %p118, %p119
      %p121 = scmp.le.s32.totalorder 1, %s12
      %p122 = scmp.lt.s32.totalorder %s12, 5
      %p123 = pnand %p121, %p122
      %p124 = pneg %p123
      // Predicated region
      $region9: #{tpu_custom_call.1} parent=5 // pred_check
        _
      $region10: #{tpu_custom_call.1} parent=5 // pred_check_branch
        %126 = sbr.rel (%p123) target = $region12
      $region11: #{tpu_custom_call.1} parent=5 // pred_region
        %s127 = ssub.s32 %s12, 1
        // Predicated region
        $region13: #{tpu_custom_call.1} parent=11 // pred_check
          %p128 = pneg %p57
        $region14: #{tpu_custom_call.1} parent=11 // pred_check_branch
          %130 = sbr.rel (%p128) target = $region16
        $region15: #{tpu_custom_call.1} parent=11 // pred_region
          %p131 = scmp.lt.s32.totalorder %s24, 0
          %s132 = scalar_select %p131, %s24, 0
          %s133 = smul.addr %s132, 2
          %s134 = scalar_lea.vmem %s1, %s133
        $region16: #{tpu_custom_call.1} parent=11 // pred_fallthru
          _
        // Predicated region
        $region17: #{tpu_custom_call.1} parent=11 // pred_check
          %p135 = pneg %p83
        $region18: #{tpu_custom_call.1} parent=11 // pred_check_branch
          %137 = sbr.rel (%p135) target = $region20
        $region19: #{tpu_custom_call.1} parent=11 // pred_region
          %p138 = scmp.lt.s32.totalorder %s24, 0
          %s139 = scalar_select %p138, %s24, 0
          %s140 = scalar_lea.vmem %s2, %s139
        $region20: #{tpu_custom_call.1} parent=11 // pred_fallthru
          _
      $region12: #{tpu_custom_call.1} parent=5 // pred_fallthru
        _
      %p141 = scmp.lt.s32.totalorder %s12, 4
      // Predicated region
      $region21: #{tpu_custom_call.1} parent=5 // pred_check
        %p142 = pneg %p141
      $region22: #{tpu_custom_call.1} parent=5 // pred_check_branch
        %144 = sbr.rel (%p142) target = $region24
      $region23: #{tpu_custom_call.1} parent=5 // pred_region
        _
      $region24: #{tpu_custom_call.1} parent=5 // pred_fallthru
        _
      %p145 = scmp.le.s32.totalorder 1, %s12
      %p146 = scmp.lt.s32.totalorder %s12, 5
      %p147 = pnand %p145, %p146
      %p148 = pneg %p147
      // Predicated region
      $region25: #{tpu_custom_call.1} parent=5 // pred_check
        _
      $region26: #{tpu_custom_call.1} parent=5 // pred_check_branch
        %150 = sbr.rel (%p147) target = $region28
      $region27: #{tpu_custom_call.1} parent=5 // pred_region
        %s151 = ssub.s32 %s12, 1
        %p152 = scmp.lt.s32.totalorder %s24, 0
        %s153 = scalar_select %p152, %s24, 0
        %s154 = smul.addr %s153, 2
        %s155 = scalar_lea.vmem %s1, %s154
        %p156 = pneg %p57
        %p157 = pneg %p54
        %p158 = scmp.lt.s32.totalorder %s24, 0
        %s159 = scalar_select %p158, %s24, 0
        %s160 = scalar_lea.vmem %s2, %s159
        %p161 = pneg %p83
        %p162 = pneg %p80
        %p163 = pneg %p113
        %p164 = pneg %p110
        %s165 = sand.u32 %s100, 1
        %s166 = scalar_lea.sflag [#allocation7], %s165
        %s167 = sand.u32 %s100, 1
        %s168 = smul.addr %s167, 32
        %s169 = scalar_lea.vmem [#allocation6], %s168
        %p170 = scmp.lt.s32.totalorder %s24, 0
        %s171 = scalar_select %p170, %s24, 0
        %s172 = smul.addr %s171, 2
        %s173 = scalar_lea.vmem %s1, %s172
        %p174 = scmp.lt.s32.totalorder %s24, 0
        %s175 = scalar_select %p174, %s24, 0
        %s176 = scalar_lea.vmem %s2, %s175
        %s177 = smul.u32 4, %s23
        %p179 = scmp.eq.s32.totalorder %s24, 0
        // Predicated region
        $region29: #{tpu_custom_call.1} parent=27 // pred_check
          %p180 = pneg %p179
        $region30: #{tpu_custom_call.1} parent=27 // pred_check_branch
          %182 = sbr.rel (%p180) target = $region32
        $region31: #{tpu_custom_call.1} parent=27 // pred_region
          %s183 = smul.u32 %s22, 480
          %s184 = smul.u32 %s23, 192
          %s185 = sadd.s32 %s183, %s184
          %s186 = sshra.s32 %s185, 3
          %s187 = sand.u32 %s185, 7
          %s188 = smul.addr %s186, 4
          %s189 = scalar_lea.vmem %s0, %s188
          %p191 = scmp.lt.u32.totalorder 132, 8
          %p192 = pneg %p191
          // Predicated region
          $region33: #{tpu_custom_call.1} parent=31 // pred_check
            _
          $region34: #{tpu_custom_call.1} parent=31 // pred_check_branch
            %194 = sbr.rel (%p191) target = $region36
          $region35: #{tpu_custom_call.1} parent=31 // pred_region
            %s209 = sand.u32 132, 7
            %p210 = scmp.eq.s32.totalorder %s209, 0
            %p211 = pneg %p210
            // Predicated region
            $region48: #{tpu_custom_call.1} parent=35 // pred_check
              _
            $region49: #{tpu_custom_call.1} parent=35 // pred_check_branch
              %213 = sbr.rel (%p210) target = $region51
            $region50: #{tpu_custom_call.1} parent=35 // pred_region
              %s214 = sand.u32 132, 7
              %s215 = ssub.s32 132, %s214
              %s216 = scalar_lea.vmem %s189, %s215
              %s217 = ssub.s32 132, %s214
              %s218 = scalar_lea.vmem [#allocation2], %s217
              loop: start=0, step=1, limit=1
              $region52: #{tpu_custom_call.1} parent=50 // loop_pre_header
                _
              $region53: #{tpu_custom_call.1} parent=50 // loop_header
                %s220 = sphi 0, %s224
                %p221 = scmp.ge.s32.totalorder %s220, 1
                %s225 = sphi %s189, %s189
                %s226 = sphi [#allocation2], [#allocation2]
              $region54: #{tpu_custom_call.1} parent=50 // loop_header_branch
                %223 = sbr.rel (%p221) target = $region58
              $region55: #{tpu_custom_call.1} parent=50 // loop_body
                %v227 = vld [vmem:[%s225] sm:$0xff]
                %228 = vst [vmem:[%s226] sm:$0xff] %v227
                %v229 = vld [vmem:[%s225 + $0x8] sm:$0xff]
                %230 = vst [vmem:[%s226 + $0x8] sm:$0xff] %v229
                %v231 = vld [vmem:[%s225 + $0x10] sm:$0xff]
                %232 = vst [vmem:[%s226 + $0x10] sm:$0xff] %v231
                %v233 = vld [vmem:[%s225 + $0x18] sm:$0xff]
                %234 = vst [vmem:[%s226 + $0x18] sm:$0xff] %v233
                %v235 = vld [vmem:[%s225 + $0x20] sm:$0xff]
                %236 = vst [vmem:[%s226 + $0x20] sm:$0xff] %v235
                %v237 = vld [vmem:[%s225 + $0x28] sm:$0xff]
                %238 = vst [vmem:[%s226 + $0x28] sm:$0xff] %v237
                %v239 = vld [vmem:[%s225 + $0x30] sm:$0xff]
                %240 = vst [vmem:[%s226 + $0x30] sm:$0xff] %v239
                %v241 = vld [vmem:[%s225 + $0x38] sm:$0xff]
                %242 = vst [vmem:[%s226 + $0x38] sm:$0xff] %v241
                %v243 = vld [vmem:[%s225 + $0x40] sm:$0xff]
                %244 = vst [vmem:[%s226 + $0x40] sm:$0xff] %v243
                %v245 = vld [vmem:[%s225 + $0x48] sm:$0xff]
                %246 = vst [vmem:[%s226 + $0x48] sm:$0xff] %v245
                %v247 = vld [vmem:[%s225 + $0x50] sm:$0xff]
                %248 = vst [vmem:[%s226 + $0x50] sm:$0xff] %v247
                %v249 = vld [vmem:[%s225 + $0x58] sm:$0xff]
                %250 = vst [vmem:[%s226 + $0x58] sm:$0xff] %v249
                %v251 = vld [vmem:[%s225 + $0x60] sm:$0xff]
                %252 = vst [vmem:[%s226 + $0x60] sm:$0xff] %v251
                %v253 = vld [vmem:[%s225 + $0x68] sm:$0xff]
                %254 = vst [vmem:[%s226 + $0x68] sm:$0xff] %v253
                %v255 = vld [vmem:[%s225 + $0x70] sm:$0xff]
                %256 = vst [vmem:[%s226 + $0x70] sm:$0xff] %v255
                %v257 = vld [vmem:[%s225 + $0x78] sm:$0xff]
                %258 = vst [vmem:[%s226 + $0x78] sm:$0xff] %v257
              $region56: #{tpu_custom_call.1} parent=50 // loop_footer
                %s224 = sadd.s32 1, %s220
              $region57: #{tpu_custom_call.1} parent=50 // loop_footer_branch
                %219 = sbr.rel target = $region53
              $region58: #{tpu_custom_call.1} parent=50 // loop_exit
                _
              %s259 = sshllo.u32 0, %s214
              loop: start=0, step=1, limit=1
              $region59: #{tpu_custom_call.1} parent=50 // loop_pre_header
                _
              $region60: #{tpu_custom_call.1} parent=50 // loop_header
                %s261 = sphi 0, %s265
                %p262 = scmp.ge.s32.totalorder %s261, 1
                %s266 = sphi %s216, %s216
                %s267 = sphi %s218, %s218
              $region61: #{tpu_custom_call.1} parent=50 // loop_header_branch
                %264 = sbr.rel (%p262) target = $region65
              $region62: #{tpu_custom_call.1} parent=50 // loop_body
                %v268 = vld [vmem:[%s266] sm:%s259]
                %269 = vst [vmem:[%s267] sm:%s259] %v268
              $region63: #{tpu_custom_call.1} parent=50 // loop_footer
                %s265 = sadd.s32 1, %s261
              $region64: #{tpu_custom_call.1} parent=50 // loop_footer_branch
                %260 = sbr.rel target = $region60
              $region65: #{tpu_custom_call.1} parent=50 // loop_exit
                _
            $region51: #{tpu_custom_call.1} parent=35 // pred_fallthru
              _
          $region36: #{tpu_custom_call.1} parent=31 // pred_fallthru
            _
          // Predicated region
          $region37: #{tpu_custom_call.1} parent=31 // pred_check
            %p195 = pneg %p191
          $region38: #{tpu_custom_call.1} parent=31 // pred_check_branch
            %197 = sbr.rel (%p195) target = $region40
          $region39: #{tpu_custom_call.1} parent=31 // pred_region
            %s198 = sshllo.u32 0, 132
            loop: start=0, step=1, limit=1
            $region41: #{tpu_custom_call.1} parent=39 // loop_pre_header
              _
            $region42: #{tpu_custom_call.1} parent=39 // loop_header
              %s200 = sphi 0, %s204
              %p201 = scmp.ge.s32.totalorder %s200, 1
              %s205 = sphi %s189, %s189
              %s206 = sphi [#allocation2], [#allocation2]
            $region43: #{tpu_custom_call.1} parent=39 // loop_header_branch
              %203 = sbr.rel (%p201) target = $region47
            $region44: #{tpu_custom_call.1} parent=39 // loop_body
              %v207 = vld [vmem:[%s205] sm:%s198]
              %208 = vst [vmem:[%s206] sm:%s198] %v207
            $region45: #{tpu_custom_call.1} parent=39 // loop_footer
              %s204 = sadd.s32 1, %s200
            $region46: #{tpu_custom_call.1} parent=39 // loop_footer_branch
              %199 = sbr.rel target = $region42
            $region47: #{tpu_custom_call.1} parent=39 // loop_exit
              _
          $region40: #{tpu_custom_call.1} parent=31 // pred_fallthru
            _
          // Predicated region
          $region66: #{tpu_custom_call.1} parent=31 // pred_check
            _
          $region67: #{tpu_custom_call.1} parent=31 // pred_check_branch
            %272 = sbr.rel (0) target = $region69
          $region68: #{tpu_custom_call.1} parent=31 // pred_region
            %273 = vsyncadd [#allocation3], 2112
          $region69: #{tpu_custom_call.1} parent=31 // pred_fallthru
            _
          %s274 = smul.u32 4, 33
          %s275 = smul.u32 %s274, 1
          %s276 = sshll.u32 %s275, 4
          %277 = dma.done [#allocation3], %s276
        $region32: #{tpu_custom_call.1} parent=27 // pred_fallthru
          _
        %v278 = vld [vmem:[#allocation2] sm:$0xf]
        %v279 = vld [vmem:[#allocation2 + $0x4] sm:$0xf]
        %v280 = vld [vmem:[#allocation2 + $0x8] sm:$0xf]
        %v281 = vld [vmem:[#allocation2 + $0xc] sm:$0xf]
        %v282 = vld [vmem:[#allocation2 + $0x10] sm:$0xf]
        %v283 = vld [vmem:[#allocation2 + $0x14] sm:$0xf]
        %v284 = vld [vmem:[#allocation2 + $0x18] sm:$0xf]
        %v285 = vld [vmem:[#allocation2 + $0x1c] sm:$0xf]
        %v286 = vld [vmem:[#allocation2 + $0x20] sm:$0xf]
        %v287 = vld [vmem:[#allocation2 + $0x24] sm:$0xf]
        %v288 = vld [vmem:[#allocation2 + $0x28] sm:$0xf]
        %v289 = vld [vmem:[#allocation2 + $0x2c] sm:$0xf]
        %v290 = vld [vmem:[#allocation2 + $0x30] sm:$0xf]
        %v291 = vld [vmem:[#allocation2 + $0x34] sm:$0xf]
        %v292 = vld [vmem:[#allocation2 + $0x38] sm:$0xf]
        %v293 = vld [vmem:[#allocation2 + $0x3c] sm:$0xf]
        %v294 = vld [vmem:[#allocation2 + $0x40] sm:$0xf]
        %v295 = vld [vmem:[#allocation2 + $0x44] sm:$0xf]
        %v296 = vld [vmem:[#allocation2 + $0x48] sm:$0xf]
        %v297 = vld [vmem:[#allocation2 + $0x4c] sm:$0xf]
        %v298 = vld [vmem:[#allocation2 + $0x50] sm:$0xf]
        %v299 = vld [vmem:[#allocation2 + $0x54] sm:$0xf]
        %v300 = vld [vmem:[#allocation2 + $0x58] sm:$0xf]
        %v301 = vld [vmem:[#allocation2 + $0x5c] sm:$0xf]
        %v302 = vld [vmem:[#allocation2 + $0x60] sm:$0xf]
        %v303 = vld [vmem:[#allocation2 + $0x64] sm:$0xf]
        %v304 = vld [vmem:[#allocation2 + $0x68] sm:$0x1]
        %v305 = vld [vmem:[%s173] sm:$0x3]
        %v333 = vunpack.c.l.b16 %v278
        %v334 = vunpack.c.l.b16 %v279
        %v335 = vunpack.c.l.b16 %v280
        %v336 = vunpack.c.l.b16 %v281
        %v337 = vunpack.c.l.b16 %v282
        %v338 = vunpack.c.l.b16 %v283
        %v339 = vunpack.c.l.b16 %v284
        %v340 = vunpack.c.l.b16 %v285
        %v341 = vunpack.c.l.b16 %v286
        %v342 = vunpack.c.l.b16 %v287
        %v343 = vunpack.c.l.b16 %v288
        %v344 = vunpack.c.l.b16 %v289
        %v345 = vunpack.c.l.b16 %v290
        %v346 = vunpack.c.l.b16 %v291
        %v347 = vunpack.c.l.b16 %v292
        %v348 = vunpack.c.l.b16 %v293
        %v349 = vunpack.c.l.b16 %v294
        %v350 = vunpack.c.l.b16 %v295
        %v351 = vunpack.c.l.b16 %v296
        %v352 = vunpack.c.l.b16 %v297
        %v353 = vunpack.c.l.b16 %v298
        %v354 = vunpack.c.l.b16 %v299
        %v355 = vunpack.c.l.b16 %v300
        %v356 = vunpack.c.l.b16 %v301
        %v357 = vunpack.c.l.b16 %v302
        %v358 = vunpack.c.l.b16 %v303
        %v359 = vunpack.c.l.b16 %v304
        %v360 = vpack.c.b16 %v334, %v333
        %v361 = vpack.c.b16 %v336, %v335
        %v362 = vpack.c.b16 %v338, %v337
        %v363 = vpack.c.b16 %v340, %v339
        %v364 = vpack.c.b16 %v342, %v341
        %v365 = vpack.c.b16 %v344, %v343
        %v366 = vpack.c.b16 %v346, %v345
        %v367 = vpack.c.b16 %v348, %v347
        %v368 = vpack.c.b16 %v350, %v349
        %v369 = vpack.c.b16 %v352, %v351
        %v370 = vpack.c.b16 %v354, %v353
        %v371 = vpack.c.b16 %v356, %v355
        %v372 = vpack.c.b16 %v358, %v357
        %v373 = vpack.c.b16 %v359, %v359
        %vm374 = vcmask 31744
        %v376 = vsel %vm374, %v360, 0
        %v379 = vsel %vm374, %v361, 0
        %v382 = vsel %vm374, %v362, 0
        %v385 = vsel %vm374, %v363, 0
        %v388 = vsel %vm374, %v364, 0
        %v391 = vsel %vm374, %v365, 0
        %v394 = vsel %vm374, %v366, 0
        %v397 = vsel %vm374, %v367, 0
        %v400 = vsel %vm374, %v368, 0
        %v403 = vsel %vm374, %v369, 0
        %v406 = vsel %vm374, %v370, 0
        %v409 = vsel %vm374, %v371, 0
        %v412 = vsel %vm374, %v372, 0
        %v415 = vsel %vm374, %v373, 0
        %vm417 = vcmask 1041408
        %v419 = vsel %vm417, %v305, 0
        %421 = vmatprep.subr.bf16.mxu0 0
        %422 = vmatpush1.bf16.msra.mxu0 %v419
        %423 = vmatprep.subr.bf16.mxu0 0
        %424 = vmatpush1.bf16.msra.mxu0 0
        %425 = vmatprep.subr.bf16.mxu0 0
        %426 = vmatpush1.bf16.msra.mxu0 0
        %427 = vmatprep.subr.bf16.mxu0 0
        %428 = vmatpush1.bf16.msra.mxu0 0
        %429 = vmatprep.subr.bf16.mxu0 0
        %430 = vmatpush1.bf16.msra.mxu0 0
        %431 = vmatprep.subr.bf16.mxu0 0
        %432 = vmatpush1.bf16.msra.mxu0 0
        %433 = vmatprep.subr.bf16.mxu0 0
        %434 = vmatpush1.bf16.msra.mxu0 0
        %435 = vmatprep.subr.bf16.mxu0 0
        %436 = vmatpush1.bf16.msra.mxu0 0
        %437 = vmatprep.subr.bf16.mxu0 0
        %438 = vmatpush1.bf16.msra.mxu0 0
        %439 = vmatprep.subr.bf16.mxu0 0
        %440 = vmatpush1.bf16.msra.mxu0 0
        %441 = vmatprep.subr.bf16.mxu0 0
        %442 = vmatpush1.bf16.msra.mxu0 0
        %443 = vmatprep.subr.bf16.mxu0 0
        %444 = vmatpush1.bf16.msra.mxu0 0
        %445 = vmatprep.subr.bf16.mxu0 0
        %446 = vmatpush1.bf16.msra.mxu0 0
        %447 = vmatprep.subr.bf16.mxu0 0
        %448 = vmatpush1.bf16.msra.mxu0 0
        %449 = vmatprep.subr.bf16.mxu0 0
        %450 = vmatpush1.bf16.msra.mxu0 0
        %451 = vmatprep.subr.bf16.mxu0 0
        %452 = vmatpush1.bf16.msra.mxu0 0
        %453 = vmatprep.mubr.bf16.mxu0 0
        %454 = vmatmul.mubr.bf16.gmra.mrb[0].mxu0 %v376
        %v455 = vpop.f32.mrb[0].mxu0
        %v456 = vadd.f32 0.0, %v455
        %v457 = vpop.f32.mrb[0].mxu0
        %v458 = vpop.f32.mrb[0].mxu0
        %v459 = vadd.f32 0.0, %v458
        %v460 = vpop.f32.mrb[0].mxu0
        %461 = vmatprep.mubr.bf16.mxu0 0
        %462 = vmatmul.mubr.bf16.gmra.mrb[0].mxu0 %v379
        %v463 = vpop.f32.mrb[0].mxu0
        %v464 = vadd.f32 0.0, %v463
        %v465 = vpop.f32.mrb[0].mxu0
        %v466 = vpop.f32.mrb[0].mxu0
        %v467 = vadd.f32 0.0, %v466
        %v468 = vpop.f32.mrb[0].mxu0
        %469 = vmatprep.mubr.bf16.mxu0 0
        %470 = vmatmul.mubr.bf16.gmra.mrb[0].mxu0 %v382
        %v471 = vpop.f32.mrb[0].mxu0
        %v472 = vadd.f32 0.0, %v471
        %v473 = vpop.f32.mrb[0].mxu0
        %v474 = vpop.f32.mrb[0].mxu0
        %v475 = vadd.f32 0.0, %v474
        %v476 = vpop.f32.mrb[0].mxu0
        %477 = vmatprep.mubr.bf16.mxu0 0
        %478 = vmatmul.mubr.bf16.gmra.mrb[0].mxu0 %v385
        %v479 = vpop.f32.mrb[0].mxu0
        %v480 = vadd.f32 0.0, %v479
        %v481 = vpop.f32.mrb[0].mxu0
        %v482 = vpop.f32.mrb[0].mxu0
        %v483 = vadd.f32 0.0, %v482
        %v484 = vpop.f32.mrb[0].mxu0
        %485 = vmatprep.mubr.bf16.mxu0 0
        %486 = vmatmul.mubr.bf16.gmra.mrb[0].mxu0 %v388
        %v487 = vpop.f32.mrb[0].mxu0
        %v488 = vadd.f32 0.0, %v487
        %v489 = vpop.f32.mrb[0].mxu0
        %v490 = vpop.f32.mrb[0].mxu0
        %v491 = vadd.f32 0.0, %v490
        %v492 = vpop.f32.mrb[0].mxu0
        %493 = vmatprep.mubr.bf16.mxu0 0
        %494 = vmatmul.mubr.bf16.gmra.mrb[0].mxu0 %v391
        %v495 = vpop.f32.mrb[0].mxu0
        %v496 = vadd.f32 0.0, %v495
        %v497 = vpop.f32.mrb[0].mxu0
        %v498 = vpop.f32.mrb[0].mxu0
        %v499 = vadd.f32 0.0, %v498
        %v500 = vpop.f32.mrb[0].mxu0
        %501 = vmatprep.mubr.bf16.mxu0 0
        %502 = vmatmul.mubr.bf16.gmra.mrb[0].mxu0 %v394
        %v503 = vpop.f32.mrb[0].mxu0
        %v504 = vadd.f32 0.0, %v503
        %v505 = vpop.f32.mrb[0].mxu0
        %v506 = vpop.f32.mrb[0].mxu0
        %v507 = vadd.f32 0.0, %v506
        %v508 = vpop.f32.mrb[0].mxu0
        %509 = vmatprep.mubr.bf16.mxu0 0
        %510 = vmatmul.mubr.bf16.gmra.mrb[0].mxu0 %v397
        %v511 = vpop.f32.mrb[0].mxu0
        %v512 = vadd.f32 0.0, %v511
        %v513 = vpop.f32.mrb[0].mxu0
        %v514 = vpop.f32.mrb[0].mxu0
        %v515 = vadd.f32 0.0, %v514
        %v516 = vpop.f32.mrb[0].mxu0
        %517 = vmatprep.mubr.bf16.mxu0 0
        %518 = vmatmul.mubr.bf16.gmra.mrb[0].mxu0 %v400
        %v519 = vpop.f32.mrb[0].mxu0
        %v520 = vadd.f32 0.0, %v519
        %v521 = vpop.f32.mrb[0].mxu0
        %v522 = vpop.f32.mrb[0].mxu0
        %v523 = vadd.f32 0.0, %v522
        %v524 = vpop.f32.mrb[0].mxu0
        %525 = vmatprep.mubr.bf16.mxu0 0
        %526 = vmatmul.mubr.bf16.gmra.mrb[0].mxu0 %v403
        %v527 = vpop.f32.mrb[0].mxu0
        %v528 = vadd.f32 0.0, %v527
        %v529 = vpop.f32.mrb[0].mxu0
        %v530 = vpop.f32.mrb[0].mxu0
        %v531 = vadd.f32 0.0, %v530
        %v532 = vpop.f32.mrb[0].mxu0
        %533 = vmatprep.mubr.bf16.mxu0 0
        %534 = vmatmul.mubr.bf16.gmra.mrb[0].mxu0 %v406
        %v535 = vpop.f32.mrb[0].mxu0
        %v536 = vadd.f32 0.0, %v535
        %v537 = vpop.f32.mrb[0].mxu0
        %v538 = vpop.f32.mrb[0].mxu0
        %v539 = vadd.f32 0.0, %v538
        %v540 = vpop.f32.mrb[0].mxu0
        %541 = vmatprep.mubr.bf16.mxu0 0
        %542 = vmatmul.mubr.bf16.gmra.mrb[0].mxu0 %v409
        %v543 = vpop.f32.mrb[0].mxu0
        %v544 = vadd.f32 0.0, %v543
        %v545 = vpop.f32.mrb[0].mxu0
        %v546 = vpop.f32.mrb[0].mxu0
        %v547 = vadd.f32 0.0, %v546
        %v548 = vpop.f32.mrb[0].mxu0
        %549 = vmatprep.mubr.bf16.mxu0 0
        %550 = vmatmul.mubr.bf16.gmra.mrb[0].mxu0 %v412
        %v551 = vpop.f32.mrb[0].mxu0
        %v552 = vadd.f32 0.0, %v551
        %v553 = vpop.f32.mrb[0].mxu0
        %v554 = vpop.f32.mrb[0].mxu0
        %v555 = vadd.f32 0.0, %v554
        %v556 = vpop.f32.mrb[0].mxu0
        %557 = vmatprep.mubr.bf16.mxu0 0
        %558 = vmatmul.mubr.bf16.gmra.mrb[0].mxu0 %v415
        %v559 = vpop.f32.mrb[0].mxu0
        %v560 = vadd.f32 0.0, %v559
        %v561 = vpop.f32.mrb[0].mxu0
        %v562 = vpop.f32.mrb[0].mxu0
        %v563 = vpop.f32.mrb[0].mxu0
        %564 = vdwg.mxu0
        %vm565 = vcmask 64512
        %566 = vst.msk [vmem:[#allocation4 + $0x8] sm:$0xff] %vm565, %v456
        %567 = vst.msk [vmem:[#allocation4 + $0x10] sm:$0xff] %vm565, %v459
        %568 = vst.msk [vmem:[#allocation4 + $0x18] sm:$0xff] %vm565, %v464
        %569 = vst.msk [vmem:[#allocation4 + $0x20] sm:$0xff] %vm565, %v467
        %570 = vst.msk [vmem:[#allocation4 + $0x28] sm:$0xff] %vm565, %v472
        %571 = vst.msk [vmem:[#allocation4 + $0x30] sm:$0xff] %vm565, %v475
        %572 = vst.msk [vmem:[#allocation4 + $0x38] sm:$0xff] %vm565, %v480
        %573 = vst.msk [vmem:[#allocation4 + $0x40] sm:$0xff] %vm565, %v483
        %574 = vst.msk [vmem:[#allocation4 + $0x48] sm:$0xff] %vm565, %v488
        %575 = vst.msk [vmem:[#allocation4 + $0x50] sm:$0xff] %vm565, %v491
        %576 = vst.msk [vmem:[#allocation4 + $0x58] sm:$0xff] %vm565, %v496
        %577 = vst.msk [vmem:[#allocation4 + $0x60] sm:$0xff] %vm565, %v499
        %578 = vst.msk [vmem:[#allocation4 + $0x68] sm:$0xff] %vm565, %v504
        %579 = vst.msk [vmem:[#allocation4 + $0x70] sm:$0xff] %vm565, %v507
        %580 = vst.msk [vmem:[#allocation4 + $0x78] sm:$0xff] %vm565, %v512
        %581 = vst.msk [vmem:[#allocation4 + $0x80] sm:$0xff] %vm565, %v515
        %582 = vst.msk [vmem:[#allocation4 + $0x88] sm:$0xff] %vm565, %v520
        %583 = vst.msk [vmem:[#allocation4 + $0x90] sm:$0xff] %vm565, %v523
        %584 = vst.msk [vmem:[#allocation4 + $0x98] sm:$0xff] %vm565, %v528
        %585 = vst.msk [vmem:[#allocation4 + $0xa0] sm:$0xff] %vm565, %v531
        %586 = vst.msk [vmem:[#allocation4 + $0xa8] sm:$0xff] %vm565, %v536
        %587 = vst.msk [vmem:[#allocation4 + $0xb0] sm:$0xff] %vm565, %v539
        %588 = vst.msk [vmem:[#allocation4 + $0xb8] sm:$0xff] %vm565, %v544
        %589 = vst.msk [vmem:[#allocation4 + $0xc0] sm:$0xff] %vm565, %v547
        %590 = vst.msk [vmem:[#allocation4 + $0xc8] sm:$0xff] %vm565, %v552
        %591 = vst.msk [vmem:[#allocation4 + $0xd0] sm:$0xff] %vm565, %v555
        %vm592 = vcmask 57344
        %593 = vst.msk [vmem:[#allocation4 + $0xd8] sm:$0x1] %vm592, %v560
        %v594 = vld [vmem:[#allocation2] sm:$0xf]
        %v595 = vld [vmem:[#allocation2 + $0x4] sm:$0xf]
        %v596 = vld [vmem:[#allocation2 + $0x8] sm:$0xf]
        %v597 = vld [vmem:[#allocation2 + $0xc] sm:$0xf]
        %v598 = vld [vmem:[#allocation2 + $0x10] sm:$0xf]
        %v599 = vld [vmem:[#allocation2 + $0x14] sm:$0xf]
        %v600 = vld [vmem:[#allocation2 + $0x18] sm:$0xf]
        %v601 = vld [vmem:[#allocation2 + $0x1c] sm:$0xf]
        %v602 = vld [vmem:[#allocation2 + $0x20] sm:$0xf]
        %v603 = vld [vmem:[#allocation2 + $0x24] sm:$0xf]
        %v604 = vld [vmem:[#allocation2 + $0x28] sm:$0xf]
        %v605 = vld [vmem:[#allocation2 + $0x2c] sm:$0xf]
        %v606 = vld [vmem:[#allocation2 + $0x30] sm:$0xf]
        %v607 = vld [vmem:[#allocation2 + $0x34] sm:$0xf]
        %v608 = vld [vmem:[#allocation2 + $0x38] sm:$0xf]
        %v609 = vld [vmem:[#allocation2 + $0x3c] sm:$0xf]
        %v610 = vld [vmem:[#allocation2 + $0x40] sm:$0xf]
        %v611 = vld [vmem:[#allocation2 + $0x44] sm:$0xf]
        %v612 = vld [vmem:[#allocation2 + $0x48] sm:$0xf]
        %v613 = vld [vmem:[#allocation2 + $0x4c] sm:$0xf]
        %v614 = vld [vmem:[#allocation2 + $0x50] sm:$0xf]
        %v615 = vld [vmem:[#allocation2 + $0x54] sm:$0xf]
        %v616 = vld [vmem:[#allocation2 + $0x58] sm:$0xf]
        %v617 = vld [vmem:[#allocation2 + $0x5c] sm:$0xf]
        %v618 = vld [vmem:[#allocation2 + $0x60] sm:$0xf]
        %v619 = vld [vmem:[#allocation2 + $0x64] sm:$0xf]
        %v620 = vld [vmem:[#allocation2 + $0x68] sm:$0x1]
        %s621 = scalar_lea.vmem %s173, 2
        %v622 = vld [vmem:[%s621] sm:$0x3]
        %v650 = vunpack.c.l.b16 %v594
        %v651 = vunpack.c.l.b16 %v595
        %v652 = vunpack.c.l.b16 %v596
        %v653 = vunpack.c.l.b16 %v597
        %v654 = vunpack.c.l.b16 %v598
        %v655 = vunpack.c.l.b16 %v599
        %v656 = vunpack.c.l.b16 %v600
        %v657 = vunpack.c.l.b16 %v601
        %v658 = vunpack.c.l.b16 %v602
        %v659 = vunpack.c.l.b16 %v603
        %v660 = vunpack.c.l.b16 %v604
        %v661 = vunpack.c.l.b16 %v605
        %v662 = vunpack.c.l.b16 %v606
        %v663 = vunpack.c.l.b16 %v607
        %v664 = vunpack.c.l.b16 %v608
        %v665 = vunpack.c.l.b16 %v609
        %v666 = vunpack.c.l.b16 %v610
        %v667 = vunpack.c.l.b16 %v611
        %v668 = vunpack.c.l.b16 %v612
        %v669 = vunpack.c.l.b16 %v613
        %v670 = vunpack.c.l.b16 %v614
        %v671 = vunpack.c.l.b16 %v615
        %v672 = vunpack.c.l.b16 %v616
        %v673 = vunpack.c.l.b16 %v617
        %v674 = vunpack.c.l.b16 %v618
        %v675 = vunpack.c.l.b16 %v619
        %v676 = vunpack.c.l.b16 %v620
        %v677 = vpack.c.b16 %v651, %v650
        %v678 = vpack.c.b16 %v653, %v652
        %v679 = vpack.c.b16 %v655, %v654
        %v680 = vpack.c.b16 %v657, %v656
        %v681 = vpack.c.b16 %v659, %v658
        %v682 = vpack.c.b16 %v661, %v660
        %v683 = vpack.c.b16 %v663, %v662
        %v684 = vpack.c.b16 %v665, %v664
        %v685 = vpack.c.b16 %v667, %v666
        %v686 = vpack.c.b16 %v669, %v668
        %v687 = vpack.c.b16 %v671, %v670
        %v688 = vpack.c.b16 %v673, %v672
        %v689 = vpack.c.b16 %v675, %v674
        %v690 = vpack.c.b16 %v676, %v676
        %vm691 = vsmask.f32 7424
        %v693 = vshrl.u32 %v677, 16
        %v695 = vshll.u32 %v677, 16
        %v697 = vrot.slane %v695, 1
        %v698 = vor.u32 %v693, %v697
        %v700 = vshll.u32 %v678, 16
        %v702 = vrot.slane %v700, 1
        %v703 = vsel %vm691, %v698, %v702
        %v704 = vshrl.u32 %v678, 16
        %v706 = vor.u32 %v704, %v702
        %v708 = vshll.u32 %v679, 16
        %v710 = vrot.slane %v708, 1
        %v711 = vsel %vm691, %v706, %v710
        %v712 = vshrl.u32 %v679, 16
        %v714 = vor.u32 %v712, %v710
        %v716 = vshll.u32 %v680, 16
        %v718 = vrot.slane %v716, 1
        %v719 = vsel %vm691, %v714, %v718
        %v720 = vshrl.u32 %v680, 16
        %v722 = vor.u32 %v720, %v718
        %v724 = vshll.u32 %v681, 16
        %v726 = vrot.slane %v724, 1
        %v727 = vsel %vm691, %v722, %v726
        %v728 = vshrl.u32 %v681, 16
        %v730 = vor.u32 %v728, %v726
        %v732 = vshll.u32 %v682, 16
        %v734 = vrot.slane %v732, 1
        %v735 = vsel %vm691, %v730, %v734
        %v736 = vshrl.u32 %v682, 16
        %v738 = vor.u32 %v736, %v734
        %v740 = vshll.u32 %v683, 16
        %v742 = vrot.slane %v740, 1
        %v743 = vsel %vm691, %v738, %v742
        %v744 = vshrl.u32 %v683, 16
        %v746 = vor.u32 %v744, %v742
        %v748 = vshll.u32 %v684, 16
        %v750 = vrot.slane %v748, 1
        %v751 = vsel %vm691, %v746, %v750
        %v752 = vshrl.u32 %v684, 16
        %v754 = vor.u32 %v752, %v750
        %v756 = vshll.u32 %v685, 16
        %v758 = vrot.slane %v756, 1
        %v759 = vsel %vm691, %v754, %v758
        %v760 = vshrl.u32 %v685, 16
        %v762 = vor.u32 %v760, %v758
        %v764 = vshll.u32 %v686, 16
        %v766 = vrot.slane %v764, 1
        %v767 = vsel %vm691, %v762, %v766
        %v768 = vshrl.u32 %v686, 16
        %v770 = vor.u32 %v768, %v766
        %v772 = vshll.u32 %v687, 16
        %v774 = vrot.slane %v772, 1
        %v775 = vsel %vm691, %v770, %v774
        %v776 = vshrl.u32 %v687, 16
        %v778 = vor.u32 %v776, %v774
        %v780 = vshll.u32 %v688, 16
        %v782 = vrot.slane %v780, 1
        %v783 = vsel %vm691, %v778, %v782
        %v784 = vshrl.u32 %v688, 16
        %v786 = vor.u32 %v784, %v782
        %v788 = vshll.u32 %v689, 16
        %v790 = vrot.slane %v788, 1
        %v791 = vsel %vm691, %v786, %v790
        %v792 = vshrl.u32 %v689, 16
        %v794 = vor.u32 %v792, %v790
        %v796 = vshll.u32 %v690, 16
        %v798 = vrot.slane %v796, 1
        %v799 = vsel %vm691, %v794, %v798
        %v800 = vshrl.u32 %v690, 16
        %v803 = vsel %vm374, %v703, 0
        %v806 = vsel %vm374, %v711, 0
        %v809 = vsel %vm374, %v719, 0
        %v812 = vsel %vm374, %v727, 0
        %v815 = vsel %vm374, %v735, 0
        %v818 = vsel %vm374, %v743, 0
        %v821 = vsel %vm374, %v751, 0
        %v824 = vsel %vm374, %v759, 0
        %v827 = vsel %vm374, %v767, 0
        %v830 = vsel %vm374, %v775, 0
        %v833 = vsel %vm374, %v783, 0
        %v836 = vsel %vm374, %v791, 0
        %v839 = vsel %vm374, %v799, 0
        %v842 = vsel %vm374, %v800, 0
        %v845 = vsel %vm417, %v622, 0
        %847 = vmatprep.subr.bf16.mxu0 0
        %848 = vmatpush1.bf16.msra.mxu0 %v845
        %849 = vmatprep.subr.bf16.mxu0 0
        %850 = vmatpush1.bf16.msra.mxu0 0
        %851 = vmatprep.subr.bf16.mxu0 0
        %852 = vmatpush1.bf16.msra.mxu0 0
        %853 = vmatprep.subr.bf16.mxu0 0
        %854 = vmatpush1.bf16.msra.mxu0 0
        %855 = vmatprep.subr.bf16.mxu0 0
        %856 = vmatpush1.bf16.msra.mxu0 0
        %857 = vmatprep.subr.bf16.mxu0 0
        %858 = vmatpush1.bf16.msra.mxu0 0
        %859 = vmatprep.subr.bf16.mxu0 0
        %860 = vmatpush1.bf16.msra.mxu0 0
        %861 = vmatprep.subr.bf16.mxu0 0
        %862 = vmatpush1.bf16.msra.mxu0 0
        %863 = vmatprep.subr.bf16.mxu0 0
        %864 = vmatpush1.bf16.msra.mxu0 0
        %865 = vmatprep.subr.bf16.mxu0 0
        %866 = vmatpush1.bf16.msra.mxu0 0
        %867 = vmatprep.subr.bf16.mxu0 0
        %868 = vmatpush1.bf16.msra.mxu0 0
        %869 = vmatprep.subr.bf16.mxu0 0
        %870 = vmatpush1.bf16.msra.mxu0 0
        %871 = vmatprep.subr.bf16.mxu0 0
        %872 = vmatpush1.bf16.msra.mxu0 0
        %873 = vmatprep.subr.bf16.mxu0 0
        %874 = vmatpush1.bf16.msra.mxu0 0
        %875 = vmatprep.subr.bf16.mxu0 0
        %876 = vmatpush1.bf16.msra.mxu0 0
        %877 = vmatprep.subr.bf16.mxu0 0
        %878 = vmatpush1.bf16.msra.mxu0 0
        %879 = vmatprep.mubr.bf16.mxu0 0
        %880 = vmatmul.mubr.bf16.gmra.mrb[0].mxu0 %v803
        %v881 = vpop.f32.mrb[0].mxu0
        %v882 = vadd.f32 0.0, %v881
        %v883 = vpop.f32.mrb[0].mxu0
        %v884 = vpop.f32.mrb[0].mxu0
        %v885 = vadd.f32 0.0, %v884
        %v886 = vpop.f32.mrb[0].mxu0
        %887 = vmatprep.mubr.bf16.mxu0 0
        %888 = vmatmul.mubr.bf16.gmra.mrb[0].mxu0 %v806
        %v889 = vpop.f32.mrb[0].mxu0
        %v890 = vadd.f32 0.0, %v889
        %v891 = vpop.f32.mrb[0].mxu0
        %v892 = vpop.f32.mrb[0].mxu0
        %v893 = vadd.f32 0.0, %v892
        %v894 = vpop.f32.mrb[0].mxu0
        %895 = vmatprep.mubr.bf16.mxu0 0
        %896 = vmatmul.mubr.bf16.gmra.mrb[0].mxu0 %v809
        %v897 = vpop.f32.mrb[0].mxu0
        %v898 = vadd.f32 0.0, %v897
        %v899 = vpop.f32.mrb[0].mxu0
        %v900 = vpop.f32.mrb[0].mxu0
        %v901 = vadd.f32 0.0, %v900
        %v902 = vpop.f32.mrb[0].mxu0
        %903 = vmatprep.mubr.bf16.mxu0 0
        %904 = vmatmul.mubr.bf16.gmra.mrb[0].mxu0 %v812
        %v905 = vpop.f32.mrb[0].mxu0
        %v906 = vadd.f32 0.0, %v905
        %v907 = vpop.f32.mrb[0].mxu0
        %v908 = vpop.f32.mrb[0].mxu0
        %v909 = vadd.f32 0.0, %v908
        %v910 = vpop.f32.mrb[0].mxu0
        %911 = vmatprep.mubr.bf16.mxu0 0
        %912 = vmatmul.mubr.bf16.gmra.mrb[0].mxu0 %v815
        %v913 = vpop.f32.mrb[0].mxu0
        %v914 = vadd.f32 0.0, %v913
        %v915 = vpop.f32.mrb[0].mxu0
        %v916 = vpop.f32.mrb[0].mxu0
        %v917 = vadd.f32 0.0, %v916
        %v918 = vpop.f32.mrb[0].mxu0
        %919 = vmatprep.mubr.bf16.mxu0 0
        %920 = vmatmul.mubr.bf16.gmra.mrb[0].mxu0 %v818
        %v921 = vpop.f32.mrb[0].mxu0
        %v922 = vadd.f32 0.0, %v921
        %v923 = vpop.f32.mrb[0].mxu0
        %v924 = vpop.f32.mrb[0].mxu0
        %v925 = vadd.f32 0.0, %v924
        %v926 = vpop.f32.mrb[0].mxu0
        %927 = vmatprep.mubr.bf16.mxu0 0
        %928 = vmatmul.mubr.bf16.gmra.mrb[0].mxu0 %v821
        %v929 = vpop.f32.mrb[0].mxu0
        %v930 = vadd.f32 0.0, %v929
        %v931 = vpop.f32.mrb[0].mxu0
        %v932 = vpop.f32.mrb[0].mxu0
        %v933 = vadd.f32 0.0, %v932
        %v934 = vpop.f32.mrb[0].mxu0
        %935 = vmatprep.mubr.bf16.mxu0 0
        %936 = vmatmul.mubr.bf16.gmra.mrb[0].mxu0 %v824
        %v937 = vpop.f32.mrb[0].mxu0
        %v938 = vadd.f32 0.0, %v937
        %v939 = vpop.f32.mrb[0].mxu0
        %v940 = vpop.f32.mrb[0].mxu0
        %v941 = vadd.f32 0.0, %v940
        %v942 = vpop.f32.mrb[0].mxu0
        %943 = vmatprep.mubr.bf16.mxu0 0
        %944 = vmatmul.mubr.bf16.gmra.mrb[0].mxu0 %v827
        %v945 = vpop.f32.mrb[0].mxu0
        %v946 = vadd.f32 0.0, %v945
        %v947 = vpop.f32.mrb[0].mxu0
        %v948 = vpop.f32.mrb[0].mxu0
        %v949 = vadd.f32 0.0, %v948
        %v950 = vpop.f32.mrb[0].mxu0
        %951 = vmatprep.mubr.bf16.mxu0 0
        %952 = vmatmul.mubr.bf16.gmra.mrb[0].mxu0 %v830
        %v953 = vpop.f32.mrb[0].mxu0
        %v954 = vadd.f32 0.0, %v953
        %v955 = vpop.f32.mrb[0].mxu0
        %v956 = vpop.f32.mrb[0].mxu0
        %v957 = vadd.f32 0.0, %v956
        %v958 = vpop.f32.mrb[0].mxu0
        %959 = vmatprep.mubr.bf16.mxu0 0
        %960 = vmatmul.mubr.bf16.gmra.mrb[0].mxu0 %v833
        %v961 = vpop.f32.mrb[0].mxu0
        %v962 = vadd.f32 0.0, %v961
        %v963 = vpop.f32.mrb[0].mxu0
        %v964 = vpop.f32.mrb[0].mxu0
        %v965 = vadd.f32 0.0, %v964
        %v966 = vpop.f32.mrb[0].mxu0
        %967 = vmatprep.mubr.bf16.mxu0 0
        %968 = vmatmul.mubr.bf16.gmra.mrb[0].mxu0 %v836
        %v969 = vpop.f32.mrb[0].mxu0
        %v970 = vadd.f32 0.0, %v969
        %v971 = vpop.f32.mrb[0].mxu0
        %v972 = vpop.f32.mrb[0].mxu0
        %v973 = vadd.f32 0.0, %v972
        %v974 = vpop.f32.mrb[0].mxu0
        %975 = vmatprep.mubr.bf16.mxu0 0
        %976 = vmatmul.mubr.bf16.gmra.mrb[0].mxu0 %v839
        %v977 = vpop.f32.mrb[0].mxu0
        %v978 = vadd.f32 0.0, %v977
        %v979 = vpop.f32.mrb[0].mxu0
        %v980 = vpop.f32.mrb[0].mxu0
        %v981 = vadd.f32 0.0, %v980
        %v982 = vpop.f32.mrb[0].mxu0
        %983 = vmatprep.mubr.bf16.mxu0 0
        %984 = vmatmul.mubr.bf16.gmra.mrb[0].mxu0 %v842
        %v985 = vpop.f32.mrb[0].mxu0
        %v986 = vadd.f32 0.0, %v985
        %v987 = vpop.f32.mrb[0].mxu0
        %v988 = vpop.f32.mrb[0].mxu0
        %v989 = vpop.f32.mrb[0].mxu0
        %990 = vdwg.mxu0
        %v991 = vld [vmem:[#allocation4 + $0x8] sm:$0xff]
        %v992 = vld [vmem:[#allocation4 + $0x10] sm:$0xff]
        %v993 = vld [vmem:[#allocation4 + $0x18] sm:$0xff]
        %v994 = vld [vmem:[#allocation4 + $0x20] sm:$0xff]
        %v995 = vld [vmem:[#allocation4 + $0x28] sm:$0xff]
        %v996 = vld [vmem:[#allocation4 + $0x30] sm:$0xff]
        %v997 = vld [vmem:[#allocation4 + $0x38] sm:$0xff]
        %v998 = vld [vmem:[#allocation4 + $0x40] sm:$0xff]
        %v999 = vld [vmem:[#allocation4 + $0x48] sm:$0xff]
        %v1000 = vld [vmem:[#allocation4 + $0x50] sm:$0xff]
        %v1001 = vld [vmem:[#allocation4 + $0x58] sm:$0xff]
        %v1002 = vld [vmem:[#allocation4 + $0x60] sm:$0xff]
        %v1003 = vld [vmem:[#allocation4 + $0x68] sm:$0xff]
        %v1004 = vld [vmem:[#allocation4 + $0x70] sm:$0xff]
        %v1005 = vld [vmem:[#allocation4 + $0x78] sm:$0xff]
        %v1006 = vld [vmem:[#allocation4 + $0x80] sm:$0xff]
        %v1007 = vld [vmem:[#allocation4 + $0x88] sm:$0xff]
        %v1008 = vld [vmem:[#allocation4 + $0x90] sm:$0xff]
        %v1009 = vld [vmem:[#allocation4 + $0x98] sm:$0xff]
        %v1010 = vld [vmem:[#allocation4 + $0xa0] sm:$0xff]
        %v1011 = vld [vmem:[#allocation4 + $0xa8] sm:$0xff]
        %v1012 = vld [vmem:[#allocation4 + $0xb0] sm:$0xff]
        %v1013 = vld [vmem:[#allocation4 + $0xb8] sm:$0xff]
        %v1014 = vld [vmem:[#allocation4 + $0xc0] sm:$0xff]
        %v1015 = vld [vmem:[#allocation4 + $0xc8] sm:$0xff]
        %v1016 = vld [vmem:[#allocation4 + $0xd0] sm:$0xff]
        %v1017 = vld [vmem:[#allocation4 + $0xd8] sm:$0x1]
        %v1018 = vadd.f32 %v991, %v882
        %v1019 = vadd.f32 %v992, %v885
        %v1020 = vadd.f32 %v993, %v890
        %v1021 = vadd.f32 %v994, %v893
        %v1022 = vadd.f32 %v995, %v898
        %v1023 = vadd.f32 %v996, %v901
        %v1024 = vadd.f32 %v997, %v906
        %v1025 = vadd.f32 %v998, %v909
        %v1026 = vadd.f32 %v999, %v914
        %v1027 = vadd.f32 %v1000, %v917
        %v1028 = vadd.f32 %v1001, %v922
        %v1029 = vadd.f32 %v1002, %v925
        %v1030 = vadd.f32 %v1003, %v930
        %v1031 = vadd.f32 %v1004, %v933
        %v1032 = vadd.f32 %v1005, %v938
        %v1033 = vadd.f32 %v1006, %v941
        %v1034 = vadd.f32 %v1007, %v946
        %v1035 = vadd.f32 %v1008, %v949
        %v1036 = vadd.f32 %v1009, %v954
        %v1037 = vadd.f32 %v1010, %v957
        %v1038 = vadd.f32 %v1011, %v962
        %v1039 = vadd.f32 %v1012, %v965
        %v1040 = vadd.f32 %v1013, %v970
        %v1041 = vadd.f32 %v1014, %v973
        %v1042 = vadd.f32 %v1015, %v978
        %v1043 = vadd.f32 %v1016, %v981
        %v1044 = vadd.f32 %v1017, %v986
        %1045 = vst.msk [vmem:[#allocation4 + $0x8] sm:$0xff] %vm565, %v1018
        %1046 = vst.msk [vmem:[#allocation4 + $0x10] sm:$0xff] %vm565, %v1019
        %1047 = vst.msk [vmem:[#allocation4 + $0x18] sm:$0xff] %vm565, %v1020
        %1048 = vst.msk [vmem:[#allocation4 + $0x20] sm:$0xff] %vm565, %v1021
        %1049 = vst.msk [vmem:[#allocation4 + $0x28] sm:$0xff] %vm565, %v1022
        %1050 = vst.msk [vmem:[#allocation4 + $0x30] sm:$0xff] %vm565, %v1023
        %1051 = vst.msk [vmem:[#allocation4 + $0x38] sm:$0xff] %vm565, %v1024
        %1052 = vst.msk [vmem:[#allocation4 + $0x40] sm:$0xff] %vm565, %v1025
        %1053 = vst.msk [vmem:[#allocation4 + $0x48] sm:$0xff] %vm565, %v1026
        %1054 = vst.msk [vmem:[#allocation4 + $0x50] sm:$0xff] %vm565, %v1027
        %1055 = vst.msk [vmem:[#allocation4 + $0x58] sm:$0xff] %vm565, %v1028
        %1056 = vst.msk [vmem:[#allocation4 + $0x60] sm:$0xff] %vm565, %v1029
        %1057 = vst.msk [vmem:[#allocation4 + $0x68] sm:$0xff] %vm565, %v1030
        %1058 = vst.msk [vmem:[#allocation4 + $0x70] sm:$0xff] %vm565, %v1031
        %1059 = vst.msk [vmem:[#allocation4 + $0x78] sm:$0xff] %vm565, %v1032
        %1060 = vst.msk [vmem:[#allocation4 + $0x80] sm:$0xff] %vm565, %v1033
        %1061 = vst.msk [vmem:[#allocation4 + $0x88] sm:$0xff] %vm565, %v1034
        %1062 = vst.msk [vmem:[#allocation4 + $0x90] sm:$0xff] %vm565, %v1035
        %1063 = vst.msk [vmem:[#allocation4 + $0x98] sm:$0xff] %vm565, %v1036
        %1064 = vst.msk [vmem:[#allocation4 + $0xa0] sm:$0xff] %vm565, %v1037
        %1065 = vst.msk [vmem:[#allocation4 + $0xa8] sm:$0xff] %vm565, %v1038
        %1066 = vst.msk [vmem:[#allocation4 + $0xb0] sm:$0xff] %vm565, %v1039
        %1067 = vst.msk [vmem:[#allocation4 + $0xb8] sm:$0xff] %vm565, %v1040
        %1068 = vst.msk [vmem:[#allocation4 + $0xc0] sm:$0xff] %vm565, %v1041
        %1069 = vst.msk [vmem:[#allocation4 + $0xc8] sm:$0xff] %vm565, %v1042
        %1070 = vst.msk [vmem:[#allocation4 + $0xd0] sm:$0xff] %vm565, %v1043
        %1071 = vst.msk [vmem:[#allocation4 + $0xd8] sm:$0x1] %vm592, %v1044
        %v1072 = vld [vmem:[#allocation2] sm:$0xe]
        %v1073 = vld [vmem:[#allocation2 + $0x4] sm:$0xf]
        %v1074 = vld [vmem:[#allocation2 + $0x8] sm:$0xf]
        %v1075 = vld [vmem:[#allocation2 + $0xc] sm:$0xf]
        %v1076 = vld [vmem:[#allocation2 + $0x10] sm:$0xf]
        %v1077 = vld [vmem:[#allocation2 + $0x14] sm:$0xf]
        %v1078 = vld [vmem:[#allocation2 + $0x18] sm:$0xf]
        %v1079 = vld [vmem:[#allocation2 + $0x1c] sm:$0xf]
        %v1080 = vld [vmem:[#allocation2 + $0x20] sm:$0xf]
        %v1081 = vld [vmem:[#allocation2 + $0x24] sm:$0xf]
        %v1082 = vld [vmem:[#allocation2 + $0x28] sm:$0xf]
        %v1083 = vld [vmem:[#allocation2 + $0x2c] sm:$0xf]
        %v1084 = vld [vmem:[#allocation2 + $0x30] sm:$0xf]
        %v1085 = vld [vmem:[#allocation2 + $0x34] sm:$0xf]
        %v1086 = vld [vmem:[#allocation2 + $0x38] sm:$0xf]
        %v1087 = vld [vmem:[#allocation2 + $0x3c] sm:$0xf]
        %v1088 = vld [vmem:[#allocation2 + $0x40] sm:$0xf]
        %v1089 = vld [vmem:[#allocation2 + $0x44] sm:$0xf]
        %v1090 = vld [vmem:[#allocation2 + $0x48] sm:$0xf]
        %v1091 = vld [vmem:[#allocation2 + $0x4c] sm:$0xf]
        %v1092 = vld [vmem:[#allocation2 + $0x50] sm:$0xf]
        %v1093 = vld [vmem:[#allocation2 + $0x54] sm:$0xf]
        %v1094 = vld [vmem:[#allocation2 + $0x58] sm:$0xf]
        %v1095 = vld [vmem:[#allocation2 + $0x5c] sm:$0xf]
        %v1096 = vld [vmem:[#allocation2 + $0x60] sm:$0xf]
        %v1097 = vld [vmem:[#allocation2 + $0x64] sm:$0xf]
        %v1098 = vld [vmem:[#allocation2 + $0x68] sm:$0x3]
        %s1099 = scalar_lea.vmem %s173, 4
        %v1100 = vld [vmem:[%s1099] sm:$0x3]
        %v1128 = vunpack.c.l.b16 %v1072
        %v1129 = vunpack.c.l.b16 %v1073
        %v1130 = vunpack.c.l.b16 %v1074
        %v1131 = vunpack.c.l.b16 %v1075
        %v1132 = vunpack.c.l.b16 %v1076
        %v1133 = vunpack.c.l.b16 %v1077
        %v1134 = vunpack.c.l.b16 %v1078
        %v1135 = vunpack.c.l.b16 %v1079
        %v1136 = vunpack.c.l.b16 %v1080
        %v1137 = vunpack.c.l.b16 %v1081
        %v1138 = vunpack.c.l.b16 %v1082
        %v1139 = vunpack.c.l.b16 %v1083
        %v1140 = vunpack.c.l.b16 %v1084
        %v1141 = vunpack.c.l.b16 %v1085
        %v1142 = vunpack.c.l.b16 %v1086
        %v1143 = vunpack.c.l.b16 %v1087
        %v1144 = vunpack.c.l.b16 %v1088
        %v1145 = vunpack.c.l.b16 %v1089
        %v1146 = vunpack.c.l.b16 %v1090
        %v1147 = vunpack.c.l.b16 %v1091
        %v1148 = vunpack.c.l.b16 %v1092
        %v1149 = vunpack.c.l.b16 %v1093
        %v1150 = vunpack.c.l.b16 %v1094
        %v1151 = vunpack.c.l.b16 %v1095
        %v1152 = vunpack.c.l.b16 %v1096
        %v1153 = vunpack.c.l.b16 %v1097
        %v1154 = vunpack.c.l.b16 %v1098
        %v1155 = vpack.c.b16 %v1129, %v1128
        %v1156 = vpack.c.b16 %v1131, %v1130
        %v1157 = vpack.c.b16 %v1133, %v1132
        %v1158 = vpack.c.b16 %v1135, %v1134
        %v1159 = vpack.c.b16 %v1137, %v1136
        %v1160 = vpack.c.b16 %v1139, %v1138
        %v1161 = vpack.c.b16 %v1141, %v1140
        %v1162 = vpack.c.b16 %v1143, %v1142
        %v1163 = vpack.c.b16 %v1145, %v1144
        %v1164 = vpack.c.b16 %v1147, %v1146
        %v1165 = vpack.c.b16 %v1149, %v1148
        %v1166 = vpack.c.b16 %v1151, %v1150
        %v1167 = vpack.c.b16 %v1153, %v1152
        %v1168 = vpack.c.b16 %v1154, %v1154
        %vm1169 = vcmask 1046528
        %v1170 = vrot.slane %v1155, 1
        %v1171 = vrot.slane %v1156, 1
        %v1172 = vsel %vm1169, %v1170, %v1171
        %v1173 = vrot.slane %v1157, 1
        %v1174 = vsel %vm1169, %v1171, %v1173
        %v1175 = vrot.slane %v1158, 1
        %v1176 = vsel %vm1169, %v1173, %v1175
        %v1177 = vrot.slane %v1159, 1
        %v1178 = vsel %vm1169, %v1175, %v1177
        %v1179 = vrot.slane %v1160, 1
        %v1180 = vsel %vm1169, %v1177, %v1179
        %v1181 = vrot.slane %v1161, 1
        %v1182 = vsel %vm1169, %v1179, %v1181
        %v1183 = vrot.slane %v1162, 1
        %v1184 = vsel %vm1169, %v1181, %v1183
        %v1185 = vrot.slane %v1163, 1
        %v1186 = vsel %vm1169, %v1183, %v1185
        %v1187 = vrot.slane %v1164, 1
        %v1188 = vsel %vm1169, %v1185, %v1187
        %v1189 = vrot.slane %v1165, 1
        %v1190 = vsel %vm1169, %v1187, %v1189
        %v1191 = vrot.slane %v1166, 1
        %v1192 = vsel %vm1169, %v1189, %v1191
        %v1193 = vrot.slane %v1167, 1
        %v1194 = vsel %vm1169, %v1191, %v1193
        %v1195 = vrot.slane %v1168, 1
        %v1196 = vsel %vm1169, %v1193, %v1195
        %v1198 = vsel %vm374, %v1172, 0
        %v1201 = vsel %vm374, %v1174, 0
        %v1204 = vsel %vm374, %v1176, 0
        %v1207 = vsel %vm374, %v1178, 0
        %v1210 = vsel %vm374, %v1180, 0
        %v1213 = vsel %vm374, %v1182, 0
        %v1216 = vsel %vm374, %v1184, 0
        %v1219 = vsel %vm374, %v1186, 0
        %v1222 = vsel %vm374, %v1188, 0
        %v1225 = vsel %vm374, %v1190, 0
        %v1228 = vsel %vm374, %v1192, 0
        %v1231 = vsel %vm374, %v1194, 0
        %v1234 = vsel %vm374, %v1196, 0
        %v1237 = vsel %vm374, %v1195, 0
        %v1240 = vsel %vm417, %v1100, 0
        %1242 = vmatprep.subr.bf16.mxu0 0
        %1243 = vmatpush1.bf16.msra.mxu0 %v1240
        %1244 = vmatprep.subr.bf16.mxu0 0
        %1245 = vmatpush1.bf16.msra.mxu0 0
        %1246 = vmatprep.subr.bf16.mxu0 0
        %1247 = vmatpush1.bf16.msra.mxu0 0
        %1248 = vmatprep.subr.bf16.mxu0 0
        %1249 = vmatpush1.bf16.msra.mxu0 0
        %1250 = vmatprep.subr.bf16.mxu0 0
        %1251 = vmatpush1.bf16.msra.mxu0 0
        %1252 = vmatprep.subr.bf16.mxu0 0
        %1253 = vmatpush1.bf16.msra.mxu0 0
        %1254 = vmatprep.subr.bf16.mxu0 0
        %1255 = vmatpush1.bf16.msra.mxu0 0
        %1256 = vmatprep.subr.bf16.mxu0 0
        %1257 = vmatpush1.bf16.msra.mxu0 0
        %1258 = vmatprep.subr.bf16.mxu0 0
        %1259 = vmatpush1.bf16.msra.mxu0 0
        %1260 = vmatprep.subr.bf16.mxu0 0
        %1261 = vmatpush1.bf16.msra.mxu0 0
        %1262 = vmatprep.subr.bf16.mxu0 0
        %1263 = vmatpush1.bf16.msra.mxu0 0
        %1264 = vmatprep.subr.bf16.mxu0 0
        %1265 = vmatpush1.bf16.msra.mxu0 0
        %1266 = vmatprep.subr.bf16.mxu0 0
        %1267 = vmatpush1.bf16.msra.mxu0 0
        %1268 = vmatprep.subr.bf16.mxu0 0
        %1269 = vmatpush1.bf16.msra.mxu0 0
        %1270 = vmatprep.subr.bf16.mxu0 0
        %1271 = vmatpush1.bf16.msra.mxu0 0
        %1272 = vmatprep.subr.bf16.mxu0 0
        %1273 = vmatpush1.bf16.msra.mxu0 0
        %1274 = vmatprep.mubr.bf16.mxu0 0
        %1275 = vmatmul.mubr.bf16.gmra.mrb[0].mxu0 %v1198
        %v1276 = vpop.f32.mrb[0].mxu0
        %v1277 = vadd.f32 0.0, %v1276
        %v1278 = vpop.f32.mrb[0].mxu0
        %v1279 = vpop.f32.mrb[0].mxu0
        %v1280 = vadd.f32 0.0, %v1279
        %v1281 = vpop.f32.mrb[0].mxu0
        %1282 = vmatprep.mubr.bf16.mxu0 0
        %1283 = vmatmul.mubr.bf16.gmra.mrb[0].mxu0 %v1201
        %v1284 = vpop.f32.mrb[0].mxu0
        %v1285 = vadd.f32 0.0, %v1284
        %v1286 = vpop.f32.mrb[0].mxu0
        %v1287 = vpop.f32.mrb[0].mxu0
        %v1288 = vadd.f32 0.0, %v1287
        %v1289 = vpop.f32.mrb[0].mxu0
        %1290 = vmatprep.mubr.bf16.mxu0 0
        %1291 = vmatmul.mubr.bf16.gmra.mrb[0].mxu0 %v1204
        %v1292 = vpop.f32.mrb[0].mxu0
        %v1293 = vadd.f32 0.0, %v1292
        %v1294 = vpop.f32.mrb[0].mxu0
        %v1295 = vpop.f32.mrb[0].mxu0
        %v1296 = vadd.f32 0.0, %v1295
        %v1297 = vpop.f32.mrb[0].mxu0
        %1298 = vmatprep.mubr.bf16.mxu0 0
        %1299 = vmatmul.mubr.bf16.gmra.mrb[0].mxu0 %v1207
        %v1300 = vpop.f32.mrb[0].mxu0
        %v1301 = vadd.f32 0.0, %v1300
        %v1302 = vpop.f32.mrb[0].mxu0
        %v1303 = vpop.f32.mrb[0].mxu0
        %v1304 = vadd.f32 0.0, %v1303
        %v1305 = vpop.f32.mrb[0].mxu0
        %1306 = vmatprep.mubr.bf16.mxu0 0
        %1307 = vmatmul.mubr.bf16.gmra.mrb[0].mxu0 %v1210
        %v1308 = vpop.f32.mrb[0].mxu0
        %v1309 = vadd.f32 0.0, %v1308
        %v1310 = vpop.f32.mrb[0].mxu0
        %v1311 = vpop.f32.mrb[0].mxu0
        %v1312 = vadd.f32 0.0, %v1311
        %v1313 = vpop.f32.mrb[0].mxu0
        %1314 = vmatprep.mubr.bf16.mxu0 0
        %1315 = vmatmul.mubr.bf16.gmra.mrb[0].mxu0 %v1213
        %v1316 = vpop.f32.mrb[0].mxu0
        %v1317 = vadd.f32 0.0, %v1316
        %v1318 = vpop.f32.mrb[0].mxu0
        %v1319 = vpop.f32.mrb[0].mxu0
        %v1320 = vadd.f32 0.0, %v1319
        %v1321 = vpop.f32.mrb[0].mxu0
        %1322 = vmatprep.mubr.bf16.mxu0 0
        %1323 = vmatmul.mubr.bf16.gmra.mrb[0].mxu0 %v1216
        %v1324 = vpop.f32.mrb[0].mxu0
        %v1325 = vadd.f32 0.0, %v1324
        %v1326 = vpop.f32.mrb[0].mxu0
        %v1327 = vpop.f32.mrb[0].mxu0
        %v1328 = vadd.f32 0.0, %v1327
        %v1329 = vpop.f32.mrb[0].mxu0
        %1330 = vmatprep.mubr.bf16.mxu0 0
        %1331 = vmatmul.mubr.bf16.gmra.mrb[0].mxu0 %v1219
        %v1332 = vpop.f32.mrb[0].mxu0
        %v1333 = vadd.f32 0.0, %v1332
        %v1334 = vpop.f32.mrb[0].mxu0
        %v1335 = vpop.f32.mrb[0].mxu0
        %v1336 = vadd.f32 0.0, %v1335
        %v1337 = vpop.f32.mrb[0].mxu0
        %1338 = vmatprep.mubr.bf16.mxu0 0
        %1339 = vmatmul.mubr.bf16.gmra.mrb[0].mxu0 %v1222
        %v1340 = vpop.f32.mrb[0].mxu0
        %v1341 = vadd.f32 0.0, %v1340
        %v1342 = vpop.f32.mrb[0].mxu0
        %v1343 = vpop.f32.mrb[0].mxu0
        %v1344 = vadd.f32 0.0, %v1343
        %v1345 = vpop.f32.mrb[0].mxu0
        %1346 = vmatprep.mubr.bf16.mxu0 0
        %1347 = vmatmul.mubr.bf16.gmra.mrb[0].mxu0 %v1225
        %v1348 = vpop.f32.mrb[0].mxu0
        %v1349 = vadd.f32 0.0, %v1348
        %v1350 = vpop.f32.mrb[0].mxu0
        %v1351 = vpop.f32.mrb[0].mxu0
        %v1352 = vadd.f32 0.0, %v1351
        %v1353 = vpop.f32.mrb[0].mxu0
        %1354 = vmatprep.mubr.bf16.mxu0 0
        %1355 = vmatmul.mubr.bf16.gmra.mrb[0].mxu0 %v1228
        %v1356 = vpop.f32.mrb[0].mxu0
        %v1357 = vadd.f32 0.0, %v1356
        %v1358 = vpop.f32.mrb[0].mxu0
        %v1359 = vpop.f32.mrb[0].mxu0
        %v1360 = vadd.f32 0.0, %v1359
        %v1361 = vpop.f32.mrb[0].mxu0
        %1362 = vmatprep.mubr.bf16.mxu0 0
        %1363 = vmatmul.mubr.bf16.gmra.mrb[0].mxu0 %v1231
        %v1364 = vpop.f32.mrb[0].mxu0
        %v1365 = vadd.f32 0.0, %v1364
        %v1366 = vpop.f32.mrb[0].mxu0
        %v1367 = vpop.f32.mrb[0].mxu0
        %v1368 = vadd.f32 0.0, %v1367
        %v1369 = vpop.f32.mrb[0].mxu0
        %1370 = vmatprep.mubr.bf16.mxu0 0
        %1371 = vmatmul.mubr.bf16.gmra.mrb[0].mxu0 %v1234
        %v1372 = vpop.f32.mrb[0].mxu0
        %v1373 = vadd.f32 0.0, %v1372
        %v1374 = vpop.f32.mrb[0].mxu0
        %v1375 = vpop.f32.mrb[0].mxu0
        %v1376 = vadd.f32 0.0, %v1375
        %v1377 = vpop.f32.mrb[0].mxu0
        %1378 = vmatprep.mubr.bf16.mxu0 0
        %1379 = vmatmul.mubr.bf16.gmra.mrb[0].mxu0 %v1237
        %v1380 = vpop.f32.mrb[0].mxu0
        %v1381 = vadd.f32 0.0, %v1380
        %v1382 = vpop.f32.mrb[0].mxu0
        %v1383 = vpop.f32.mrb[0].mxu0
        %v1384 = vpop.f32.mrb[0].mxu0
        %1385 = vdwg.mxu0
        %v1386 = vld [vmem:[#allocation4 + $0x8] sm:$0xff]
        %v1387 = vld [vmem:[#allocation4 + $0x10] sm:$0xff]
        %v1388 = vld [vmem:[#allocation4 + $0x18] sm:$0xff]
        %v1389 = vld [vmem:[#allocation4 + $0x20] sm:$0xff]
        %v1390 = vld [vmem:[#allocation4 + $0x28] sm:$0xff]
        %v1391 = vld [vmem:[#allocation4 + $0x30] sm:$0xff]
        %v1392 = vld [vmem:[#allocation4 + $0x38] sm:$0xff]
        %v1393 = vld [vmem:[#allocation4 + $0x40] sm:$0xff]
        %v1394 = vld [vmem:[#allocation4 + $0x48] sm:$0xff]
        %v1395 = vld [vmem:[#allocation4 + $0x50] sm:$0xff]
        %v1396 = vld [vmem:[#allocation4 + $0x58] sm:$0xff]
        %v1397 = vld [vmem:[#allocation4 + $0x60] sm:$0xff]
        %v1398 = vld [vmem:[#allocation4 + $0x68] sm:$0xff]
        %v1399 = vld [vmem:[#allocation4 + $0x70] sm:$0xff]
        %v1400 = vld [vmem:[#allocation4 + $0x78] sm:$0xff]
        %v1401 = vld [vmem:[#allocation4 + $0x80] sm:$0xff]
        %v1402 = vld [vmem:[#allocation4 + $0x88] sm:$0xff]
        %v1403 = vld [vmem:[#allocation4 + $0x90] sm:$0xff]
        %v1404 = vld [vmem:[#allocation4 + $0x98] sm:$0xff]
        %v1405 = vld [vmem:[#allocation4 + $0xa0] sm:$0xff]
        %v1406 = vld [vmem:[#allocation4 + $0xa8] sm:$0xff]
        %v1407 = vld [vmem:[#allocation4 + $0xb0] sm:$0xff]
        %v1408 = vld [vmem:[#allocation4 + $0xb8] sm:$0xff]
        %v1409 = vld [vmem:[#allocation4 + $0xc0] sm:$0xff]
        %v1410 = vld [vmem:[#allocation4 + $0xc8] sm:$0xff]
        %v1411 = vld [vmem:[#allocation4 + $0xd0] sm:$0xff]
        %v1412 = vld [vmem:[#allocation4 + $0xd8] sm:$0x1]
        %v1413 = vadd.f32 %v1386, %v1277
        %v1414 = vadd.f32 %v1387, %v1280
        %v1415 = vadd.f32 %v1388, %v1285
        %v1416 = vadd.f32 %v1389, %v1288
        %v1417 = vadd.f32 %v1390, %v1293
        %v1418 = vadd.f32 %v1391, %v1296
        %v1419 = vadd.f32 %v1392, %v1301
        %v1420 = vadd.f32 %v1393, %v1304
        %v1421 = vadd.f32 %v1394, %v1309
        %v1422 = vadd.f32 %v1395, %v1312
        %v1423 = vadd.f32 %v1396, %v1317
        %v1424 = vadd.f32 %v1397, %v1320
        %v1425 = vadd.f32 %v1398, %v1325
        %v1426 = vadd.f32 %v1399, %v1328
        %v1427 = vadd.f32 %v1400, %v1333
        %v1428 = vadd.f32 %v1401, %v1336
        %v1429 = vadd.f32 %v1402, %v1341
        %v1430 = vadd.f32 %v1403, %v1344
        %v1431 = vadd.f32 %v1404, %v1349
        %v1432 = vadd.f32 %v1405, %v1352
        %v1433 = vadd.f32 %v1406, %v1357
        %v1434 = vadd.f32 %v1407, %v1360
        %v1435 = vadd.f32 %v1408, %v1365
        %v1436 = vadd.f32 %v1409, %v1368
        %v1437 = vadd.f32 %v1410, %v1373
        %v1438 = vadd.f32 %v1411, %v1376
        %v1439 = vadd.f32 %v1412, %v1381
        %1440 = vst.msk [vmem:[#allocation4 + $0x8] sm:$0xff] %vm565, %v1413
        %1441 = vst.msk [vmem:[#allocation4 + $0x10] sm:$0xff] %vm565, %v1414
        %1442 = vst.msk [vmem:[#allocation4 + $0x18] sm:$0xff] %vm565, %v1415
        %1443 = vst.msk [vmem:[#allocation4 + $0x20] sm:$0xff] %vm565, %v1416
        %1444 = vst.msk [vmem:[#allocation4 + $0x28] sm:$0xff] %vm565, %v1417
        %1445 = vst.msk [vmem:[#allocation4 + $0x30] sm:$0xff] %vm565, %v1418
        %1446 = vst.msk [vmem:[#allocation4 + $0x38] sm:$0xff] %vm565, %v1419
        %1447 = vst.msk [vmem:[#allocation4 + $0x40] sm:$0xff] %vm565, %v1420
        %1448 = vst.msk [vmem:[#allocation4 + $0x48] sm:$0xff] %vm565, %v1421
        %1449 = vst.msk [vmem:[#allocation4 + $0x50] sm:$0xff] %vm565, %v1422
        %1450 = vst.msk [vmem:[#allocation4 + $0x58] sm:$0xff] %vm565, %v1423
        %1451 = vst.msk [vmem:[#allocation4 + $0x60] sm:$0xff] %vm565, %v1424
        %1452 = vst.msk [vmem:[#allocation4 + $0x68] sm:$0xff] %vm565, %v1425
        %1453 = vst.msk [vmem:[#allocation4 + $0x70] sm:$0xff] %vm565, %v1426
        %1454 = vst.msk [vmem:[#allocation4 + $0x78] sm:$0xff] %vm565, %v1427
        %1455 = vst.msk [vmem:[#allocation4 + $0x80] sm:$0xff] %vm565, %v1428
        %1456 = vst.msk [vmem:[#allocation4 + $0x88] sm:$0xff] %vm565, %v1429
        %1457 = vst.msk [vmem:[#allocation4 + $0x90] sm:$0xff] %vm565, %v1430
        %1458 = vst.msk [vmem:[#allocation4 + $0x98] sm:$0xff] %vm565, %v1431
        %1459 = vst.msk [vmem:[#allocation4 + $0xa0] sm:$0xff] %vm565, %v1432
        %1460 = vst.msk [vmem:[#allocation4 + $0xa8] sm:$0xff] %vm565, %v1433
        %1461 = vst.msk [vmem:[#allocation4 + $0xb0] sm:$0xff] %vm565, %v1434
        %1462 = vst.msk [vmem:[#allocation4 + $0xb8] sm:$0xff] %vm565, %v1435
        %1463 = vst.msk [vmem:[#allocation4 + $0xc0] sm:$0xff] %vm565, %v1436
        %1464 = vst.msk [vmem:[#allocation4 + $0xc8] sm:$0xff] %vm565, %v1437
        %1465 = vst.msk [vmem:[#allocation4 + $0xd0] sm:$0xff] %vm565, %v1438
        %1466 = vst.msk [vmem:[#allocation4 + $0xd8] sm:$0x1] %vm592, %v1439
        %v1467 = vld [vmem:[#allocation2 + $0xc] sm:$0xf]
        %v1468 = vld [vmem:[#allocation2 + $0x10] sm:$0xf]
        %v1469 = vld [vmem:[#allocation2 + $0x14] sm:$0xf]
        %v1470 = vld [vmem:[#allocation2 + $0x18] sm:$0xf]
        %v1471 = vld [vmem:[#allocation2 + $0x1c] sm:$0xf]
        %v1472 = vld [vmem:[#allocation2 + $0x20] sm:$0xf]
        %v1473 = vld [vmem:[#allocation2 + $0x24] sm:$0xf]
        %v1474 = vld [vmem:[#allocation2 + $0x28] sm:$0xf]
        %v1475 = vld [vmem:[#allocation2 + $0x2c] sm:$0xf]
        %v1476 = vld [vmem:[#allocation2 + $0x30] sm:$0xf]
        %v1477 = vld [vmem:[#allocation2 + $0x34] sm:$0xf]
        %v1478 = vld [vmem:[#allocation2 + $0x38] sm:$0xf]
        %v1479 = vld [vmem:[#allocation2 + $0x3c] sm:$0xf]
        %v1480 = vld [vmem:[#allocation2 + $0x40] sm:$0xf]
        %v1481 = vld [vmem:[#allocation2 + $0x44] sm:$0xf]
        %v1482 = vld [vmem:[#allocation2 + $0x48] sm:$0xf]
        %v1483 = vld [vmem:[#allocation2 + $0x4c] sm:$0xf]
        %v1484 = vld [vmem:[#allocation2 + $0x50] sm:$0xf]
        %v1485 = vld [vmem:[#allocation2 + $0x54] sm:$0xf]
        %v1486 = vld [vmem:[#allocation2 + $0x58] sm:$0xf]
        %v1487 = vld [vmem:[#allocation2 + $0x5c] sm:$0xf]
        %v1488 = vld [vmem:[#allocation2 + $0x60] sm:$0xf]
        %v1489 = vld [vmem:[#allocation2 + $0x64] sm:$0xf]
        %v1490 = vld [vmem:[#allocation2 + $0x68] sm:$0xf]
        %v1491 = vld [vmem:[#allocation2 + $0x6c] sm:$0xf]
        %v1492 = vld [vmem:[#allocation2 + $0x70] sm:$0xf]
        %v1493 = vld [vmem:[#allocation2 + $0x74] sm:$0x1]
        %s1494 = scalar_lea.vmem %s173, 6
        %v1495 = vld [vmem:[%s1494] sm:$0x3]
        %v1523 = vunpack.c.l.b16 %v1467
        %v1524 = vunpack.c.l.b16 %v1468
        %v1525 = vunpack.c.l.b16 %v1469
        %v1526 = vunpack.c.l.b16 %v1470
        %v1527 = vunpack.c.l.b16 %v1471
        %v1528 = vunpack.c.l.b16 %v1472
        %v1529 = vunpack.c.l.b16 %v1473
        %v1530 = vunpack.c.l.b16 %v1474
        %v1531 = vunpack.c.l.b16 %v1475
        %v1532 = vunpack.c.l.b16 %v1476
        %v1533 = vunpack.c.l.b16 %v1477
        %v1534 = vunpack.c.l.b16 %v1478
        %v1535 = vunpack.c.l.b16 %v1479
        %v1536 = vunpack.c.l.b16 %v1480
        %v1537 = vunpack.c.l.b16 %v1481
        %v1538 = vunpack.c.l.b16 %v1482
        %v1539 = vunpack.c.l.b16 %v1483
        %v1540 = vunpack.c.l.b16 %v1484
        %v1541 = vunpack.c.l.b16 %v1485
        %v1542 = vunpack.c.l.b16 %v1486
        %v1543 = vunpack.c.l.b16 %v1487
        %v1544 = vunpack.c.l.b16 %v1488
        %v1545 = vunpack.c.l.b16 %v1489
        %v1546 = vunpack.c.l.b16 %v1490
        %v1547 = vunpack.c.l.b16 %v1491
        %v1548 = vunpack.c.l.b16 %v1492
        %v1549 = vunpack.c.l.b16 %v1493
        %v1550 = vpack.c.b16 %v1524, %v1523
        %v1551 = vpack.c.b16 %v1526, %v1525
        %v1552 = vpack.c.b16 %v1528, %v1527
        %v1553 = vpack.c.b16 %v1530, %v1529
        %v1554 = vpack.c.b16 %v1532, %v1531
        %v1555 = vpack.c.b16 %v1534, %v1533
        %v1556 = vpack.c.b16 %v1536, %v1535
        %v1557 = vpack.c.b16 %v1538, %v1537
        %v1558 = vpack.c.b16 %v1540, %v1539
        %v1559 = vpack.c.b16 %v1542, %v1541
        %v1560 = vpack.c.b16 %v1544, %v1543
        %v1561 = vpack.c.b16 %v1546, %v1545
        %v1562 = vpack.c.b16 %v1548, %v1547
        %v1563 = vpack.c.b16 %v1549, %v1549
        %v1565 = vsel %vm374, %v1550, 0
        %v1568 = vsel %vm374, %v1551, 0
        %v1571 = vsel %vm374, %v1552, 0
        %v1574 = vsel %vm374, %v1553, 0
        %v1577 = vsel %vm374, %v1554, 0
        %v1580 = vsel %vm374, %v1555, 0
        %v1583 = vsel %vm374, %v1556, 0
        %v1586 = vsel %vm374, %v1557, 0
        %v1589 = vsel %vm374, %v1558, 0
        %v1592 = vsel %vm374, %v1559, 0
        %v1595 = vsel %vm374, %v1560, 0
        %v1598 = vsel %vm374, %v1561, 0
        %v1601 = vsel %vm374, %v1562, 0
        %v1604 = vsel %vm374, %v1563, 0
        %v1607 = vsel %vm417, %v1495, 0
        %1609 = vmatprep.subr.bf16.mxu0 0
        %1610 = vmatpush1.bf16.msra.mxu0 %v1607
        %1611 = vmatprep.subr.bf16.mxu0 0
        %1612 = vmatpush1.bf16.msra.mxu0 0
        %1613 = vmatprep.subr.bf16.mxu0 0
        %1614 = vmatpush1.bf16.msra.mxu0 0
        %1615 = vmatprep.subr.bf16.mxu0 0
        %1616 = vmatpush1.bf16.msra.mxu0 0
        %1617 = vmatprep.subr.bf16.mxu0 0
        %1618 = vmatpush1.bf16.msra.mxu0 0
        %1619 = vmatprep.subr.bf16.mxu0 0
        %1620 = vmatpush1.bf16.msra.mxu0 0
        %1621 = vmatprep.subr.bf16.mxu0 0
        %1622 = vmatpush1.bf16.msra.mxu0 0
        %1623 = vmatprep.subr.bf16.mxu0 0
        %1624 = vmatpush1.bf16.msra.mxu0 0
        %1625 = vmatprep.subr.bf16.mxu0 0
        %1626 = vmatpush1.bf16.msra.mxu0 0
        %1627 = vmatprep.subr.bf16.mxu0 0
        %1628 = vmatpush1.bf16.msra.mxu0 0
        %1629 = vmatprep.subr.bf16.mxu0 0
        %1630 = vmatpush1.bf16.msra.mxu0 0
        %1631 = vmatprep.subr.bf16.mxu0 0
        %1632 = vmatpush1.bf16.msra.mxu0 0
        %1633 = vmatprep.subr.bf16.mxu0 0
        %1634 = vmatpush1.bf16.msra.mxu0 0
        %1635 = vmatprep.subr.bf16.mxu0 0
        %1636 = vmatpush1.bf16.msra.mxu0 0
        %1637 = vmatprep.subr.bf16.mxu0 0
        %1638 = vmatpush1.bf16.msra.mxu0 0
        %1639 = vmatprep.subr.bf16.mxu0 0
        %1640 = vmatpush1.bf16.msra.mxu0 0
        %1641 = vmatprep.mubr.bf16.mxu0 0
        %1642 = vmatmul.mubr.bf16.gmra.mrb[0].mxu0 %v1565
        %v1643 = vpop.f32.mrb[0].mxu0
        %v1644 = vadd.f32 0.0, %v1643
        %v1645 = vpop.f32.mrb[0].mxu0
        %v1646 = vpop.f32.mrb[0].mxu0
        %v1647 = vadd.f32 0.0, %v1646
        %v1648 = vpop.f32.mrb[0].mxu0
        %1649 = vmatprep.mubr.bf16.mxu0 0
        %1650 = vmatmul.mubr.bf16.gmra.mrb[0].mxu0 %v1568
        %v1651 = vpop.f32.mrb[0].mxu0
        %v1652 = vadd.f32 0.0, %v1651
        %v1653 = vpop.f32.mrb[0].mxu0
        %v1654 = vpop.f32.mrb[0].mxu0
        %v1655 = vadd.f32 0.0, %v1654
        %v1656 = vpop.f32.mrb[0].mxu0
        %1657 = vmatprep.mubr.bf16.mxu0 0
        %1658 = vmatmul.mubr.bf16.gmra.mrb[0].mxu0 %v1571
        %v1659 = vpop.f32.mrb[0].mxu0
        %v1660 = vadd.f32 0.0, %v1659
        %v1661 = vpop.f32.mrb[0].mxu0
        %v1662 = vpop.f32.mrb[0].mxu0
        %v1663 = vadd.f32 0.0, %v1662
        %v1664 = vpop.f32.mrb[0].mxu0
        %1665 = vmatprep.mubr.bf16.mxu0 0
        %1666 = vmatmul.mubr.bf16.gmra.mrb[0].mxu0 %v1574
        %v1667 = vpop.f32.mrb[0].mxu0
        %v1668 = vadd.f32 0.0, %v1667
        %v1669 = vpop.f32.mrb[0].mxu0
        %v1670 = vpop.f32.mrb[0].mxu0
        %v1671 = vadd.f32 0.0, %v1670
        %v1672 = vpop.f32.mrb[0].mxu0
        %1673 = vmatprep.mubr.bf16.mxu0 0
        %1674 = vmatmul.mubr.bf16.gmra.mrb[0].mxu0 %v1577
        %v1675 = vpop.f32.mrb[0].mxu0
        %v1676 = vadd.f32 0.0, %v1675
        %v1677 = vpop.f32.mrb[0].mxu0
        %v1678 = vpop.f32.mrb[0].mxu0
        %v1679 = vadd.f32 0.0, %v1678
        %v1680 = vpop.f32.mrb[0].mxu0
        %1681 = vmatprep.mubr.bf16.mxu0 0
        %1682 = vmatmul.mubr.bf16.gmra.mrb[0].mxu0 %v1580
        %v1683 = vpop.f32.mrb[0].mxu0
        %v1684 = vadd.f32 0.0, %v1683
        %v1685 = vpop.f32.mrb[0].mxu0
        %v1686 = vpop.f32.mrb[0].mxu0
        %v1687 = vadd.f32 0.0, %v1686
        %v1688 = vpop.f32.mrb[0].mxu0
        %1689 = vmatprep.mubr.bf16.mxu0 0
        %1690 = vmatmul.mubr.bf16.gmra.mrb[0].mxu0 %v1583
        %v1691 = vpop.f32.mrb[0].mxu0
        %v1692 = vadd.f32 0.0, %v1691
        %v1693 = vpop.f32.mrb[0].mxu0
        %v1694 = vpop.f32.mrb[0].mxu0
        %v1695 = vadd.f32 0.0, %v1694
        %v1696 = vpop.f32.mrb[0].mxu0
        %1697 = vmatprep.mubr.bf16.mxu0 0
        %1698 = vmatmul.mubr.bf16.gmra.mrb[0].mxu0 %v1586
        %v1699 = vpop.f32.mrb[0].mxu0
        %v1700 = vadd.f32 0.0, %v1699
        %v1701 = vpop.f32.mrb[0].mxu0
        %v1702 = vpop.f32.mrb[0].mxu0
        %v1703 = vadd.f32 0.0, %v1702
        %v1704 = vpop.f32.mrb[0].mxu0
        %1705 = vmatprep.mubr.bf16.mxu0 0
        %1706 = vmatmul.mubr.bf16.gmra.mrb[0].mxu0 %v1589
        %v1707 = vpop.f32.mrb[0].mxu0
        %v1708 = vadd.f32 0.0, %v1707
        %v1709 = vpop.f32.mrb[0].mxu0
        %v1710 = vpop.f32.mrb[0].mxu0
        %v1711 = vadd.f32 0.0, %v1710
        %v1712 = vpop.f32.mrb[0].mxu0
        %1713 = vmatprep.mubr.bf16.mxu0 0
        %1714 = vmatmul.mubr.bf16.gmra.mrb[0].mxu0 %v1592
        %v1715 = vpop.f32.mrb[0].mxu0
        %v1716 = vadd.f32 0.0, %v1715
        %v1717 = vpop.f32.mrb[0].mxu0
        %v1718 = vpop.f32.mrb[0].mxu0
        %v1719 = vadd.f32 0.0, %v1718
        %v1720 = vpop.f32.mrb[0].mxu0
        %1721 = vmatprep.mubr.bf16.mxu0 0
        %1722 = vmatmul.mubr.bf16.gmra.mrb[0].mxu0 %v1595
        %v1723 = vpop.f32.mrb[0].mxu0
        %v1724 = vadd.f32 0.0, %v1723
        %v1725 = vpop.f32.mrb[0].mxu0
        %v1726 = vpop.f32.mrb[0].mxu0
        %v1727 = vadd.f32 0.0, %v1726
        %v1728 = vpop.f32.mrb[0].mxu0
        %1729 = vmatprep.mubr.bf16.mxu0 0
        %1730 = vmatmul.mubr.bf16.gmra.mrb[0].mxu0 %v1598
        %v1731 = vpop.f32.mrb[0].mxu0
        %v1732 = vadd.f32 0.0, %v1731
        %v1733 = vpop.f32.mrb[0].mxu0
        %v1734 = vpop.f32.mrb[0].mxu0
        %v1735 = vadd.f32 0.0, %v1734
        %v1736 = vpop.f32.mrb[0].mxu0
        %1737 = vmatprep.mubr.bf16.mxu0 0
        %1738 = vmatmul.mubr.bf16.gmra.mrb[0].mxu0 %v1601
        %v1739 = vpop.f32.mrb[0].mxu0
        %v1740 = vadd.f32 0.0, %v1739
        %v1741 = vpop.f32.mrb[0].mxu0
        %v1742 = vpop.f32.mrb[0].mxu0
        %v1743 = vadd.f32 0.0, %v1742
        %v1744 = vpop.f32.mrb[0].mxu0
        %1745 = vmatprep.mubr.bf16.mxu0 0
        %1746 = vmatmul.mubr.bf16.gmra.mrb[0].mxu0 %v1604
        %v1747 = vpop.f32.mrb[0].mxu0
        %v1748 = vadd.f32 0.0, %v1747
        %v1749 = vpop.f32.mrb[0].mxu0
        %v1750 = vpop.f32.mrb[0].mxu0
        %v1751 = vpop.f32.mrb[0].mxu0
        %1752 = vdwg.mxu0
        %v1753 = vld [vmem:[#allocation4 + $0x8] sm:$0xff]
        %v1754 = vld [vmem:[#allocation4 + $0x10] sm:$0xff]
        %v1755 = vld [vmem:[#allocation4 + $0x18] sm:$0xff]
        %v1756 = vld [vmem:[#allocation4 + $0x20] sm:$0xff]
        %v1757 = vld [vmem:[#allocation4 + $0x28] sm:$0xff]
        %v1758 = vld [vmem:[#allocation4 + $0x30] sm:$0xff]
        %v1759 = vld [vmem:[#allocation4 + $0x38] sm:$0xff]
        %v1760 = vld [vmem:[#allocation4 + $0x40] sm:$0xff]
        %v1761 = vld [vmem:[#allocation4 + $0x48] sm:$0xff]
        %v1762 = vld [vmem:[#allocation4 + $0x50] sm:$0xff]
        %v1763 = vld [vmem:[#allocation4 + $0x58] sm:$0xff]
        %v1764 = vld [vmem:[#allocation4 + $0x60] sm:$0xff]
        %v1765 = vld [vmem:[#allocation4 + $0x68] sm:$0xff]
        %v1766 = vld [vmem:[#allocation4 + $0x70] sm:$0xff]
        %v1767 = vld [vmem:[#allocation4 + $0x78] sm:$0xff]
        %v1768 = vld [vmem:[#allocation4 + $0x80] sm:$0xff]
        %v1769 = vld [vmem:[#allocation4 + $0x88] sm:$0xff]
        %v1770 = vld [vmem:[#allocation4 + $0x90] sm:$0xff]
        %v1771 = vld [vmem:[#allocation4 + $0x98] sm:$0xff]
        %v1772 = vld [vmem:[#allocation4 + $0xa0] sm:$0xff]
        %v1773 = vld [vmem:[#allocation4 + $0xa8] sm:$0xff]
        %v1774 = vld [vmem:[#allocation4 + $0xb0] sm:$0xff]
        %v1775 = vld [vmem:[#allocation4 + $0xb8] sm:$0xff]
        %v1776 = vld [vmem:[#allocation4 + $0xc0] sm:$0xff]
        %v1777 = vld [vmem:[#allocation4 + $0xc8] sm:$0xff]
        %v1778 = vld [vmem:[#allocation4 + $0xd0] sm:$0xff]
        %v1779 = vld [vmem:[#allocation4 + $0xd8] sm:$0x1]
        %v1780 = vadd.f32 %v1753, %v1644
        %v1781 = vadd.f32 %v1754, %v1647
        %v1782 = vadd.f32 %v1755, %v1652
        %v1783 = vadd.f32 %v1756, %v1655
        %v1784 = vadd.f32 %v1757, %v1660
        %v1785 = vadd.f32 %v1758, %v1663
        %v1786 = vadd.f32 %v1759, %v1668
        %v1787 = vadd.f32 %v1760, %v1671
        %v1788 = vadd.f32 %v1761, %v1676
        %v1789 = vadd.f32 %v1762, %v1679
        %v1790 = vadd.f32 %v1763, %v1684
        %v1791 = vadd.f32 %v1764, %v1687
        %v1792 = vadd.f32 %v1765, %v1692
        %v1793 = vadd.f32 %v1766, %v1695
        %v1794 = vadd.f32 %v1767, %v1700
        %v1795 = vadd.f32 %v1768, %v1703
        %v1796 = vadd.f32 %v1769, %v1708
        %v1797 = vadd.f32 %v1770, %v1711
        %v1798 = vadd.f32 %v1771, %v1716
        %v1799 = vadd.f32 %v1772, %v1719
        %v1800 = vadd.f32 %v1773, %v1724
        %v1801 = vadd.f32 %v1774, %v1727
        %v1802 = vadd.f32 %v1775, %v1732
        %v1803 = vadd.f32 %v1776, %v1735
        %v1804 = vadd.f32 %v1777, %v1740
        %v1805 = vadd.f32 %v1778, %v1743
        %v1806 = vadd.f32 %v1779, %v1748
        %1807 = vst.msk [vmem:[#allocation4 + $0x8] sm:$0xff] %vm565, %v1780
        %1808 = vst.msk [vmem:[#allocation4 + $0x10] sm:$0xff] %vm565, %v1781
        %1809 = vst.msk [vmem:[#allocation4 + $0x18] sm:$0xff] %vm565, %v1782
        %1810 = vst.msk [vmem:[#allocation4 + $0x20] sm:$0xff] %vm565, %v1783
        %1811 = vst.msk [vmem:[#allocation4 + $0x28] sm:$0xff] %vm565, %v1784
        %1812 = vst.msk [vmem:[#allocation4 + $0x30] sm:$0xff] %vm565, %v1785
        %1813 = vst.msk [vmem:[#allocation4 + $0x38] sm:$0xff] %vm565, %v1786
        %1814 = vst.msk [vmem:[#allocation4 + $0x40] sm:$0xff] %vm565, %v1787
        %1815 = vst.msk [vmem:[#allocation4 + $0x48] sm:$0xff] %vm565, %v1788
        %1816 = vst.msk [vmem:[#allocation4 + $0x50] sm:$0xff] %vm565, %v1789
        %1817 = vst.msk [vmem:[#allocation4 + $0x58] sm:$0xff] %vm565, %v1790
        %1818 = vst.msk [vmem:[#allocation4 + $0x60] sm:$0xff] %vm565, %v1791
        %1819 = vst.msk [vmem:[#allocation4 + $0x68] sm:$0xff] %vm565, %v1792
        %1820 = vst.msk [vmem:[#allocation4 + $0x70] sm:$0xff] %vm565, %v1793
        %1821 = vst.msk [vmem:[#allocation4 + $0x78] sm:$0xff] %vm565, %v1794
        %1822 = vst.msk [vmem:[#allocation4 + $0x80] sm:$0xff] %vm565, %v1795
        %1823 = vst.msk [vmem:[#allocation4 + $0x88] sm:$0xff] %vm565, %v1796
        %1824 = vst.msk [vmem:[#allocation4 + $0x90] sm:$0xff] %vm565, %v1797
        %1825 = vst.msk [vmem:[#allocation4 + $0x98] sm:$0xff] %vm565, %v1798
        %1826 = vst.msk [vmem:[#allocation4 + $0xa0] sm:$0xff] %vm565, %v1799
        %1827 = vst.msk [vmem:[#allocation4 + $0xa8] sm:$0xff] %vm565, %v1800
        %1828 = vst.msk [vmem:[#allocation4 + $0xb0] sm:$0xff] %vm565, %v1801
        %1829 = vst.msk [vmem:[#allocation4 + $0xb8] sm:$0xff] %vm565, %v1802
        %1830 = vst.msk [vmem:[#allocation4 + $0xc0] sm:$0xff] %vm565, %v1803
        %1831 = vst.msk [vmem:[#allocation4 + $0xc8] sm:$0xff] %vm565, %v1804
        %1832 = vst.msk [vmem:[#allocation4 + $0xd0] sm:$0xff] %vm565, %v1805
        %1833 = vst.msk [vmem:[#allocation4 + $0xd8] sm:$0x1] %vm592, %v1806
        %v1834 = vld [vmem:[#allocation2 + $0xc] sm:$0xf]
        %v1835 = vld [vmem:[#allocation2 + $0x10] sm:$0xf]
        %v1836 = vld [vmem:[#allocation2 + $0x14] sm:$0xf]
        %v1837 = vld [vmem:[#allocation2 + $0x18] sm:$0xf]
        %v1838 = vld [vmem:[#allocation2 + $0x1c] sm:$0xf]
        %v1839 = vld [vmem:[#allocation2 + $0x20] sm:$0xf]
        %v1840 = vld [vmem:[#allocation2 + $0x24] sm:$0xf]
        %v1841 = vld [vmem:[#allocation2 + $0x28] sm:$0xf]
        %v1842 = vld [vmem:[#allocation2 + $0x2c] sm:$0xf]
        %v1843 = vld [vmem:[#allocation2 + $0x30] sm:$0xf]
        %v1844 = vld [vmem:[#allocation2 + $0x34] sm:$0xf]
        %v1845 = vld [vmem:[#allocation2 + $0x38] sm:$0xf]
        %v1846 = vld [vmem:[#allocation2 + $0x3c] sm:$0xf]
        %v1847 = vld [vmem:[#allocation2 + $0x40] sm:$0xf]
        %v1848 = vld [vmem:[#allocation2 + $0x44] sm:$0xf]
        %v1849 = vld [vmem:[#allocation2 + $0x48] sm:$0xf]
        %v1850 = vld [vmem:[#allocation2 + $0x4c] sm:$0xf]
        %v1851 = vld [vmem:[#allocation2 + $0x50] sm:$0xf]
        %v1852 = vld [vmem:[#allocation2 + $0x54] sm:$0xf]
        %v1853 = vld [vmem:[#allocation2 + $0x58] sm:$0xf]
        %v1854 = vld [vmem:[#allocation2 + $0x5c] sm:$0xf]
        %v1855 = vld [vmem:[#allocation2 + $0x60] sm:$0xf]
        %v1856 = vld [vmem:[#allocation2 + $0x64] sm:$0xf]
        %v1857 = vld [vmem:[#allocation2 + $0x68] sm:$0xf]
        %v1858 = vld [vmem:[#allocation2 + $0x6c] sm:$0xf]
        %v1859 = vld [vmem:[#allocation2 + $0x70] sm:$0xf]
        %v1860 = vld [vmem:[#allocation2 + $0x74] sm:$0x1]
        %s1861 = scalar_lea.vmem %s173, 8
        %v1862 = vld [vmem:[%s1861] sm:$0x3]
        %v1890 = vunpack.c.l.b16 %v1834
        %v1891 = vunpack.c.l.b16 %v1835
        %v1892 = vunpack.c.l.b16 %v1836
        %v1893 = vunpack.c.l.b16 %v1837
        %v1894 = vunpack.c.l.b16 %v1838
        %v1895 = vunpack.c.l.b16 %v1839
        %v1896 = vunpack.c.l.b16 %v1840
        %v1897 = vunpack.c.l.b16 %v1841
        %v1898 = vunpack.c.l.b16 %v1842
        %v1899 = vunpack.c.l.b16 %v1843
        %v1900 = vunpack.c.l.b16 %v1844
        %v1901 = vunpack.c.l.b16 %v1845
        %v1902 = vunpack.c.l.b16 %v1846
        %v1903 = vunpack.c.l.b16 %v1847
        %v1904 = vunpack.c.l.b16 %v1848
        %v1905 = vunpack.c.l.b16 %v1849
        %v1906 = vunpack.c.l.b16 %v1850
        %v1907 = vunpack.c.l.b16 %v1851
        %v1908 = vunpack.c.l.b16 %v1852
        %v1909 = vunpack.c.l.b16 %v1853
        %v1910 = vunpack.c.l.b16 %v1854
        %v1911 = vunpack.c.l.b16 %v1855
        %v1912 = vunpack.c.l.b16 %v1856
        %v1913 = vunpack.c.l.b16 %v1857
        %v1914 = vunpack.c.l.b16 %v1858
        %v1915 = vunpack.c.l.b16 %v1859
        %v1916 = vunpack.c.l.b16 %v1860
        %v1917 = vpack.c.b16 %v1891, %v1890
        %v1918 = vpack.c.b16 %v1893, %v1892
        %v1919 = vpack.c.b16 %v1895, %v1894
        %v1920 = vpack.c.b16 %v1897, %v1896
        %v1921 = vpack.c.b16 %v1899, %v1898
        %v1922 = vpack.c.b16 %v1901, %v1900
        %v1923 = vpack.c.b16 %v1903, %v1902
        %v1924 = vpack.c.b16 %v1905, %v1904
        %v1925 = vpack.c.b16 %v1907, %v1906
        %v1926 = vpack.c.b16 %v1909, %v1908
        %v1927 = vpack.c.b16 %v1911, %v1910
        %v1928 = vpack.c.b16 %v1913, %v1912
        %v1929 = vpack.c.b16 %v1915, %v1914
        %v1930 = vpack.c.b16 %v1916, %v1916
        %v1932 = vshrl.u32 %v1917, 16
        %v1934 = vshll.u32 %v1917, 16
        %v1936 = vrot.slane %v1934, 1
        %v1937 = vor.u32 %v1932, %v1936
        %v1939 = vshll.u32 %v1918, 16
        %v1941 = vrot.slane %v1939, 1
        %v1942 = vsel %vm691, %v1937, %v1941
        %v1943 = vshrl.u32 %v1918, 16
        %v1945 = vor.u32 %v1943, %v1941
        %v1947 = vshll.u32 %v1919, 16
        %v1949 = vrot.slane %v1947, 1
        %v1950 = vsel %vm691, %v1945, %v1949
        %v1951 = vshrl.u32 %v1919, 16
        %v1953 = vor.u32 %v1951, %v1949
        %v1955 = vshll.u32 %v1920, 16
        %v1957 = vrot.slane %v1955, 1
        %v1958 = vsel %vm691, %v1953, %v1957
        %v1959 = vshrl.u32 %v1920, 16
        %v1961 = vor.u32 %v1959, %v1957
        %v1963 = vshll.u32 %v1921, 16
        %v1965 = vrot.slane %v1963, 1
        %v1966 = vsel %vm691, %v1961, %v1965
        %v1967 = vshrl.u32 %v1921, 16
        %v1969 = vor.u32 %v1967, %v1965
        %v1971 = vshll.u32 %v1922, 16
        %v1973 = vrot.slane %v1971, 1
        %v1974 = vsel %vm691, %v1969, %v1973
        %v1975 = vshrl.u32 %v1922, 16
        %v1977 = vor.u32 %v1975, %v1973
        %v1979 = vshll.u32 %v1923, 16
        %v1981 = vrot.slane %v1979, 1
        %v1982 = vsel %vm691, %v1977, %v1981
        %v1983 = vshrl.u32 %v1923, 16
        %v1985 = vor.u32 %v1983, %v1981
        %v1987 = vshll.u32 %v1924, 16
        %v1989 = vrot.slane %v1987, 1
        %v1990 = vsel %vm691, %v1985, %v1989
        %v1991 = vshrl.u32 %v1924, 16
        %v1993 = vor.u32 %v1991, %v1989
        %v1995 = vshll.u32 %v1925, 16
        %v1997 = vrot.slane %v1995, 1
        %v1998 = vsel %vm691, %v1993, %v1997
        %v1999 = vshrl.u32 %v1925, 16
        %v2001 = vor.u32 %v1999, %v1997
        %v2003 = vshll.u32 %v1926, 16
        %v2005 = vrot.slane %v2003, 1
        %v2006 = vsel %vm691, %v2001, %v2005
        %v2007 = vshrl.u32 %v1926, 16
        %v2009 = vor.u32 %v2007, %v2005
        %v2011 = vshll.u32 %v1927, 16
        %v2013 = vrot.slane %v2011, 1
        %v2014 = vsel %vm691, %v2009, %v2013
        %v2015 = vshrl.u32 %v1927, 16
        %v2017 = vor.u32 %v2015, %v2013
        %v2019 = vshll.u32 %v1928, 16
        %v2021 = vrot.slane %v2019, 1
        %v2022 = vsel %vm691, %v2017, %v2021
        %v2023 = vshrl.u32 %v1928, 16
        %v2025 = vor.u32 %v2023, %v2021
        %v2027 = vshll.u32 %v1929, 16
        %v2029 = vrot.slane %v2027, 1
        %v2030 = vsel %vm691, %v2025, %v2029
        %v2031 = vshrl.u32 %v1929, 16
        %v2033 = vor.u32 %v2031, %v2029
        %v2035 = vshll.u32 %v1930, 16
        %v2037 = vrot.slane %v2035, 1
        %v2038 = vsel %vm691, %v2033, %v2037
        %v2039 = vshrl.u32 %v1930, 16
        %v2042 = vsel %vm374, %v1942, 0
        %v2045 = vsel %vm374, %v1950, 0
        %v2048 = vsel %vm374, %v1958, 0
        %v2051 = vsel %vm374, %v1966, 0
        %v2054 = vsel %vm374, %v1974, 0
        %v2057 = vsel %vm374, %v1982, 0
        %v2060 = vsel %vm374, %v1990, 0
        %v2063 = vsel %vm374, %v1998, 0
        %v2066 = vsel %vm374, %v2006, 0
        %v2069 = vsel %vm374, %v2014, 0
        %v2072 = vsel %vm374, %v2022, 0
        %v2075 = vsel %vm374, %v2030, 0
        %v2078 = vsel %vm374, %v2038, 0
        %v2081 = vsel %vm374, %v2039, 0
        %v2084 = vsel %vm417, %v1862, 0
        %2086 = vmatprep.subr.bf16.mxu0 0
        %2087 = vmatpush1.bf16.msra.mxu0 %v2084
        %2088 = vmatprep.subr.bf16.mxu0 0
        %2089 = vmatpush1.bf16.msra.mxu0 0
        %2090 = vmatprep.subr.bf16.mxu0 0
        %2091 = vmatpush1.bf16.msra.mxu0 0
        %2092 = vmatprep.subr.bf16.mxu0 0
        %2093 = vmatpush1.bf16.msra.mxu0 0
        %2094 = vmatprep.subr.bf16.mxu0 0
        %2095 = vmatpush1.bf16.msra.mxu0 0
        %2096 = vmatprep.subr.bf16.mxu0 0
        %2097 = vmatpush1.bf16.msra.mxu0 0
        %2098 = vmatprep.subr.bf16.mxu0 0
        %2099 = vmatpush1.bf16.msra.mxu0 0
        %2100 = vmatprep.subr.bf16.mxu0 0
        %2101 = vmatpush1.bf16.msra.mxu0 0
        %2102 = vmatprep.subr.bf16.mxu0 0
        %2103 = vmatpush1.bf16.msra.mxu0 0
        %2104 = vmatprep.subr.bf16.mxu0 0
        %2105 = vmatpush1.bf16.msra.mxu0 0
        %2106 = vmatprep.subr.bf16.mxu0 0
        %2107 = vmatpush1.bf16.msra.mxu0 0
        %2108 = vmatprep.subr.bf16.mxu0 0
        %2109 = vmatpush1.bf16.msra.mxu0 0
        %2110 = vmatprep.subr.bf16.mxu0 0
        %2111 = vmatpush1.bf16.msra.mxu0 0
        %2112 = vmatprep.subr.bf16.mxu0 0
        %2113 = vmatpush1.bf16.msra.mxu0 0
        %2114 = vmatprep.subr.bf16.mxu0 0
        %2115 = vmatpush1.bf16.msra.mxu0 0
        %2116 = vmatprep.subr.bf16.mxu0 0
        %2117 = vmatpush1.bf16.msra.mxu0 0
        %2118 = vmatprep.mubr.bf16.mxu0 0
        %2119 = vmatmul.mubr.bf16.gmra.mrb[0].mxu0 %v2042
        %v2120 = vpop.f32.mrb[0].mxu0
        %v2121 = vadd.f32 0.0, %v2120
        %v2122 = vpop.f32.mrb[0].mxu0
        %v2123 = vpop.f32.mrb[0].mxu0
        %v2124 = vadd.f32 0.0, %v2123
        %v2125 = vpop.f32.mrb[0].mxu0
        %2126 = vmatprep.mubr.bf16.mxu0 0
        %2127 = vmatmul.mubr.bf16.gmra.mrb[0].mxu0 %v2045
        %v2128 = vpop.f32.mrb[0].mxu0
        %v2129 = vadd.f32 0.0, %v2128
        %v2130 = vpop.f32.mrb[0].mxu0
        %v2131 = vpop.f32.mrb[0].mxu0
        %v2132 = vadd.f32 0.0, %v2131
        %v2133 = vpop.f32.mrb[0].mxu0
        %2134 = vmatprep.mubr.bf16.mxu0 0
        %2135 = vmatmul.mubr.bf16.gmra.mrb[0].mxu0 %v2048
        %v2136 = vpop.f32.mrb[0].mxu0
        %v2137 = vadd.f32 0.0, %v2136
        %v2138 = vpop.f32.mrb[0].mxu0
        %v2139 = vpop.f32.mrb[0].mxu0
        %v2140 = vadd.f32 0.0, %v2139
        %v2141 = vpop.f32.mrb[0].mxu0
        %2142 = vmatprep.mubr.bf16.mxu0 0
        %2143 = vmatmul.mubr.bf16.gmra.mrb[0].mxu0 %v2051
        %v2144 = vpop.f32.mrb[0].mxu0
        %v2145 = vadd.f32 0.0, %v2144
        %v2146 = vpop.f32.mrb[0].mxu0
        %v2147 = vpop.f32.mrb[0].mxu0
        %v2148 = vadd.f32 0.0, %v2147
        %v2149 = vpop.f32.mrb[0].mxu0
        %2150 = vmatprep.mubr.bf16.mxu0 0
        %2151 = vmatmul.mubr.bf16.gmra.mrb[0].mxu0 %v2054
        %v2152 = vpop.f32.mrb[0].mxu0
        %v2153 = vadd.f32 0.0, %v2152
        %v2154 = vpop.f32.mrb[0].mxu0
        %v2155 = vpop.f32.mrb[0].mxu0
        %v2156 = vadd.f32 0.0, %v2155
        %v2157 = vpop.f32.mrb[0].mxu0
        %2158 = vmatprep.mubr.bf16.mxu0 0
        %2159 = vmatmul.mubr.bf16.gmra.mrb[0].mxu0 %v2057
        %v2160 = vpop.f32.mrb[0].mxu0
        %v2161 = vadd.f32 0.0, %v2160
        %v2162 = vpop.f32.mrb[0].mxu0
        %v2163 = vpop.f32.mrb[0].mxu0
        %v2164 = vadd.f32 0.0, %v2163
        %v2165 = vpop.f32.mrb[0].mxu0
        %2166 = vmatprep.mubr.bf16.mxu0 0
        %2167 = vmatmul.mubr.bf16.gmra.mrb[0].mxu0 %v2060
        %v2168 = vpop.f32.mrb[0].mxu0
        %v2169 = vadd.f32 0.0, %v2168
        %v2170 = vpop.f32.mrb[0].mxu0
        %v2171 = vpop.f32.mrb[0].mxu0
        %v2172 = vadd.f32 0.0, %v2171
        %v2173 = vpop.f32.mrb[0].mxu0
        %2174 = vmatprep.mubr.bf16.mxu0 0
        %2175 = vmatmul.mubr.bf16.gmra.mrb[0].mxu0 %v2063
        %v2176 = vpop.f32.mrb[0].mxu0
        %v2177 = vadd.f32 0.0, %v2176
        %v2178 = vpop.f32.mrb[0].mxu0
        %v2179 = vpop.f32.mrb[0].mxu0
        %v2180 = vadd.f32 0.0, %v2179
        %v2181 = vpop.f32.mrb[0].mxu0
        %2182 = vmatprep.mubr.bf16.mxu0 0
        %2183 = vmatmul.mubr.bf16.gmra.mrb[0].mxu0 %v2066
        %v2184 = vpop.f32.mrb[0].mxu0
        %v2185 = vadd.f32 0.0, %v2184
        %v2186 = vpop.f32.mrb[0].mxu0
        %v2187 = vpop.f32.mrb[0].mxu0
        %v2188 = vadd.f32 0.0, %v2187
        %v2189 = vpop.f32.mrb[0].mxu0
        %2190 = vmatprep.mubr.bf16.mxu0 0
        %2191 = vmatmul.mubr.bf16.gmra.mrb[0].mxu0 %v2069
        %v2192 = vpop.f32.mrb[0].mxu0
        %v2193 = vadd.f32 0.0, %v2192
        %v2194 = vpop.f32.mrb[0].mxu0
        %v2195 = vpop.f32.mrb[0].mxu0
        %v2196 = vadd.f32 0.0, %v2195
        %v2197 = vpop.f32.mrb[0].mxu0
        %2198 = vmatprep.mubr.bf16.mxu0 0
        %2199 = vmatmul.mubr.bf16.gmra.mrb[0].mxu0 %v2072
        %v2200 = vpop.f32.mrb[0].mxu0
        %v2201 = vadd.f32 0.0, %v2200
        %v2202 = vpop.f32.mrb[0].mxu0
        %v2203 = vpop.f32.mrb[0].mxu0
        %v2204 = vadd.f32 0.0, %v2203
        %v2205 = vpop.f32.mrb[0].mxu0
        %2206 = vmatprep.mubr.bf16.mxu0 0
        %2207 = vmatmul.mubr.bf16.gmra.mrb[0].mxu0 %v2075
        %v2208 = vpop.f32.mrb[0].mxu0
        %v2209 = vadd.f32 0.0, %v2208
        %v2210 = vpop.f32.mrb[0].mxu0
        %v2211 = vpop.f32.mrb[0].mxu0
        %v2212 = vadd.f32 0.0, %v2211
        %v2213 = vpop.f32.mrb[0].mxu0
        %2214 = vmatprep.mubr.bf16.mxu0 0
        %2215 = vmatmul.mubr.bf16.gmra.mrb[0].mxu0 %v2078
        %v2216 = vpop.f32.mrb[0].mxu0
        %v2217 = vadd.f32 0.0, %v2216
        %v2218 = vpop.f32.mrb[0].mxu0
        %v2219 = vpop.f32.mrb[0].mxu0
        %v2220 = vadd.f32 0.0, %v2219
        %v2221 = vpop.f32.mrb[0].mxu0
        %2222 = vmatprep.mubr.bf16.mxu0 0
        %2223 = vmatmul.mubr.bf16.gmra.mrb[0].mxu0 %v2081
        %v2224 = vpop.f32.mrb[0].mxu0
        %v2225 = vadd.f32 0.0, %v2224
        %v2226 = vpop.f32.mrb[0].mxu0
        %v2227 = vpop.f32.mrb[0].mxu0
        %v2228 = vpop.f32.mrb[0].mxu0
        %2229 = vdwg.mxu0
        %v2230 = vld [vmem:[#allocation4 + $0x8] sm:$0xff]
        %v2231 = vld [vmem:[#allocation4 + $0x10] sm:$0xff]
        %v2232 = vld [vmem:[#allocation4 + $0x18] sm:$0xff]
        %v2233 = vld [vmem:[#allocation4 + $0x20] sm:$0xff]
        %v2234 = vld [vmem:[#allocation4 + $0x28] sm:$0xff]
        %v2235 = vld [vmem:[#allocation4 + $0x30] sm:$0xff]
        %v2236 = vld [vmem:[#allocation4 + $0x38] sm:$0xff]
        %v2237 = vld [vmem:[#allocation4 + $0x40] sm:$0xff]
        %v2238 = vld [vmem:[#allocation4 + $0x48] sm:$0xff]
        %v2239 = vld [vmem:[#allocation4 + $0x50] sm:$0xff]
        %v2240 = vld [vmem:[#allocation4 + $0x58] sm:$0xff]
        %v2241 = vld [vmem:[#allocation4 + $0x60] sm:$0xff]
        %v2242 = vld [vmem:[#allocation4 + $0x68] sm:$0xff]
        %v2243 = vld [vmem:[#allocation4 + $0x70] sm:$0xff]
        %v2244 = vld [vmem:[#allocation4 + $0x78] sm:$0xff]
        %v2245 = vld [vmem:[#allocation4 + $0x80] sm:$0xff]
        %v2246 = vld [vmem:[#allocation4 + $0x88] sm:$0xff]
        %v2247 = vld [vmem:[#allocation4 + $0x90] sm:$0xff]
        %v2248 = vld [vmem:[#allocation4 + $0x98] sm:$0xff]
        %v2249 = vld [vmem:[#allocation4 + $0xa0] sm:$0xff]
        %v2250 = vld [vmem:[#allocation4 + $0xa8] sm:$0xff]
        %v2251 = vld [vmem:[#allocation4 + $0xb0] sm:$0xff]
        %v2252 = vld [vmem:[#allocation4 + $0xb8] sm:$0xff]
        %v2253 = vld [vmem:[#allocation4 + $0xc0] sm:$0xff]
        %v2254 = vld [vmem:[#allocation4 + $0xc8] sm:$0xff]
        %v2255 = vld [vmem:[#allocation4 + $0xd0] sm:$0xff]
        %v2256 = vld [vmem:[#allocation4 + $0xd8] sm:$0x1]
        %v2257 = vadd.f32 %v2230, %v2121
        %v2258 = vadd.f32 %v2231, %v2124
        %v2259 = vadd.f32 %v2232, %v2129
        %v2260 = vadd.f32 %v2233, %v2132
        %v2261 = vadd.f32 %v2234, %v2137
        %v2262 = vadd.f32 %v2235, %v2140
        %v2263 = vadd.f32 %v2236, %v2145
        %v2264 = vadd.f32 %v2237, %v2148
        %v2265 = vadd.f32 %v2238, %v2153
        %v2266 = vadd.f32 %v2239, %v2156
        %v2267 = vadd.f32 %v2240, %v2161
        %v2268 = vadd.f32 %v2241, %v2164
        %v2269 = vadd.f32 %v2242, %v2169
        %v2270 = vadd.f32 %v2243, %v2172
        %v2271 = vadd.f32 %v2244, %v2177
        %v2272 = vadd.f32 %v2245, %v2180
        %v2273 = vadd.f32 %v2246, %v2185
        %v2274 = vadd.f32 %v2247, %v2188
        %v2275 = vadd.f32 %v2248, %v2193
        %v2276 = vadd.f32 %v2249, %v2196
        %v2277 = vadd.f32 %v2250, %v2201
        %v2278 = vadd.f32 %v2251, %v2204
        %v2279 = vadd.f32 %v2252, %v2209
        %v2280 = vadd.f32 %v2253, %v2212
        %v2281 = vadd.f32 %v2254, %v2217
        %v2282 = vadd.f32 %v2255, %v2220
        %v2283 = vadd.f32 %v2256, %v2225
        %2284 = vst.msk [vmem:[#allocation4 + $0x8] sm:$0xff] %vm565, %v2257
        %2285 = vst.msk [vmem:[#allocation4 + $0x10] sm:$0xff] %vm565, %v2258
        %2286 = vst.msk [vmem:[#allocation4 + $0x18] sm:$0xff] %vm565, %v2259
        %2287 = vst.msk [vmem:[#allocation4 + $0x20] sm:$0xff] %vm565, %v2260
        %2288 = vst.msk [vmem:[#allocation4 + $0x28] sm:$0xff] %vm565, %v2261
        %2289 = vst.msk [vmem:[#allocation4 + $0x30] sm:$0xff] %vm565, %v2262
        %2290 = vst.msk [vmem:[#allocation4 + $0x38] sm:$0xff] %vm565, %v2263
        %2291 = vst.msk [vmem:[#allocation4 + $0x40] sm:$0xff] %vm565, %v2264
        %2292 = vst.msk [vmem:[#allocation4 + $0x48] sm:$0xff] %vm565, %v2265
        %2293 = vst.msk [vmem:[#allocation4 + $0x50] sm:$0xff] %vm565, %v2266
        %2294 = vst.msk [vmem:[#allocation4 + $0x58] sm:$0xff] %vm565, %v2267
        %2295 = vst.msk [vmem:[#allocation4 + $0x60] sm:$0xff] %vm565, %v2268
        %2296 = vst.msk [vmem:[#allocation4 + $0x68] sm:$0xff] %vm565, %v2269
        %2297 = vst.msk [vmem:[#allocation4 + $0x70] sm:$0xff] %vm565, %v2270
        %2298 = vst.msk [vmem:[#allocation4 + $0x78] sm:$0xff] %vm565, %v2271
        %2299 = vst.msk [vmem:[#allocation4 + $0x80] sm:$0xff] %vm565, %v2272
        %2300 = vst.msk [vmem:[#allocation4 + $0x88] sm:$0xff] %vm565, %v2273
        %2301 = vst.msk [vmem:[#allocation4 + $0x90] sm:$0xff] %vm565, %v2274
        %2302 = vst.msk [vmem:[#allocation4 + $0x98] sm:$0xff] %vm565, %v2275
        %2303 = vst.msk [vmem:[#allocation4 + $0xa0] sm:$0xff] %vm565, %v2276
        %2304 = vst.msk [vmem:[#allocation4 + $0xa8] sm:$0xff] %vm565, %v2277
        %2305 = vst.msk [vmem:[#allocation4 + $0xb0] sm:$0xff] %vm565, %v2278
        %2306 = vst.msk [vmem:[#allocation4 + $0xb8] sm:$0xff] %vm565, %v2279
        %2307 = vst.msk [vmem:[#allocation4 + $0xc0] sm:$0xff] %vm565, %v2280
        %2308 = vst.msk [vmem:[#allocation4 + $0xc8] sm:$0xff] %vm565, %v2281
        %2309 = vst.msk [vmem:[#allocation4 + $0xd0] sm:$0xff] %vm565, %v2282
        %2310 = vst.msk [vmem:[#allocation4 + $0xd8] sm:$0x1] %vm592, %v2283
        %v2311 = vld [vmem:[#allocation2 + $0xc] sm:$0xe]
        %v2312 = vld [vmem:[#allocation2 + $0x10] sm:$0xf]
        %v2313 = vld [vmem:[#allocation2 + $0x14] sm:$0xf]
        %v2314 = vld [vmem:[#allocation2 + $0x18] sm:$0xf]
        %v2315 = vld [vmem:[#allocation2 + $0x1c] sm:$0xf]
        %v2316 = vld [vmem:[#allocation2 + $0x20] sm:$0xf]
        %v2317 = vld [vmem:[#allocation2 + $0x24] sm:$0xf]
        %v2318 = vld [vmem:[#allocation2 + $0x28] sm:$0xf]
        %v2319 = vld [vmem:[#allocation2 + $0x2c] sm:$0xf]
        %v2320 = vld [vmem:[#allocation2 + $0x30] sm:$0xf]
        %v2321 = vld [vmem:[#allocation2 + $0x34] sm:$0xf]
        %v2322 = vld [vmem:[#allocation2 + $0x38] sm:$0xf]
        %v2323 = vld [vmem:[#allocation2 + $0x3c] sm:$0xf]
        %v2324 = vld [vmem:[#allocation2 + $0x40] sm:$0xf]
        %v2325 = vld [vmem:[#allocation2 + $0x44] sm:$0xf]
        %v2326 = vld [vmem:[#allocation2 + $0x48] sm:$0xf]
        %v2327 = vld [vmem:[#allocation2 + $0x4c] sm:$0xf]
        %v2328 = vld [vmem:[#allocation2 + $0x50] sm:$0xf]
        %v2329 = vld [vmem:[#allocation2 + $0x54] sm:$0xf]
        %v2330 = vld [vmem:[#allocation2 + $0x58] sm:$0xf]
        %v2331 = vld [vmem:[#allocation2 + $0x5c] sm:$0xf]
        %v2332 = vld [vmem:[#allocation2 + $0x60] sm:$0xf]
        %v2333 = vld [vmem:[#allocation2 + $0x64] sm:$0xf]
        %v2334 = vld [vmem:[#allocation2 + $0x68] sm:$0xf]
        %v2335 = vld [vmem:[#allocation2 + $0x6c] sm:$0xf]
        %v2336 = vld [vmem:[#allocation2 + $0x70] sm:$0xf]
        %v2337 = vld [vmem:[#allocation2 + $0x74] sm:$0x3]
        %s2338 = scalar_lea.vmem %s173, 10
        %v2339 = vld [vmem:[%s2338] sm:$0x3]
        %v2367 = vunpack.c.l.b16 %v2311
        %v2368 = vunpack.c.l.b16 %v2312
        %v2369 = vunpack.c.l.b16 %v2313
        %v2370 = vunpack.c.l.b16 %v2314
        %v2371 = vunpack.c.l.b16 %v2315
        %v2372 = vunpack.c.l.b16 %v2316
        %v2373 = vunpack.c.l.b16 %v2317
        %v2374 = vunpack.c.l.b16 %v2318
        %v2375 = vunpack.c.l.b16 %v2319
        %v2376 = vunpack.c.l.b16 %v2320
        %v2377 = vunpack.c.l.b16 %v2321
        %v2378 = vunpack.c.l.b16 %v2322
        %v2379 = vunpack.c.l.b16 %v2323
        %v2380 = vunpack.c.l.b16 %v2324
        %v2381 = vunpack.c.l.b16 %v2325
        %v2382 = vunpack.c.l.b16 %v2326
        %v2383 = vunpack.c.l.b16 %v2327
        %v2384 = vunpack.c.l.b16 %v2328
        %v2385 = vunpack.c.l.b16 %v2329
        %v2386 = vunpack.c.l.b16 %v2330
        %v2387 = vunpack.c.l.b16 %v2331
        %v2388 = vunpack.c.l.b16 %v2332
        %v2389 = vunpack.c.l.b16 %v2333
        %v2390 = vunpack.c.l.b16 %v2334
        %v2391 = vunpack.c.l.b16 %v2335
        %v2392 = vunpack.c.l.b16 %v2336
        %v2393 = vunpack.c.l.b16 %v2337
        %v2394 = vpack.c.b16 %v2368, %v2367
        %v2395 = vpack.c.b16 %v2370, %v2369
        %v2396 = vpack.c.b16 %v2372, %v2371
        %v2397 = vpack.c.b16 %v2374, %v2373
        %v2398 = vpack.c.b16 %v2376, %v2375
        %v2399 = vpack.c.b16 %v2378, %v2377
        %v2400 = vpack.c.b16 %v2380, %v2379
        %v2401 = vpack.c.b16 %v2382, %v2381
        %v2402 = vpack.c.b16 %v2384, %v2383
        %v2403 = vpack.c.b16 %v2386, %v2385
        %v2404 = vpack.c.b16 %v2388, %v2387
        %v2405 = vpack.c.b16 %v2390, %v2389
        %v2406 = vpack.c.b16 %v2392, %v2391
        %v2407 = vpack.c.b16 %v2393, %v2393
        %v2408 = vrot.slane %v2394, 1
        %v2409 = vrot.slane %v2395, 1
        %v2410 = vsel %vm1169, %v2408, %v2409
        %v2411 = vrot.slane %v2396, 1
        %v2412 = vsel %vm1169, %v2409, %v2411
        %v2413 = vrot.slane %v2397, 1
        %v2414 = vsel %vm1169, %v2411, %v2413
        %v2415 = vrot.slane %v2398, 1
        %v2416 = vsel %vm1169, %v2413, %v2415
        %v2417 = vrot.slane %v2399, 1
        %v2418 = vsel %vm1169, %v2415, %v2417
        %v2419 = vrot.slane %v2400, 1
        %v2420 = vsel %vm1169, %v2417, %v2419
        %v2421 = vrot.slane %v2401, 1
        %v2422 = vsel %vm1169, %v2419, %v2421
        %v2423 = vrot.slane %v2402, 1
        %v2424 = vsel %vm1169, %v2421, %v2423
        %v2425 = vrot.slane %v2403, 1
        %v2426 = vsel %vm1169, %v2423, %v2425
        %v2427 = vrot.slane %v2404, 1
        %v2428 = vsel %vm1169, %v2425, %v2427
        %v2429 = vrot.slane %v2405, 1
        %v2430 = vsel %vm1169, %v2427, %v2429
        %v2431 = vrot.slane %v2406, 1
        %v2432 = vsel %vm1169, %v2429, %v2431
        %v2433 = vrot.slane %v2407, 1
        %v2434 = vsel %vm1169, %v2431, %v2433
        %v2436 = vsel %vm374, %v2410, 0
        %v2439 = vsel %vm374, %v2412, 0
        %v2442 = vsel %vm374, %v2414, 0
        %v2445 = vsel %vm374, %v2416, 0
        %v2448 = vsel %vm374, %v2418, 0
        %v2451 = vsel %vm374, %v2420, 0
        %v2454 = vsel %vm374, %v2422, 0
        %v2457 = vsel %vm374, %v2424, 0
        %v2460 = vsel %vm374, %v2426, 0
        %v2463 = vsel %vm374, %v2428, 0
        %v2466 = vsel %vm374, %v2430, 0
        %v2469 = vsel %vm374, %v2432, 0
        %v2472 = vsel %vm374, %v2434, 0
        %v2475 = vsel %vm374, %v2433, 0
        %v2478 = vsel %vm417, %v2339, 0
        %2480 = vmatprep.subr.bf16.mxu0 0
        %2481 = vmatpush1.bf16.msra.mxu0 %v2478
        %2482 = vmatprep.subr.bf16.mxu0 0
        %2483 = vmatpush1.bf16.msra.mxu0 0
        %2484 = vmatprep.subr.bf16.mxu0 0
        %2485 = vmatpush1.bf16.msra.mxu0 0
        %2486 = vmatprep.subr.bf16.mxu0 0
        %2487 = vmatpush1.bf16.msra.mxu0 0
        %2488 = vmatprep.subr.bf16.mxu0 0
        %2489 = vmatpush1.bf16.msra.mxu0 0
        %2490 = vmatprep.subr.bf16.mxu0 0
        %2491 = vmatpush1.bf16.msra.mxu0 0
        %2492 = vmatprep.subr.bf16.mxu0 0
        %2493 = vmatpush1.bf16.msra.mxu0 0
        %2494 = vmatprep.subr.bf16.mxu0 0
        %2495 = vmatpush1.bf16.msra.mxu0 0
        %2496 = vmatprep.subr.bf16.mxu0 0
        %2497 = vmatpush1.bf16.msra.mxu0 0
        %2498 = vmatprep.subr.bf16.mxu0 0
        %2499 = vmatpush1.bf16.msra.mxu0 0
        %2500 = vmatprep.subr.bf16.mxu0 0
        %2501 = vmatpush1.bf16.msra.mxu0 0
        %2502 = vmatprep.subr.bf16.mxu0 0
        %2503 = vmatpush1.bf16.msra.mxu0 0
        %2504 = vmatprep.subr.bf16.mxu0 0
        %2505 = vmatpush1.bf16.msra.mxu0 0
        %2506 = vmatprep.subr.bf16.mxu0 0
        %2507 = vmatpush1.bf16.msra.mxu0 0
        %2508 = vmatprep.subr.bf16.mxu0 0
        %2509 = vmatpush1.bf16.msra.mxu0 0
        %2510 = vmatprep.subr.bf16.mxu0 0
        %2511 = vmatpush1.bf16.msra.mxu0 0
        %2512 = vmatprep.mubr.bf16.mxu0 0
        %2513 = vmatmul.mubr.bf16.gmra.mrb[0].mxu0 %v2436
        %v2514 = vpop.f32.mrb[0].mxu0
        %v2515 = vadd.f32 0.0, %v2514
        %v2516 = vpop.f32.mrb[0].mxu0
        %v2517 = vpop.f32.mrb[0].mxu0
        %v2518 = vadd.f32 0.0, %v2517
        %v2519 = vpop.f32.mrb[0].mxu0
        %2520 = vmatprep.mubr.bf16.mxu0 0
        %2521 = vmatmul.mubr.bf16.gmra.mrb[0].mxu0 %v2439
        %v2522 = vpop.f32.mrb[0].mxu0
        %v2523 = vadd.f32 0.0, %v2522
        %v2524 = vpop.f32.mrb[0].mxu0
        %v2525 = vpop.f32.mrb[0].mxu0
        %v2526 = vadd.f32 0.0, %v2525
        %v2527 = vpop.f32.mrb[0].mxu0
        %2528 = vmatprep.mubr.bf16.mxu0 0
        %2529 = vmatmul.mubr.bf16.gmra.mrb[0].mxu0 %v2442
        %v2530 = vpop.f32.mrb[0].mxu0
        %v2531 = vadd.f32 0.0, %v2530
        %v2532 = vpop.f32.mrb[0].mxu0
        %v2533 = vpop.f32.mrb[0].mxu0
        %v2534 = vadd.f32 0.0, %v2533
        %v2535 = vpop.f32.mrb[0].mxu0
        %2536 = vmatprep.mubr.bf16.mxu0 0
        %2537 = vmatmul.mubr.bf16.gmra.mrb[0].mxu0 %v2445
        %v2538 = vpop.f32.mrb[0].mxu0
        %v2539 = vadd.f32 0.0, %v2538
        %v2540 = vpop.f32.mrb[0].mxu0
        %v2541 = vpop.f32.mrb[0].mxu0
        %v2542 = vadd.f32 0.0, %v2541
        %v2543 = vpop.f32.mrb[0].mxu0
        %2544 = vmatprep.mubr.bf16.mxu0 0
        %2545 = vmatmul.mubr.bf16.gmra.mrb[0].mxu0 %v2448
        %v2546 = vpop.f32.mrb[0].mxu0
        %v2547 = vadd.f32 0.0, %v2546
        %v2548 = vpop.f32.mrb[0].mxu0
        %v2549 = vpop.f32.mrb[0].mxu0
        %v2550 = vadd.f32 0.0, %v2549
        %v2551 = vpop.f32.mrb[0].mxu0
        %2552 = vmatprep.mubr.bf16.mxu0 0
        %2553 = vmatmul.mubr.bf16.gmra.mrb[0].mxu0 %v2451
        %v2554 = vpop.f32.mrb[0].mxu0
        %v2555 = vadd.f32 0.0, %v2554
        %v2556 = vpop.f32.mrb[0].mxu0
        %v2557 = vpop.f32.mrb[0].mxu0
        %v2558 = vadd.f32 0.0, %v2557
        %v2559 = vpop.f32.mrb[0].mxu0
        %2560 = vmatprep.mubr.bf16.mxu0 0
        %2561 = vmatmul.mubr.bf16.gmra.mrb[0].mxu0 %v2454
        %v2562 = vpop.f32.mrb[0].mxu0
        %v2563 = vadd.f32 0.0, %v2562
        %v2564 = vpop.f32.mrb[0].mxu0
        %v2565 = vpop.f32.mrb[0].mxu0
        %v2566 = vadd.f32 0.0, %v2565
        %v2567 = vpop.f32.mrb[0].mxu0
        %2568 = vmatprep.mubr.bf16.mxu0 0
        %2569 = vmatmul.mubr.bf16.gmra.mrb[0].mxu0 %v2457
        %v2570 = vpop.f32.mrb[0].mxu0
        %v2571 = vadd.f32 0.0, %v2570
        %v2572 = vpop.f32.mrb[0].mxu0
        %v2573 = vpop.f32.mrb[0].mxu0
        %v2574 = vadd.f32 0.0, %v2573
        %v2575 = vpop.f32.mrb[0].mxu0
        %2576 = vmatprep.mubr.bf16.mxu0 0
        %2577 = vmatmul.mubr.bf16.gmra.mrb[0].mxu0 %v2460
        %v2578 = vpop.f32.mrb[0].mxu0
        %v2579 = vadd.f32 0.0, %v2578
        %v2580 = vpop.f32.mrb[0].mxu0
        %v2581 = vpop.f32.mrb[0].mxu0
        %v2582 = vadd.f32 0.0, %v2581
        %v2583 = vpop.f32.mrb[0].mxu0
        %2584 = vmatprep.mubr.bf16.mxu0 0
        %2585 = vmatmul.mubr.bf16.gmra.mrb[0].mxu0 %v2463
        %v2586 = vpop.f32.mrb[0].mxu0
        %v2587 = vadd.f32 0.0, %v2586
        %v2588 = vpop.f32.mrb[0].mxu0
        %v2589 = vpop.f32.mrb[0].mxu0
        %v2590 = vadd.f32 0.0, %v2589
        %v2591 = vpop.f32.mrb[0].mxu0
        %2592 = vmatprep.mubr.bf16.mxu0 0
        %2593 = vmatmul.mubr.bf16.gmra.mrb[0].mxu0 %v2466
        %v2594 = vpop.f32.mrb[0].mxu0
        %v2595 = vadd.f32 0.0, %v2594
        %v2596 = vpop.f32.mrb[0].mxu0
        %v2597 = vpop.f32.mrb[0].mxu0
        %v2598 = vadd.f32 0.0, %v2597
        %v2599 = vpop.f32.mrb[0].mxu0
        %2600 = vmatprep.mubr.bf16.mxu0 0
        %2601 = vmatmul.mubr.bf16.gmra.mrb[0].mxu0 %v2469
        %v2602 = vpop.f32.mrb[0].mxu0
        %v2603 = vadd.f32 0.0, %v2602
        %v2604 = vpop.f32.mrb[0].mxu0
        %v2605 = vpop.f32.mrb[0].mxu0
        %v2606 = vadd.f32 0.0, %v2605
        %v2607 = vpop.f32.mrb[0].mxu0
        %2608 = vmatprep.mubr.bf16.mxu0 0
        %2609 = vmatmul.mubr.bf16.gmra.mrb[0].mxu0 %v2472
        %v2610 = vpop.f32.mrb[0].mxu0
        %v2611 = vadd.f32 0.0, %v2610
        %v2612 = vpop.f32.mrb[0].mxu0
        %v2613 = vpop.f32.mrb[0].mxu0
        %v2614 = vadd.f32 0.0, %v2613
        %v2615 = vpop.f32.mrb[0].mxu0
        %2616 = vmatprep.mubr.bf16.mxu0 0
        %2617 = vmatmul.mubr.bf16.gmra.mrb[0].mxu0 %v2475
        %v2618 = vpop.f32.mrb[0].mxu0
        %v2619 = vadd.f32 0.0, %v2618
        %v2620 = vpop.f32.mrb[0].mxu0
        %v2621 = vpop.f32.mrb[0].mxu0
        %v2622 = vpop.f32.mrb[0].mxu0
        %2623 = vdwg.mxu0
        %v2624 = vld [vmem:[#allocation4 + $0x8] sm:$0xff]
        %v2625 = vld [vmem:[#allocation4 + $0x10] sm:$0xff]
        %v2626 = vld [vmem:[#allocation4 + $0x18] sm:$0xff]
        %v2627 = vld [vmem:[#allocation4 + $0x20] sm:$0xff]
        %v2628 = vld [vmem:[#allocation4 + $0x28] sm:$0xff]
        %v2629 = vld [vmem:[#allocation4 + $0x30] sm:$0xff]
        %v2630 = vld [vmem:[#allocation4 + $0x38] sm:$0xff]
        %v2631 = vld [vmem:[#allocation4 + $0x40] sm:$0xff]
        %v2632 = vld [vmem:[#allocation4 + $0x48] sm:$0xff]
        %v2633 = vld [vmem:[#allocation4 + $0x50] sm:$0xff]
        %v2634 = vld [vmem:[#allocation4 + $0x58] sm:$0xff]
        %v2635 = vld [vmem:[#allocation4 + $0x60] sm:$0xff]
        %v2636 = vld [vmem:[#allocation4 + $0x68] sm:$0xff]
        %v2637 = vld [vmem:[#allocation4 + $0x70] sm:$0xff]
        %v2638 = vld [vmem:[#allocation4 + $0x78] sm:$0xff]
        %v2639 = vld [vmem:[#allocation4 + $0x80] sm:$0xff]
        %v2640 = vld [vmem:[#allocation4 + $0x88] sm:$0xff]
        %v2641 = vld [vmem:[#allocation4 + $0x90] sm:$0xff]
        %v2642 = vld [vmem:[#allocation4 + $0x98] sm:$0xff]
        %v2643 = vld [vmem:[#allocation4 + $0xa0] sm:$0xff]
        %v2644 = vld [vmem:[#allocation4 + $0xa8] sm:$0xff]
        %v2645 = vld [vmem:[#allocation4 + $0xb0] sm:$0xff]
        %v2646 = vld [vmem:[#allocation4 + $0xb8] sm:$0xff]
        %v2647 = vld [vmem:[#allocation4 + $0xc0] sm:$0xff]
        %v2648 = vld [vmem:[#allocation4 + $0xc8] sm:$0xff]
        %v2649 = vld [vmem:[#allocation4 + $0xd0] sm:$0xff]
        %v2650 = vld [vmem:[#allocation4 + $0xd8] sm:$0x1]
        %v2651 = vadd.f32 %v2624, %v2515
        %v2652 = vadd.f32 %v2625, %v2518
        %v2653 = vadd.f32 %v2626, %v2523
        %v2654 = vadd.f32 %v2627, %v2526
        %v2655 = vadd.f32 %v2628, %v2531
        %v2656 = vadd.f32 %v2629, %v2534
        %v2657 = vadd.f32 %v2630, %v2539
        %v2658 = vadd.f32 %v2631, %v2542
        %v2659 = vadd.f32 %v2632, %v2547
        %v2660 = vadd.f32 %v2633, %v2550
        %v2661 = vadd.f32 %v2634, %v2555
        %v2662 = vadd.f32 %v2635, %v2558
        %v2663 = vadd.f32 %v2636, %v2563
        %v2664 = vadd.f32 %v2637, %v2566
        %v2665 = vadd.f32 %v2638, %v2571
        %v2666 = vadd.f32 %v2639, %v2574
        %v2667 = vadd.f32 %v2640, %v2579
        %v2668 = vadd.f32 %v2641, %v2582
        %v2669 = vadd.f32 %v2642, %v2587
        %v2670 = vadd.f32 %v2643, %v2590
        %v2671 = vadd.f32 %v2644, %v2595
        %v2672 = vadd.f32 %v2645, %v2598
        %v2673 = vadd.f32 %v2646, %v2603
        %v2674 = vadd.f32 %v2647, %v2606
        %v2675 = vadd.f32 %v2648, %v2611
        %v2676 = vadd.f32 %v2649, %v2614
        %v2677 = vadd.f32 %v2650, %v2619
        %2678 = vst.msk [vmem:[#allocation4 + $0x8] sm:$0xff] %vm565, %v2651
        %2679 = vst.msk [vmem:[#allocation4 + $0x10] sm:$0xff] %vm565, %v2652
        %2680 = vst.msk [vmem:[#allocation4 + $0x18] sm:$0xff] %vm565, %v2653
        %2681 = vst.msk [vmem:[#allocation4 + $0x20] sm:$0xff] %vm565, %v2654
        %2682 = vst.msk [vmem:[#allocation4 + $0x28] sm:$0xff] %vm565, %v2655
        %2683 = vst.msk [vmem:[#allocation4 + $0x30] sm:$0xff] %vm565, %v2656
        %2684 = vst.msk [vmem:[#allocation4 + $0x38] sm:$0xff] %vm565, %v2657
        %2685 = vst.msk [vmem:[#allocation4 + $0x40] sm:$0xff] %vm565, %v2658
        %2686 = vst.msk [vmem:[#allocation4 + $0x48] sm:$0xff] %vm565, %v2659
        %2687 = vst.msk [vmem:[#allocation4 + $0x50] sm:$0xff] %vm565, %v2660
        %2688 = vst.msk [vmem:[#allocation4 + $0x58] sm:$0xff] %vm565, %v2661
        %2689 = vst.msk [vmem:[#allocation4 + $0x60] sm:$0xff] %vm565, %v2662
        %2690 = vst.msk [vmem:[#allocation4 + $0x68] sm:$0xff] %vm565, %v2663
        %2691 = vst.msk [vmem:[#allocation4 + $0x70] sm:$0xff] %vm565, %v2664
        %2692 = vst.msk [vmem:[#allocation4 + $0x78] sm:$0xff] %vm565, %v2665
        %2693 = vst.msk [vmem:[#allocation4 + $0x80] sm:$0xff] %vm565, %v2666
        %2694 = vst.msk [vmem:[#allocation4 + $0x88] sm:$0xff] %vm565, %v2667
        %2695 = vst.msk [vmem:[#allocation4 + $0x90] sm:$0xff] %vm565, %v2668
        %2696 = vst.msk [vmem:[#allocation4 + $0x98] sm:$0xff] %vm565, %v2669
        %2697 = vst.msk [vmem:[#allocation4 + $0xa0] sm:$0xff] %vm565, %v2670
        %2698 = vst.msk [vmem:[#allocation4 + $0xa8] sm:$0xff] %vm565, %v2671
        %2699 = vst.msk [vmem:[#allocation4 + $0xb0] sm:$0xff] %vm565, %v2672
        %2700 = vst.msk [vmem:[#allocation4 + $0xb8] sm:$0xff] %vm565, %v2673
        %2701 = vst.msk [vmem:[#allocation4 + $0xc0] sm:$0xff] %vm565, %v2674
        %2702 = vst.msk [vmem:[#allocation4 + $0xc8] sm:$0xff] %vm565, %v2675
        %2703 = vst.msk [vmem:[#allocation4 + $0xd0] sm:$0xff] %vm565, %v2676
        %2704 = vst.msk [vmem:[#allocation4 + $0xd8] sm:$0x1] %vm592, %v2677
        %v2705 = vld [vmem:[#allocation2 + $0x18] sm:$0xf]
        %v2706 = vld [vmem:[#allocation2 + $0x1c] sm:$0xf]
        %v2707 = vld [vmem:[#allocation2 + $0x20] sm:$0xf]
        %v2708 = vld [vmem:[#allocation2 + $0x24] sm:$0xf]
        %v2709 = vld [vmem:[#allocation2 + $0x28] sm:$0xf]
        %v2710 = vld [vmem:[#allocation2 + $0x2c] sm:$0xf]
        %v2711 = vld [vmem:[#allocation2 + $0x30] sm:$0xf]
        %v2712 = vld [vmem:[#allocation2 + $0x34] sm:$0xf]
        %v2713 = vld [vmem:[#allocation2 + $0x38] sm:$0xf]
        %v2714 = vld [vmem:[#allocation2 + $0x3c] sm:$0xf]
        %v2715 = vld [vmem:[#allocation2 + $0x40] sm:$0xf]
        %v2716 = vld [vmem:[#allocation2 + $0x44] sm:$0xf]
        %v2717 = vld [vmem:[#allocation2 + $0x48] sm:$0xf]
        %v2718 = vld [vmem:[#allocation2 + $0x4c] sm:$0xf]
        %v2719 = vld [vmem:[#allocation2 + $0x50] sm:$0xf]
        %v2720 = vld [vmem:[#allocation2 + $0x54] sm:$0xf]
        %v2721 = vld [vmem:[#allocation2 + $0x58] sm:$0xf]
        %v2722 = vld [vmem:[#allocation2 + $0x5c] sm:$0xf]
        %v2723 = vld [vmem:[#allocation2 + $0x60] sm:$0xf]
        %v2724 = vld [vmem:[#allocation2 + $0x64] sm:$0xf]
        %v2725 = vld [vmem:[#allocation2 + $0x68] sm:$0xf]
        %v2726 = vld [vmem:[#allocation2 + $0x6c] sm:$0xf]
        %v2727 = vld [vmem:[#allocation2 + $0x70] sm:$0xf]
        %v2728 = vld [vmem:[#allocation2 + $0x74] sm:$0xf]
        %v2729 = vld [vmem:[#allocation2 + $0x78] sm:$0xf]
        %v2730 = vld [vmem:[#allocation2 + $0x7c] sm:$0xf]
        %v2731 = vld [vmem:[#allocation2 + $0x80] sm:$0x1]
        %s2732 = scalar_lea.vmem %s173, 12
        %v2733 = vld [vmem:[%s2732] sm:$0x3]
        %v2761 = vunpack.c.l.b16 %v2705
        %v2762 = vunpack.c.l.b16 %v2706
        %v2763 = vunpack.c.l.b16 %v2707
        %v2764 = vunpack.c.l.b16 %v2708
        %v2765 = vunpack.c.l.b16 %v2709
        %v2766 = vunpack.c.l.b16 %v2710
        %v2767 = vunpack.c.l.b16 %v2711
        %v2768 = vunpack.c.l.b16 %v2712
        %v2769 = vunpack.c.l.b16 %v2713
        %v2770 = vunpack.c.l.b16 %v2714
        %v2771 = vunpack.c.l.b16 %v2715
        %v2772 = vunpack.c.l.b16 %v2716
        %v2773 = vunpack.c.l.b16 %v2717
        %v2774 = vunpack.c.l.b16 %v2718
        %v2775 = vunpack.c.l.b16 %v2719
        %v2776 = vunpack.c.l.b16 %v2720
        %v2777 = vunpack.c.l.b16 %v2721
        %v2778 = vunpack.c.l.b16 %v2722
        %v2779 = vunpack.c.l.b16 %v2723
        %v2780 = vunpack.c.l.b16 %v2724
        %v2781 = vunpack.c.l.b16 %v2725
        %v2782 = vunpack.c.l.b16 %v2726
        %v2783 = vunpack.c.l.b16 %v2727
        %v2784 = vunpack.c.l.b16 %v2728
        %v2785 = vunpack.c.l.b16 %v2729
        %v2786 = vunpack.c.l.b16 %v2730
        %v2787 = vunpack.c.l.b16 %v2731
        %v2788 = vpack.c.b16 %v2762, %v2761
        %v2789 = vpack.c.b16 %v2764, %v2763
        %v2790 = vpack.c.b16 %v2766, %v2765
        %v2791 = vpack.c.b16 %v2768, %v2767
        %v2792 = vpack.c.b16 %v2770, %v2769
        %v2793 = vpack.c.b16 %v2772, %v2771
        %v2794 = vpack.c.b16 %v2774, %v2773
        %v2795 = vpack.c.b16 %v2776, %v2775
        %v2796 = vpack.c.b16 %v2778, %v2777
        %v2797 = vpack.c.b16 %v2780, %v2779
        %v2798 = vpack.c.b16 %v2782, %v2781
        %v2799 = vpack.c.b16 %v2784, %v2783
        %v2800 = vpack.c.b16 %v2786, %v2785
        %v2801 = vpack.c.b16 %v2787, %v2787
        %v2803 = vsel %vm374, %v2788, 0
        %v2806 = vsel %vm374, %v2789, 0
        %v2809 = vsel %vm374, %v2790, 0
        %v2812 = vsel %vm374, %v2791, 0
        %v2815 = vsel %vm374, %v2792, 0
        %v2818 = vsel %vm374, %v2793, 0
        %v2821 = vsel %vm374, %v2794, 0
        %v2824 = vsel %vm374, %v2795, 0
        %v2827 = vsel %vm374, %v2796, 0
        %v2830 = vsel %vm374, %v2797, 0
        %v2833 = vsel %vm374, %v2798, 0
        %v2836 = vsel %vm374, %v2799, 0
        %v2839 = vsel %vm374, %v2800, 0
        %v2842 = vsel %vm374, %v2801, 0
        %v2845 = vsel %vm417, %v2733, 0
        %2847 = vmatprep.subr.bf16.mxu0 0
        %2848 = vmatpush1.bf16.msra.mxu0 %v2845
        %2849 = vmatprep.subr.bf16.mxu0 0
        %2850 = vmatpush1.bf16.msra.mxu0 0
        %2851 = vmatprep.subr.bf16.mxu0 0
        %2852 = vmatpush1.bf16.msra.mxu0 0
        %2853 = vmatprep.subr.bf16.mxu0 0
        %2854 = vmatpush1.bf16.msra.mxu0 0
        %2855 = vmatprep.subr.bf16.mxu0 0
        %2856 = vmatpush1.bf16.msra.mxu0 0
        %2857 = vmatprep.subr.bf16.mxu0 0
        %2858 = vmatpush1.bf16.msra.mxu0 0
        %2859 = vmatprep.subr.bf16.mxu0 0
        %2860 = vmatpush1.bf16.msra.mxu0 0
        %2861 = vmatprep.subr.bf16.mxu0 0
        %2862 = vmatpush1.bf16.msra.mxu0 0
        %2863 = vmatprep.subr.bf16.mxu0 0
        %2864 = vmatpush1.bf16.msra.mxu0 0
        %2865 = vmatprep.subr.bf16.mxu0 0
        %2866 = vmatpush1.bf16.msra.mxu0 0
        %2867 = vmatprep.subr.bf16.mxu0 0
        %2868 = vmatpush1.bf16.msra.mxu0 0
        %2869 = vmatprep.subr.bf16.mxu0 0
        %2870 = vmatpush1.bf16.msra.mxu0 0
        %2871 = vmatprep.subr.bf16.mxu0 0
        %2872 = vmatpush1.bf16.msra.mxu0 0
        %2873 = vmatprep.subr.bf16.mxu0 0
        %2874 = vmatpush1.bf16.msra.mxu0 0
        %2875 = vmatprep.subr.bf16.mxu0 0
        %2876 = vmatpush1.bf16.msra.mxu0 0
        %2877 = vmatprep.subr.bf16.mxu0 0
        %2878 = vmatpush1.bf16.msra.mxu0 0
        %2879 = vmatprep.mubr.bf16.mxu0 0
        %2880 = vmatmul.mubr.bf16.gmra.mrb[0].mxu0 %v2803
        %v2881 = vpop.f32.mrb[0].mxu0
        %v2882 = vadd.f32 0.0, %v2881
        %v2883 = vpop.f32.mrb[0].mxu0
        %v2884 = vpop.f32.mrb[0].mxu0
        %v2885 = vadd.f32 0.0, %v2884
        %v2886 = vpop.f32.mrb[0].mxu0
        %2887 = vmatprep.mubr.bf16.mxu0 0
        %2888 = vmatmul.mubr.bf16.gmra.mrb[0].mxu0 %v2806
        %v2889 = vpop.f32.mrb[0].mxu0
        %v2890 = vadd.f32 0.0, %v2889
        %v2891 = vpop.f32.mrb[0].mxu0
        %v2892 = vpop.f32.mrb[0].mxu0
        %v2893 = vadd.f32 0.0, %v2892
        %v2894 = vpop.f32.mrb[0].mxu0
        %2895 = vmatprep.mubr.bf16.mxu0 0
        %2896 = vmatmul.mubr.bf16.gmra.mrb[0].mxu0 %v2809
        %v2897 = vpop.f32.mrb[0].mxu0
        %v2898 = vadd.f32 0.0, %v2897
        %v2899 = vpop.f32.mrb[0].mxu0
        %v2900 = vpop.f32.mrb[0].mxu0
        %v2901 = vadd.f32 0.0, %v2900
        %v2902 = vpop.f32.mrb[0].mxu0
        %2903 = vmatprep.mubr.bf16.mxu0 0
        %2904 = vmatmul.mubr.bf16.gmra.mrb[0].mxu0 %v2812
        %v2905 = vpop.f32.mrb[0].mxu0
        %v2906 = vadd.f32 0.0, %v2905
        %v2907 = vpop.f32.mrb[0].mxu0
        %v2908 = vpop.f32.mrb[0].mxu0
        %v2909 = vadd.f32 0.0, %v2908
        %v2910 = vpop.f32.mrb[0].mxu0
        %2911 = vmatprep.mubr.bf16.mxu0 0
        %2912 = vmatmul.mubr.bf16.gmra.mrb[0].mxu0 %v2815
        %v2913 = vpop.f32.mrb[0].mxu0
        %v2914 = vadd.f32 0.0, %v2913
        %v2915 = vpop.f32.mrb[0].mxu0
        %v2916 = vpop.f32.mrb[0].mxu0
        %v2917 = vadd.f32 0.0, %v2916
        %v2918 = vpop.f32.mrb[0].mxu0
        %2919 = vmatprep.mubr.bf16.mxu0 0
        %2920 = vmatmul.mubr.bf16.gmra.mrb[0].mxu0 %v2818
        %v2921 = vpop.f32.mrb[0].mxu0
        %v2922 = vadd.f32 0.0, %v2921
        %v2923 = vpop.f32.mrb[0].mxu0
        %v2924 = vpop.f32.mrb[0].mxu0
        %v2925 = vadd.f32 0.0, %v2924
        %v2926 = vpop.f32.mrb[0].mxu0
        %2927 = vmatprep.mubr.bf16.mxu0 0
        %2928 = vmatmul.mubr.bf16.gmra.mrb[0].mxu0 %v2821
        %v2929 = vpop.f32.mrb[0].mxu0
        %v2930 = vadd.f32 0.0, %v2929
        %v2931 = vpop.f32.mrb[0].mxu0
        %v2932 = vpop.f32.mrb[0].mxu0
        %v2933 = vadd.f32 0.0, %v2932
        %v2934 = vpop.f32.mrb[0].mxu0
        %2935 = vmatprep.mubr.bf16.mxu0 0
        %2936 = vmatmul.mubr.bf16.gmra.mrb[0].mxu0 %v2824
        %v2937 = vpop.f32.mrb[0].mxu0
        %v2938 = vadd.f32 0.0, %v2937
        %v2939 = vpop.f32.mrb[0].mxu0
        %v2940 = vpop.f32.mrb[0].mxu0
        %v2941 = vadd.f32 0.0, %v2940
        %v2942 = vpop.f32.mrb[0].mxu0
        %2943 = vmatprep.mubr.bf16.mxu0 0
        %2944 = vmatmul.mubr.bf16.gmra.mrb[0].mxu0 %v2827
        %v2945 = vpop.f32.mrb[0].mxu0
        %v2946 = vadd.f32 0.0, %v2945
        %v2947 = vpop.f32.mrb[0].mxu0
        %v2948 = vpop.f32.mrb[0].mxu0
        %v2949 = vadd.f32 0.0, %v2948
        %v2950 = vpop.f32.mrb[0].mxu0
        %2951 = vmatprep.mubr.bf16.mxu0 0
        %2952 = vmatmul.mubr.bf16.gmra.mrb[0].mxu0 %v2830
        %v2953 = vpop.f32.mrb[0].mxu0
        %v2954 = vadd.f32 0.0, %v2953
        %v2955 = vpop.f32.mrb[0].mxu0
        %v2956 = vpop.f32.mrb[0].mxu0
        %v2957 = vadd.f32 0.0, %v2956
        %v2958 = vpop.f32.mrb[0].mxu0
        %2959 = vmatprep.mubr.bf16.mxu0 0
        %2960 = vmatmul.mubr.bf16.gmra.mrb[0].mxu0 %v2833
        %v2961 = vpop.f32.mrb[0].mxu0
        %v2962 = vadd.f32 0.0, %v2961
        %v2963 = vpop.f32.mrb[0].mxu0
        %v2964 = vpop.f32.mrb[0].mxu0
        %v2965 = vadd.f32 0.0, %v2964
        %v2966 = vpop.f32.mrb[0].mxu0
        %2967 = vmatprep.mubr.bf16.mxu0 0
        %2968 = vmatmul.mubr.bf16.gmra.mrb[0].mxu0 %v2836
        %v2969 = vpop.f32.mrb[0].mxu0
        %v2970 = vadd.f32 0.0, %v2969
        %v2971 = vpop.f32.mrb[0].mxu0
        %v2972 = vpop.f32.mrb[0].mxu0
        %v2973 = vadd.f32 0.0, %v2972
        %v2974 = vpop.f32.mrb[0].mxu0
        %2975 = vmatprep.mubr.bf16.mxu0 0
        %2976 = vmatmul.mubr.bf16.gmra.mrb[0].mxu0 %v2839
        %v2977 = vpop.f32.mrb[0].mxu0
        %v2978 = vadd.f32 0.0, %v2977
        %v2979 = vpop.f32.mrb[0].mxu0
        %v2980 = vpop.f32.mrb[0].mxu0
        %v2981 = vadd.f32 0.0, %v2980
        %v2982 = vpop.f32.mrb[0].mxu0
        %2983 = vmatprep.mubr.bf16.mxu0 0
        %2984 = vmatmul.mubr.bf16.gmra.mrb[0].mxu0 %v2842
        %v2985 = vpop.f32.mrb[0].mxu0
        %v2986 = vadd.f32 0.0, %v2985
        %v2987 = vpop.f32.mrb[0].mxu0
        %v2988 = vpop.f32.mrb[0].mxu0
        %v2989 = vpop.f32.mrb[0].mxu0
        %2990 = vdwg.mxu0
        %v2991 = vld [vmem:[#allocation4 + $0x8] sm:$0xff]
        %v2992 = vld [vmem:[#allocation4 + $0x10] sm:$0xff]
        %v2993 = vld [vmem:[#allocation4 + $0x18] sm:$0xff]
        %v2994 = vld [vmem:[#allocation4 + $0x20] sm:$0xff]
        %v2995 = vld [vmem:[#allocation4 + $0x28] sm:$0xff]
        %v2996 = vld [vmem:[#allocation4 + $0x30] sm:$0xff]
        %v2997 = vld [vmem:[#allocation4 + $0x38] sm:$0xff]
        %v2998 = vld [vmem:[#allocation4 + $0x40] sm:$0xff]
        %v2999 = vld [vmem:[#allocation4 + $0x48] sm:$0xff]
        %v3000 = vld [vmem:[#allocation4 + $0x50] sm:$0xff]
        %v3001 = vld [vmem:[#allocation4 + $0x58] sm:$0xff]
        %v3002 = vld [vmem:[#allocation4 + $0x60] sm:$0xff]
        %v3003 = vld [vmem:[#allocation4 + $0x68] sm:$0xff]
        %v3004 = vld [vmem:[#allocation4 + $0x70] sm:$0xff]
        %v3005 = vld [vmem:[#allocation4 + $0x78] sm:$0xff]
        %v3006 = vld [vmem:[#allocation4 + $0x80] sm:$0xff]
        %v3007 = vld [vmem:[#allocation4 + $0x88] sm:$0xff]
        %v3008 = vld [vmem:[#allocation4 + $0x90] sm:$0xff]
        %v3009 = vld [vmem:[#allocation4 + $0x98] sm:$0xff]
        %v3010 = vld [vmem:[#allocation4 + $0xa0] sm:$0xff]
        %v3011 = vld [vmem:[#allocation4 + $0xa8] sm:$0xff]
        %v3012 = vld [vmem:[#allocation4 + $0xb0] sm:$0xff]
        %v3013 = vld [vmem:[#allocation4 + $0xb8] sm:$0xff]
        %v3014 = vld [vmem:[#allocation4 + $0xc0] sm:$0xff]
        %v3015 = vld [vmem:[#allocation4 + $0xc8] sm:$0xff]
        %v3016 = vld [vmem:[#allocation4 + $0xd0] sm:$0xff]
        %v3017 = vld [vmem:[#allocation4 + $0xd8] sm:$0x1]
        %v3018 = vadd.f32 %v2991, %v2882
        %v3019 = vadd.f32 %v2992, %v2885
        %v3020 = vadd.f32 %v2993, %v2890
        %v3021 = vadd.f32 %v2994, %v2893
        %v3022 = vadd.f32 %v2995, %v2898
        %v3023 = vadd.f32 %v2996, %v2901
        %v3024 = vadd.f32 %v2997, %v2906
        %v3025 = vadd.f32 %v2998, %v2909
        %v3026 = vadd.f32 %v2999, %v2914
        %v3027 = vadd.f32 %v3000, %v2917
        %v3028 = vadd.f32 %v3001, %v2922
        %v3029 = vadd.f32 %v3002, %v2925
        %v3030 = vadd.f32 %v3003, %v2930
        %v3031 = vadd.f32 %v3004, %v2933
        %v3032 = vadd.f32 %v3005, %v2938
        %v3033 = vadd.f32 %v3006, %v2941
        %v3034 = vadd.f32 %v3007, %v2946
        %v3035 = vadd.f32 %v3008, %v2949
        %v3036 = vadd.f32 %v3009, %v2954
        %v3037 = vadd.f32 %v3010, %v2957
        %v3038 = vadd.f32 %v3011, %v2962
        %v3039 = vadd.f32 %v3012, %v2965
        %v3040 = vadd.f32 %v3013, %v2970
        %v3041 = vadd.f32 %v3014, %v2973
        %v3042 = vadd.f32 %v3015, %v2978
        %v3043 = vadd.f32 %v3016, %v2981
        %v3044 = vadd.f32 %v3017, %v2986
        %3045 = vst.msk [vmem:[#allocation4 + $0x8] sm:$0xff] %vm565, %v3018
        %3046 = vst.msk [vmem:[#allocation4 + $0x10] sm:$0xff] %vm565, %v3019
        %3047 = vst.msk [vmem:[#allocation4 + $0x18] sm:$0xff] %vm565, %v3020
        %3048 = vst.msk [vmem:[#allocation4 + $0x20] sm:$0xff] %vm565, %v3021
        %3049 = vst.msk [vmem:[#allocation4 + $0x28] sm:$0xff] %vm565, %v3022
        %3050 = vst.msk [vmem:[#allocation4 + $0x30] sm:$0xff] %vm565, %v3023
        %3051 = vst.msk [vmem:[#allocation4 + $0x38] sm:$0xff] %vm565, %v3024
        %3052 = vst.msk [vmem:[#allocation4 + $0x40] sm:$0xff] %vm565, %v3025
        %3053 = vst.msk [vmem:[#allocation4 + $0x48] sm:$0xff] %vm565, %v3026
        %3054 = vst.msk [vmem:[#allocation4 + $0x50] sm:$0xff] %vm565, %v3027
        %3055 = vst.msk [vmem:[#allocation4 + $0x58] sm:$0xff] %vm565, %v3028
        %3056 = vst.msk [vmem:[#allocation4 + $0x60] sm:$0xff] %vm565, %v3029
        %3057 = vst.msk [vmem:[#allocation4 + $0x68] sm:$0xff] %vm565, %v3030
        %3058 = vst.msk [vmem:[#allocation4 + $0x70] sm:$0xff] %vm565, %v3031
        %3059 = vst.msk [vmem:[#allocation4 + $0x78] sm:$0xff] %vm565, %v3032
        %3060 = vst.msk [vmem:[#allocation4 + $0x80] sm:$0xff] %vm565, %v3033
        %3061 = vst.msk [vmem:[#allocation4 + $0x88] sm:$0xff] %vm565, %v3034
        %3062 = vst.msk [vmem:[#allocation4 + $0x90] sm:$0xff] %vm565, %v3035
        %3063 = vst.msk [vmem:[#allocation4 + $0x98] sm:$0xff] %vm565, %v3036
        %3064 = vst.msk [vmem:[#allocation4 + $0xa0] sm:$0xff] %vm565, %v3037
        %3065 = vst.msk [vmem:[#allocation4 + $0xa8] sm:$0xff] %vm565, %v3038
        %3066 = vst.msk [vmem:[#allocation4 + $0xb0] sm:$0xff] %vm565, %v3039
        %3067 = vst.msk [vmem:[#allocation4 + $0xb8] sm:$0xff] %vm565, %v3040
        %3068 = vst.msk [vmem:[#allocation4 + $0xc0] sm:$0xff] %vm565, %v3041
        %3069 = vst.msk [vmem:[#allocation4 + $0xc8] sm:$0xff] %vm565, %v3042
        %3070 = vst.msk [vmem:[#allocation4 + $0xd0] sm:$0xff] %vm565, %v3043
        %3071 = vst.msk [vmem:[#allocation4 + $0xd8] sm:$0x1] %vm592, %v3044
        %v3072 = vld [vmem:[#allocation2 + $0x18] sm:$0xf]
        %v3073 = vld [vmem:[#allocation2 + $0x1c] sm:$0xf]
        %v3074 = vld [vmem:[#allocation2 + $0x20] sm:$0xf]
        %v3075 = vld [vmem:[#allocation2 + $0x24] sm:$0xf]
        %v3076 = vld [vmem:[#allocation2 + $0x28] sm:$0xf]
        %v3077 = vld [vmem:[#allocation2 + $0x2c] sm:$0xf]
        %v3078 = vld [vmem:[#allocation2 + $0x30] sm:$0xf]
        %v3079 = vld [vmem:[#allocation2 + $0x34] sm:$0xf]
        %v3080 = vld [vmem:[#allocation2 + $0x38] sm:$0xf]
        %v3081 = vld [vmem:[#allocation2 + $0x3c] sm:$0xf]
        %v3082 = vld [vmem:[#allocation2 + $0x40] sm:$0xf]
        %v3083 = vld [vmem:[#allocation2 + $0x44] sm:$0xf]
        %v3084 = vld [vmem:[#allocation2 + $0x48] sm:$0xf]
        %v3085 = vld [vmem:[#allocation2 + $0x4c] sm:$0xf]
        %v3086 = vld [vmem:[#allocation2 + $0x50] sm:$0xf]
        %v3087 = vld [vmem:[#allocation2 + $0x54] sm:$0xf]
        %v3088 = vld [vmem:[#allocation2 + $0x58] sm:$0xf]
        %v3089 = vld [vmem:[#allocation2 + $0x5c] sm:$0xf]
        %v3090 = vld [vmem:[#allocation2 + $0x60] sm:$0xf]
        %v3091 = vld [vmem:[#allocation2 + $0x64] sm:$0xf]
        %v3092 = vld [vmem:[#allocation2 + $0x68] sm:$0xf]
        %v3093 = vld [vmem:[#allocation2 + $0x6c] sm:$0xf]
        %v3094 = vld [vmem:[#allocation2 + $0x70] sm:$0xf]
        %v3095 = vld [vmem:[#allocation2 + $0x74] sm:$0xf]
        %v3096 = vld [vmem:[#allocation2 + $0x78] sm:$0xf]
        %v3097 = vld [vmem:[#allocation2 + $0x7c] sm:$0xf]
        %v3098 = vld [vmem:[#allocation2 + $0x80] sm:$0x1]
        %s3099 = scalar_lea.vmem %s173, 14
        %v3100 = vld [vmem:[%s3099] sm:$0x3]
        %v3128 = vunpack.c.l.b16 %v3072
        %v3129 = vunpack.c.l.b16 %v3073
        %v3130 = vunpack.c.l.b16 %v3074
        %v3131 = vunpack.c.l.b16 %v3075
        %v3132 = vunpack.c.l.b16 %v3076
        %v3133 = vunpack.c.l.b16 %v3077
        %v3134 = vunpack.c.l.b16 %v3078
        %v3135 = vunpack.c.l.b16 %v3079
        %v3136 = vunpack.c.l.b16 %v3080
        %v3137 = vunpack.c.l.b16 %v3081
        %v3138 = vunpack.c.l.b16 %v3082
        %v3139 = vunpack.c.l.b16 %v3083
        %v3140 = vunpack.c.l.b16 %v3084
        %v3141 = vunpack.c.l.b16 %v3085
        %v3142 = vunpack.c.l.b16 %v3086
        %v3143 = vunpack.c.l.b16 %v3087
        %v3144 = vunpack.c.l.b16 %v3088
        %v3145 = vunpack.c.l.b16 %v3089
        %v3146 = vunpack.c.l.b16 %v3090
        %v3147 = vunpack.c.l.b16 %v3091
        %v3148 = vunpack.c.l.b16 %v3092
        %v3149 = vunpack.c.l.b16 %v3093
        %v3150 = vunpack.c.l.b16 %v3094
        %v3151 = vunpack.c.l.b16 %v3095
        %v3152 = vunpack.c.l.b16 %v3096
        %v3153 = vunpack.c.l.b16 %v3097
        %v3154 = vunpack.c.l.b16 %v3098
        %v3155 = vpack.c.b16 %v3129, %v3128
        %v3156 = vpack.c.b16 %v3131, %v3130
        %v3157 = vpack.c.b16 %v3133, %v3132
        %v3158 = vpack.c.b16 %v3135, %v3134
        %v3159 = vpack.c.b16 %v3137, %v3136
        %v3160 = vpack.c.b16 %v3139, %v3138
        %v3161 = vpack.c.b16 %v3141, %v3140
        %v3162 = vpack.c.b16 %v3143, %v3142
        %v3163 = vpack.c.b16 %v3145, %v3144
        %v3164 = vpack.c.b16 %v3147, %v3146
        %v3165 = vpack.c.b16 %v3149, %v3148
        %v3166 = vpack.c.b16 %v3151, %v3150
        %v3167 = vpack.c.b16 %v3153, %v3152
        %v3168 = vpack.c.b16 %v3154, %v3154
        %v3170 = vshrl.u32 %v3155, 16
        %v3172 = vshll.u32 %v3155, 16
        %v3174 = vrot.slane %v3172, 1
        %v3175 = vor.u32 %v3170, %v3174
        %v3177 = vshll.u32 %v3156, 16
        %v3179 = vrot.slane %v3177, 1
        %v3180 = vsel %vm691, %v3175, %v3179
        %v3181 = vshrl.u32 %v3156, 16
        %v3183 = vor.u32 %v3181, %v3179
        %v3185 = vshll.u32 %v3157, 16
        %v3187 = vrot.slane %v3185, 1
        %v3188 = vsel %vm691, %v3183, %v3187
        %v3189 = vshrl.u32 %v3157, 16
        %v3191 = vor.u32 %v3189, %v3187
        %v3193 = vshll.u32 %v3158, 16
        %v3195 = vrot.slane %v3193, 1
        %v3196 = vsel %vm691, %v3191, %v3195
        %v3197 = vshrl.u32 %v3158, 16
        %v3199 = vor.u32 %v3197, %v3195
        %v3201 = vshll.u32 %v3159, 16
        %v3203 = vrot.slane %v3201, 1
        %v3204 = vsel %vm691, %v3199, %v3203
        %v3205 = vshrl.u32 %v3159, 16
        %v3207 = vor.u32 %v3205, %v3203
        %v3209 = vshll.u32 %v3160, 16
        %v3211 = vrot.slane %v3209, 1
        %v3212 = vsel %vm691, %v3207, %v3211
        %v3213 = vshrl.u32 %v3160, 16
        %v3215 = vor.u32 %v3213, %v3211
        %v3217 = vshll.u32 %v3161, 16
        %v3219 = vrot.slane %v3217, 1
        %v3220 = vsel %vm691, %v3215, %v3219
        %v3221 = vshrl.u32 %v3161, 16
        %v3223 = vor.u32 %v3221, %v3219
        %v3225 = vshll.u32 %v3162, 16
        %v3227 = vrot.slane %v3225, 1
        %v3228 = vsel %vm691, %v3223, %v3227
        %v3229 = vshrl.u32 %v3162, 16
        %v3231 = vor.u32 %v3229, %v3227
        %v3233 = vshll.u32 %v3163, 16
        %v3235 = vrot.slane %v3233, 1
        %v3236 = vsel %vm691, %v3231, %v3235
        %v3237 = vshrl.u32 %v3163, 16
        %v3239 = vor.u32 %v3237, %v3235
        %v3241 = vshll.u32 %v3164, 16
        %v3243 = vrot.slane %v3241, 1
        %v3244 = vsel %vm691, %v3239, %v3243
        %v3245 = vshrl.u32 %v3164, 16
        %v3247 = vor.u32 %v3245, %v3243
        %v3249 = vshll.u32 %v3165, 16
        %v3251 = vrot.slane %v3249, 1
        %v3252 = vsel %vm691, %v3247, %v3251
        %v3253 = vshrl.u32 %v3165, 16
        %v3255 = vor.u32 %v3253, %v3251
        %v3257 = vshll.u32 %v3166, 16
        %v3259 = vrot.slane %v3257, 1
        %v3260 = vsel %vm691, %v3255, %v3259
        %v3261 = vshrl.u32 %v3166, 16
        %v3263 = vor.u32 %v3261, %v3259
        %v3265 = vshll.u32 %v3167, 16
        %v3267 = vrot.slane %v3265, 1
        %v3268 = vsel %vm691, %v3263, %v3267
        %v3269 = vshrl.u32 %v3167, 16
        %v3271 = vor.u32 %v3269, %v3267
        %v3273 = vshll.u32 %v3168, 16
        %v3275 = vrot.slane %v3273, 1
        %v3276 = vsel %vm691, %v3271, %v3275
        %v3277 = vshrl.u32 %v3168, 16
        %v3280 = vsel %vm374, %v3180, 0
        %v3283 = vsel %vm374, %v3188, 0
        %v3286 = vsel %vm374, %v3196, 0
        %v3289 = vsel %vm374, %v3204, 0
        %v3292 = vsel %vm374, %v3212, 0
        %v3295 = vsel %vm374, %v3220, 0
        %v3298 = vsel %vm374, %v3228, 0
        %v3301 = vsel %vm374, %v3236, 0
        %v3304 = vsel %vm374, %v3244, 0
        %v3307 = vsel %vm374, %v3252, 0
        %v3310 = vsel %vm374, %v3260, 0
        %v3313 = vsel %vm374, %v3268, 0
        %v3316 = vsel %vm374, %v3276, 0
        %v3319 = vsel %vm374, %v3277, 0
        %v3322 = vsel %vm417, %v3100, 0
        %3324 = vmatprep.subr.bf16.mxu0 0
        %3325 = vmatpush1.bf16.msra.mxu0 %v3322
        %3326 = vmatprep.subr.bf16.mxu0 0
        %3327 = vmatpush1.bf16.msra.mxu0 0
        %3328 = vmatprep.subr.bf16.mxu0 0
        %3329 = vmatpush1.bf16.msra.mxu0 0
        %3330 = vmatprep.subr.bf16.mxu0 0
        %3331 = vmatpush1.bf16.msra.mxu0 0
        %3332 = vmatprep.subr.bf16.mxu0 0
        %3333 = vmatpush1.bf16.msra.mxu0 0
        %3334 = vmatprep.subr.bf16.mxu0 0
        %3335 = vmatpush1.bf16.msra.mxu0 0
        %3336 = vmatprep.subr.bf16.mxu0 0
        %3337 = vmatpush1.bf16.msra.mxu0 0
        %3338 = vmatprep.subr.bf16.mxu0 0
        %3339 = vmatpush1.bf16.msra.mxu0 0
        %3340 = vmatprep.subr.bf16.mxu0 0
        %3341 = vmatpush1.bf16.msra.mxu0 0
        %3342 = vmatprep.subr.bf16.mxu0 0
        %3343 = vmatpush1.bf16.msra.mxu0 0
        %3344 = vmatprep.subr.bf16.mxu0 0
        %3345 = vmatpush1.bf16.msra.mxu0 0
        %3346 = vmatprep.subr.bf16.mxu0 0
        %3347 = vmatpush1.bf16.msra.mxu0 0
        %3348 = vmatprep.subr.bf16.mxu0 0
        %3349 = vmatpush1.bf16.msra.mxu0 0
        %3350 = vmatprep.subr.bf16.mxu0 0
        %3351 = vmatpush1.bf16.msra.mxu0 0
        %3352 = vmatprep.subr.bf16.mxu0 0
        %3353 = vmatpush1.bf16.msra.mxu0 0
        %3354 = vmatprep.subr.bf16.mxu0 0
        %3355 = vmatpush1.bf16.msra.mxu0 0
        %3356 = vmatprep.mubr.bf16.mxu0 0
        %3357 = vmatmul.mubr.bf16.gmra.mrb[0].mxu0 %v3280
        %v3358 = vpop.f32.mrb[0].mxu0
        %v3359 = vadd.f32 0.0, %v3358
        %v3360 = vpop.f32.mrb[0].mxu0
        %v3361 = vpop.f32.mrb[0].mxu0
        %v3362 = vadd.f32 0.0, %v3361
        %v3363 = vpop.f32.mrb[0].mxu0
        %3364 = vmatprep.mubr.bf16.mxu0 0
        %3365 = vmatmul.mubr.bf16.gmra.mrb[0].mxu0 %v3283
        %v3366 = vpop.f32.mrb[0].mxu0
        %v3367 = vadd.f32 0.0, %v3366
        %v3368 = vpop.f32.mrb[0].mxu0
        %v3369 = vpop.f32.mrb[0].mxu0
        %v3370 = vadd.f32 0.0, %v3369
        %v3371 = vpop.f32.mrb[0].mxu0
        %3372 = vmatprep.mubr.bf16.mxu0 0
        %3373 = vmatmul.mubr.bf16.gmra.mrb[0].mxu0 %v3286
        %v3374 = vpop.f32.mrb[0].mxu0
        %v3375 = vadd.f32 0.0, %v3374
        %v3376 = vpop.f32.mrb[0].mxu0
        %v3377 = vpop.f32.mrb[0].mxu0
        %v3378 = vadd.f32 0.0, %v3377
        %v3379 = vpop.f32.mrb[0].mxu0
        %3380 = vmatprep.mubr.bf16.mxu0 0
        %3381 = vmatmul.mubr.bf16.gmra.mrb[0].mxu0 %v3289
        %v3382 = vpop.f32.mrb[0].mxu0
        %v3383 = vadd.f32 0.0, %v3382
        %v3384 = vpop.f32.mrb[0].mxu0
        %v3385 = vpop.f32.mrb[0].mxu0
        %v3386 = vadd.f32 0.0, %v3385
        %v3387 = vpop.f32.mrb[0].mxu0
        %3388 = vmatprep.mubr.bf16.mxu0 0
        %3389 = vmatmul.mubr.bf16.gmra.mrb[0].mxu0 %v3292
        %v3390 = vpop.f32.mrb[0].mxu0
        %v3391 = vadd.f32 0.0, %v3390
        %v3392 = vpop.f32.mrb[0].mxu0
        %v3393 = vpop.f32.mrb[0].mxu0
        %v3394 = vadd.f32 0.0, %v3393
        %v3395 = vpop.f32.mrb[0].mxu0
        %3396 = vmatprep.mubr.bf16.mxu0 0
        %3397 = vmatmul.mubr.bf16.gmra.mrb[0].mxu0 %v3295
        %v3398 = vpop.f32.mrb[0].mxu0
        %v3399 = vadd.f32 0.0, %v3398
        %v3400 = vpop.f32.mrb[0].mxu0
        %v3401 = vpop.f32.mrb[0].mxu0
        %v3402 = vadd.f32 0.0, %v3401
        %v3403 = vpop.f32.mrb[0].mxu0
        %3404 = vmatprep.mubr.bf16.mxu0 0
        %3405 = vmatmul.mubr.bf16.gmra.mrb[0].mxu0 %v3298
        %v3406 = vpop.f32.mrb[0].mxu0
        %v3407 = vadd.f32 0.0, %v3406
        %v3408 = vpop.f32.mrb[0].mxu0
        %v3409 = vpop.f32.mrb[0].mxu0
        %v3410 = vadd.f32 0.0, %v3409
        %v3411 = vpop.f32.mrb[0].mxu0
        %3412 = vmatprep.mubr.bf16.mxu0 0
        %3413 = vmatmul.mubr.bf16.gmra.mrb[0].mxu0 %v3301
        %v3414 = vpop.f32.mrb[0].mxu0
        %v3415 = vadd.f32 0.0, %v3414
        %v3416 = vpop.f32.mrb[0].mxu0
        %v3417 = vpop.f32.mrb[0].mxu0
        %v3418 = vadd.f32 0.0, %v3417
        %v3419 = vpop.f32.mrb[0].mxu0
        %3420 = vmatprep.mubr.bf16.mxu0 0
        %3421 = vmatmul.mubr.bf16.gmra.mrb[0].mxu0 %v3304
        %v3422 = vpop.f32.mrb[0].mxu0
        %v3423 = vadd.f32 0.0, %v3422
        %v3424 = vpop.f32.mrb[0].mxu0
        %v3425 = vpop.f32.mrb[0].mxu0
        %v3426 = vadd.f32 0.0, %v3425
        %v3427 = vpop.f32.mrb[0].mxu0
        %3428 = vmatprep.mubr.bf16.mxu0 0
        %3429 = vmatmul.mubr.bf16.gmra.mrb[0].mxu0 %v3307
        %v3430 = vpop.f32.mrb[0].mxu0
        %v3431 = vadd.f32 0.0, %v3430
        %v3432 = vpop.f32.mrb[0].mxu0
        %v3433 = vpop.f32.mrb[0].mxu0
        %v3434 = vadd.f32 0.0, %v3433
        %v3435 = vpop.f32.mrb[0].mxu0
        %3436 = vmatprep.mubr.bf16.mxu0 0
        %3437 = vmatmul.mubr.bf16.gmra.mrb[0].mxu0 %v3310
        %v3438 = vpop.f32.mrb[0].mxu0
        %v3439 = vadd.f32 0.0, %v3438
        %v3440 = vpop.f32.mrb[0].mxu0
        %v3441 = vpop.f32.mrb[0].mxu0
        %v3442 = vadd.f32 0.0, %v3441
        %v3443 = vpop.f32.mrb[0].mxu0
        %3444 = vmatprep.mubr.bf16.mxu0 0
        %3445 = vmatmul.mubr.bf16.gmra.mrb[0].mxu0 %v3313
        %v3446 = vpop.f32.mrb[0].mxu0
        %v3447 = vadd.f32 0.0, %v3446
        %v3448 = vpop.f32.mrb[0].mxu0
        %v3449 = vpop.f32.mrb[0].mxu0
        %v3450 = vadd.f32 0.0, %v3449
        %v3451 = vpop.f32.mrb[0].mxu0
        %3452 = vmatprep.mubr.bf16.mxu0 0
        %3453 = vmatmul.mubr.bf16.gmra.mrb[0].mxu0 %v3316
        %v3454 = vpop.f32.mrb[0].mxu0
        %v3455 = vadd.f32 0.0, %v3454
        %v3456 = vpop.f32.mrb[0].mxu0
        %v3457 = vpop.f32.mrb[0].mxu0
        %v3458 = vadd.f32 0.0, %v3457
        %v3459 = vpop.f32.mrb[0].mxu0
        %3460 = vmatprep.mubr.bf16.mxu0 0
        %3461 = vmatmul.mubr.bf16.gmra.mrb[0].mxu0 %v3319
        %v3462 = vpop.f32.mrb[0].mxu0
        %v3463 = vadd.f32 0.0, %v3462
        %v3464 = vpop.f32.mrb[0].mxu0
        %v3465 = vpop.f32.mrb[0].mxu0
        %v3466 = vpop.f32.mrb[0].mxu0
        %3467 = vdwg.mxu0
        %v3468 = vld [vmem:[#allocation4 + $0x8] sm:$0xff]
        %v3469 = vld [vmem:[#allocation4 + $0x10] sm:$0xff]
        %v3470 = vld [vmem:[#allocation4 + $0x18] sm:$0xff]
        %v3471 = vld [vmem:[#allocation4 + $0x20] sm:$0xff]
        %v3472 = vld [vmem:[#allocation4 + $0x28] sm:$0xff]
        %v3473 = vld [vmem:[#allocation4 + $0x30] sm:$0xff]
        %v3474 = vld [vmem:[#allocation4 + $0x38] sm:$0xff]
        %v3475 = vld [vmem:[#allocation4 + $0x40] sm:$0xff]
        %v3476 = vld [vmem:[#allocation4 + $0x48] sm:$0xff]
        %v3477 = vld [vmem:[#allocation4 + $0x50] sm:$0xff]
        %v3478 = vld [vmem:[#allocation4 + $0x58] sm:$0xff]
        %v3479 = vld [vmem:[#allocation4 + $0x60] sm:$0xff]
        %v3480 = vld [vmem:[#allocation4 + $0x68] sm:$0xff]
        %v3481 = vld [vmem:[#allocation4 + $0x70] sm:$0xff]
        %v3482 = vld [vmem:[#allocation4 + $0x78] sm:$0xff]
        %v3483 = vld [vmem:[#allocation4 + $0x80] sm:$0xff]
        %v3484 = vld [vmem:[#allocation4 + $0x88] sm:$0xff]
        %v3485 = vld [vmem:[#allocation4 + $0x90] sm:$0xff]
        %v3486 = vld [vmem:[#allocation4 + $0x98] sm:$0xff]
        %v3487 = vld [vmem:[#allocation4 + $0xa0] sm:$0xff]
        %v3488 = vld [vmem:[#allocation4 + $0xa8] sm:$0xff]
        %v3489 = vld [vmem:[#allocation4 + $0xb0] sm:$0xff]
        %v3490 = vld [vmem:[#allocation4 + $0xb8] sm:$0xff]
        %v3491 = vld [vmem:[#allocation4 + $0xc0] sm:$0xff]
        %v3492 = vld [vmem:[#allocation4 + $0xc8] sm:$0xff]
        %v3493 = vld [vmem:[#allocation4 + $0xd0] sm:$0xff]
        %v3494 = vld [vmem:[#allocation4 + $0xd8] sm:$0x1]
        %v3495 = vadd.f32 %v3468, %v3359
        %v3496 = vadd.f32 %v3469, %v3362
        %v3497 = vadd.f32 %v3470, %v3367
        %v3498 = vadd.f32 %v3471, %v3370
        %v3499 = vadd.f32 %v3472, %v3375
        %v3500 = vadd.f32 %v3473, %v3378
        %v3501 = vadd.f32 %v3474, %v3383
        %v3502 = vadd.f32 %v3475, %v3386
        %v3503 = vadd.f32 %v3476, %v3391
        %v3504 = vadd.f32 %v3477, %v3394
        %v3505 = vadd.f32 %v3478, %v3399
        %v3506 = vadd.f32 %v3479, %v3402
        %v3507 = vadd.f32 %v3480, %v3407
        %v3508 = vadd.f32 %v3481, %v3410
        %v3509 = vadd.f32 %v3482, %v3415
        %v3510 = vadd.f32 %v3483, %v3418
        %v3511 = vadd.f32 %v3484, %v3423
        %v3512 = vadd.f32 %v3485, %v3426
        %v3513 = vadd.f32 %v3486, %v3431
        %v3514 = vadd.f32 %v3487, %v3434
        %v3515 = vadd.f32 %v3488, %v3439
        %v3516 = vadd.f32 %v3489, %v3442
        %v3517 = vadd.f32 %v3490, %v3447
        %v3518 = vadd.f32 %v3491, %v3450
        %v3519 = vadd.f32 %v3492, %v3455
        %v3520 = vadd.f32 %v3493, %v3458
        %v3521 = vadd.f32 %v3494, %v3463
        %3522 = vst.msk [vmem:[#allocation4 + $0x8] sm:$0xff] %vm565, %v3495
        %3523 = vst.msk [vmem:[#allocation4 + $0x10] sm:$0xff] %vm565, %v3496
        %3524 = vst.msk [vmem:[#allocation4 + $0x18] sm:$0xff] %vm565, %v3497
        %3525 = vst.msk [vmem:[#allocation4 + $0x20] sm:$0xff] %vm565, %v3498
        %3526 = vst.msk [vmem:[#allocation4 + $0x28] sm:$0xff] %vm565, %v3499
        %3527 = vst.msk [vmem:[#allocation4 + $0x30] sm:$0xff] %vm565, %v3500
        %3528 = vst.msk [vmem:[#allocation4 + $0x38] sm:$0xff] %vm565, %v3501
        %3529 = vst.msk [vmem:[#allocation4 + $0x40] sm:$0xff] %vm565, %v3502
        %3530 = vst.msk [vmem:[#allocation4 + $0x48] sm:$0xff] %vm565, %v3503
        %3531 = vst.msk [vmem:[#allocation4 + $0x50] sm:$0xff] %vm565, %v3504
        %3532 = vst.msk [vmem:[#allocation4 + $0x58] sm:$0xff] %vm565, %v3505
        %3533 = vst.msk [vmem:[#allocation4 + $0x60] sm:$0xff] %vm565, %v3506
        %3534 = vst.msk [vmem:[#allocation4 + $0x68] sm:$0xff] %vm565, %v3507
        %3535 = vst.msk [vmem:[#allocation4 + $0x70] sm:$0xff] %vm565, %v3508
        %3536 = vst.msk [vmem:[#allocation4 + $0x78] sm:$0xff] %vm565, %v3509
        %3537 = vst.msk [vmem:[#allocation4 + $0x80] sm:$0xff] %vm565, %v3510
        %3538 = vst.msk [vmem:[#allocation4 + $0x88] sm:$0xff] %vm565, %v3511
        %3539 = vst.msk [vmem:[#allocation4 + $0x90] sm:$0xff] %vm565, %v3512
        %3540 = vst.msk [vmem:[#allocation4 + $0x98] sm:$0xff] %vm565, %v3513
        %3541 = vst.msk [vmem:[#allocation4 + $0xa0] sm:$0xff] %vm565, %v3514
        %3542 = vst.msk [vmem:[#allocation4 + $0xa8] sm:$0xff] %vm565, %v3515
        %3543 = vst.msk [vmem:[#allocation4 + $0xb0] sm:$0xff] %vm565, %v3516
        %3544 = vst.msk [vmem:[#allocation4 + $0xb8] sm:$0xff] %vm565, %v3517
        %3545 = vst.msk [vmem:[#allocation4 + $0xc0] sm:$0xff] %vm565, %v3518
        %3546 = vst.msk [vmem:[#allocation4 + $0xc8] sm:$0xff] %vm565, %v3519
        %3547 = vst.msk [vmem:[#allocation4 + $0xd0] sm:$0xff] %vm565, %v3520
        %3548 = vst.msk [vmem:[#allocation4 + $0xd8] sm:$0x1] %vm592, %v3521
        %v3549 = vld [vmem:[#allocation2 + $0x18] sm:$0xe]
        %v3550 = vld [vmem:[#allocation2 + $0x1c] sm:$0xf]
        %v3551 = vld [vmem:[#allocation2 + $0x20] sm:$0xf]
        %v3552 = vld [vmem:[#allocation2 + $0x24] sm:$0xf]
        %v3553 = vld [vmem:[#allocation2 + $0x28] sm:$0xf]
        %v3554 = vld [vmem:[#allocation2 + $0x2c] sm:$0xf]
        %v3555 = vld [vmem:[#allocation2 + $0x30] sm:$0xf]
        %v3556 = vld [vmem:[#allocation2 + $0x34] sm:$0xf]
        %v3557 = vld [vmem:[#allocation2 + $0x38] sm:$0xf]
        %v3558 = vld [vmem:[#allocation2 + $0x3c] sm:$0xf]
        %v3559 = vld [vmem:[#allocation2 + $0x40] sm:$0xf]
        %v3560 = vld [vmem:[#allocation2 + $0x44] sm:$0xf]
        %v3561 = vld [vmem:[#allocation2 + $0x48] sm:$0xf]
        %v3562 = vld [vmem:[#allocation2 + $0x4c] sm:$0xf]
        %v3563 = vld [vmem:[#allocation2 + $0x50] sm:$0xf]
        %v3564 = vld [vmem:[#allocation2 + $0x54] sm:$0xf]
        %v3565 = vld [vmem:[#allocation2 + $0x58] sm:$0xf]
        %v3566 = vld [vmem:[#allocation2 + $0x5c] sm:$0xf]
        %v3567 = vld [vmem:[#allocation2 + $0x60] sm:$0xf]
        %v3568 = vld [vmem:[#allocation2 + $0x64] sm:$0xf]
        %v3569 = vld [vmem:[#allocation2 + $0x68] sm:$0xf]
        %v3570 = vld [vmem:[#allocation2 + $0x6c] sm:$0xf]
        %v3571 = vld [vmem:[#allocation2 + $0x70] sm:$0xf]
        %v3572 = vld [vmem:[#allocation2 + $0x74] sm:$0xf]
        %v3573 = vld [vmem:[#allocation2 + $0x78] sm:$0xf]
        %v3574 = vld [vmem:[#allocation2 + $0x7c] sm:$0xf]
        %v3575 = vld [vmem:[#allocation2 + $0x80] sm:$0x3]
        %s3576 = scalar_lea.vmem %s173, 16
        %v3577 = vld [vmem:[%s3576] sm:$0x3]
        %v3605 = vunpack.c.l.b16 %v3549
        %v3606 = vunpack.c.l.b16 %v3550
        %v3607 = vunpack.c.l.b16 %v3551
        %v3608 = vunpack.c.l.b16 %v3552
        %v3609 = vunpack.c.l.b16 %v3553
        %v3610 = vunpack.c.l.b16 %v3554
        %v3611 = vunpack.c.l.b16 %v3555
        %v3612 = vunpack.c.l.b16 %v3556
        %v3613 = vunpack.c.l.b16 %v3557
        %v3614 = vunpack.c.l.b16 %v3558
        %v3615 = vunpack.c.l.b16 %v3559
        %v3616 = vunpack.c.l.b16 %v3560
        %v3617 = vunpack.c.l.b16 %v3561
        %v3618 = vunpack.c.l.b16 %v3562
        %v3619 = vunpack.c.l.b16 %v3563
        %v3620 = vunpack.c.l.b16 %v3564
        %v3621 = vunpack.c.l.b16 %v3565
        %v3622 = vunpack.c.l.b16 %v3566
        %v3623 = vunpack.c.l.b16 %v3567
        %v3624 = vunpack.c.l.b16 %v3568
        %v3625 = vunpack.c.l.b16 %v3569
        %v3626 = vunpack.c.l.b16 %v3570
        %v3627 = vunpack.c.l.b16 %v3571
        %v3628 = vunpack.c.l.b16 %v3572
        %v3629 = vunpack.c.l.b16 %v3573
        %v3630 = vunpack.c.l.b16 %v3574
        %v3631 = vunpack.c.l.b16 %v3575
        %v3632 = vpack.c.b16 %v3606, %v3605
        %v3633 = vpack.c.b16 %v3608, %v3607
        %v3634 = vpack.c.b16 %v3610, %v3609
        %v3635 = vpack.c.b16 %v3612, %v3611
        %v3636 = vpack.c.b16 %v3614, %v3613
        %v3637 = vpack.c.b16 %v3616, %v3615
        %v3638 = vpack.c.b16 %v3618, %v3617
        %v3639 = vpack.c.b16 %v3620, %v3619
        %v3640 = vpack.c.b16 %v3622, %v3621
        %v3641 = vpack.c.b16 %v3624, %v3623
        %v3642 = vpack.c.b16 %v3626, %v3625
        %v3643 = vpack.c.b16 %v3628, %v3627
        %v3644 = vpack.c.b16 %v3630, %v3629
        %v3645 = vpack.c.b16 %v3631, %v3631
        %v3646 = vrot.slane %v3632, 1
        %v3647 = vrot.slane %v3633, 1
        %v3648 = vsel %vm1169, %v3646, %v3647
        %v3649 = vrot.slane %v3634, 1
        %v3650 = vsel %vm1169, %v3647, %v3649
        %v3651 = vrot.slane %v3635, 1
        %v3652 = vsel %vm1169, %v3649, %v3651
        %v3653 = vrot.slane %v3636, 1
        %v3654 = vsel %vm1169, %v3651, %v3653
        %v3655 = vrot.slane %v3637, 1
        %v3656 = vsel %vm1169, %v3653, %v3655
        %v3657 = vrot.slane %v3638, 1
        %v3658 = vsel %vm1169, %v3655, %v3657
        %v3659 = vrot.slane %v3639, 1
        %v3660 = vsel %vm1169, %v3657, %v3659
        %v3661 = vrot.slane %v3640, 1
        %v3662 = vsel %vm1169, %v3659, %v3661
        %v3663 = vrot.slane %v3641, 1
        %v3664 = vsel %vm1169, %v3661, %v3663
        %v3665 = vrot.slane %v3642, 1
        %v3666 = vsel %vm1169, %v3663, %v3665
        %v3667 = vrot.slane %v3643, 1
        %v3668 = vsel %vm1169, %v3665, %v3667
        %v3669 = vrot.slane %v3644, 1
        %v3670 = vsel %vm1169, %v3667, %v3669
        %v3671 = vrot.slane %v3645, 1
        %v3672 = vsel %vm1169, %v3669, %v3671
        %v3674 = vsel %vm374, %v3648, 0
        %v3677 = vsel %vm374, %v3650, 0
        %v3680 = vsel %vm374, %v3652, 0
        %v3683 = vsel %vm374, %v3654, 0
        %v3686 = vsel %vm374, %v3656, 0
        %v3689 = vsel %vm374, %v3658, 0
        %v3692 = vsel %vm374, %v3660, 0
        %v3695 = vsel %vm374, %v3662, 0
        %v3698 = vsel %vm374, %v3664, 0
        %v3701 = vsel %vm374, %v3666, 0
        %v3704 = vsel %vm374, %v3668, 0
        %v3707 = vsel %vm374, %v3670, 0
        %v3710 = vsel %vm374, %v3672, 0
        %v3713 = vsel %vm374, %v3671, 0
        %v3716 = vsel %vm417, %v3577, 0
        %3718 = vmatprep.subr.bf16.mxu0 0
        %3719 = vmatpush1.bf16.msra.mxu0 %v3716
        %3720 = vmatprep.subr.bf16.mxu0 0
        %3721 = vmatpush1.bf16.msra.mxu0 0
        %3722 = vmatprep.subr.bf16.mxu0 0
        %3723 = vmatpush1.bf16.msra.mxu0 0
        %3724 = vmatprep.subr.bf16.mxu0 0
        %3725 = vmatpush1.bf16.msra.mxu0 0
        %3726 = vmatprep.subr.bf16.mxu0 0
        %3727 = vmatpush1.bf16.msra.mxu0 0
        %3728 = vmatprep.subr.bf16.mxu0 0
        %3729 = vmatpush1.bf16.msra.mxu0 0
        %3730 = vmatprep.subr.bf16.mxu0 0
        %3731 = vmatpush1.bf16.msra.mxu0 0
        %3732 = vmatprep.subr.bf16.mxu0 0
        %3733 = vmatpush1.bf16.msra.mxu0 0
        %3734 = vmatprep.subr.bf16.mxu0 0
        %3735 = vmatpush1.bf16.msra.mxu0 0
        %3736 = vmatprep.subr.bf16.mxu0 0
        %3737 = vmatpush1.bf16.msra.mxu0 0
        %3738 = vmatprep.subr.bf16.mxu0 0
        %3739 = vmatpush1.bf16.msra.mxu0 0
        %3740 = vmatprep.subr.bf16.mxu0 0
        %3741 = vmatpush1.bf16.msra.mxu0 0
        %3742 = vmatprep.subr.bf16.mxu0 0
        %3743 = vmatpush1.bf16.msra.mxu0 0
        %3744 = vmatprep.subr.bf16.mxu0 0
        %3745 = vmatpush1.bf16.msra.mxu0 0
        %3746 = vmatprep.subr.bf16.mxu0 0
        %3747 = vmatpush1.bf16.msra.mxu0 0
        %3748 = vmatprep.subr.bf16.mxu0 0
        %3749 = vmatpush1.bf16.msra.mxu0 0
        %3750 = vmatprep.mubr.bf16.mxu0 0
        %3751 = vmatmul.mubr.bf16.gmra.mrb[0].mxu0 %v3674
        %v3752 = vpop.f32.mrb[0].mxu0
        %v3753 = vadd.f32 0.0, %v3752
        %v3754 = vpop.f32.mrb[0].mxu0
        %v3755 = vpop.f32.mrb[0].mxu0
        %v3756 = vadd.f32 0.0, %v3755
        %v3757 = vpop.f32.mrb[0].mxu0
        %3758 = vmatprep.mubr.bf16.mxu0 0
        %3759 = vmatmul.mubr.bf16.gmra.mrb[0].mxu0 %v3677
        %v3760 = vpop.f32.mrb[0].mxu0
        %v3761 = vadd.f32 0.0, %v3760
        %v3762 = vpop.f32.mrb[0].mxu0
        %v3763 = vpop.f32.mrb[0].mxu0
        %v3764 = vadd.f32 0.0, %v3763
        %v3765 = vpop.f32.mrb[0].mxu0
        %3766 = vmatprep.mubr.bf16.mxu0 0
        %3767 = vmatmul.mubr.bf16.gmra.mrb[0].mxu0 %v3680
        %v3768 = vpop.f32.mrb[0].mxu0
        %v3769 = vadd.f32 0.0, %v3768
        %v3770 = vpop.f32.mrb[0].mxu0
        %v3771 = vpop.f32.mrb[0].mxu0
        %v3772 = vadd.f32 0.0, %v3771
        %v3773 = vpop.f32.mrb[0].mxu0
        %3774 = vmatprep.mubr.bf16.mxu0 0
        %3775 = vmatmul.mubr.bf16.gmra.mrb[0].mxu0 %v3683
        %v3776 = vpop.f32.mrb[0].mxu0
        %v3777 = vadd.f32 0.0, %v3776
        %v3778 = vpop.f32.mrb[0].mxu0
        %v3779 = vpop.f32.mrb[0].mxu0
        %v3780 = vadd.f32 0.0, %v3779
        %v3781 = vpop.f32.mrb[0].mxu0
        %3782 = vmatprep.mubr.bf16.mxu0 0
        %3783 = vmatmul.mubr.bf16.gmra.mrb[0].mxu0 %v3686
        %v3784 = vpop.f32.mrb[0].mxu0
        %v3785 = vadd.f32 0.0, %v3784
        %v3786 = vpop.f32.mrb[0].mxu0
        %v3787 = vpop.f32.mrb[0].mxu0
        %v3788 = vadd.f32 0.0, %v3787
        %v3789 = vpop.f32.mrb[0].mxu0
        %3790 = vmatprep.mubr.bf16.mxu0 0
        %3791 = vmatmul.mubr.bf16.gmra.mrb[0].mxu0 %v3689
        %v3792 = vpop.f32.mrb[0].mxu0
        %v3793 = vadd.f32 0.0, %v3792
        %v3794 = vpop.f32.mrb[0].mxu0
        %v3795 = vpop.f32.mrb[0].mxu0
        %v3796 = vadd.f32 0.0, %v3795
        %v3797 = vpop.f32.mrb[0].mxu0
        %3798 = vmatprep.mubr.bf16.mxu0 0
        %3799 = vmatmul.mubr.bf16.gmra.mrb[0].mxu0 %v3692
        %v3800 = vpop.f32.mrb[0].mxu0
        %v3801 = vadd.f32 0.0, %v3800
        %v3802 = vpop.f32.mrb[0].mxu0
        %v3803 = vpop.f32.mrb[0].mxu0
        %v3804 = vadd.f32 0.0, %v3803
        %v3805 = vpop.f32.mrb[0].mxu0
        %3806 = vmatprep.mubr.bf16.mxu0 0
        %3807 = vmatmul.mubr.bf16.gmra.mrb[0].mxu0 %v3695
        %v3808 = vpop.f32.mrb[0].mxu0
        %v3809 = vadd.f32 0.0, %v3808
        %v3810 = vpop.f32.mrb[0].mxu0
        %v3811 = vpop.f32.mrb[0].mxu0
        %v3812 = vadd.f32 0.0, %v3811
        %v3813 = vpop.f32.mrb[0].mxu0
        %3814 = vmatprep.mubr.bf16.mxu0 0
        %3815 = vmatmul.mubr.bf16.gmra.mrb[0].mxu0 %v3698
        %v3816 = vpop.f32.mrb[0].mxu0
        %v3817 = vadd.f32 0.0, %v3816
        %v3818 = vpop.f32.mrb[0].mxu0
        %v3819 = vpop.f32.mrb[0].mxu0
        %v3820 = vadd.f32 0.0, %v3819
        %v3821 = vpop.f32.mrb[0].mxu0
        %3822 = vmatprep.mubr.bf16.mxu0 0
        %3823 = vmatmul.mubr.bf16.gmra.mrb[0].mxu0 %v3701
        %v3824 = vpop.f32.mrb[0].mxu0
        %v3825 = vadd.f32 0.0, %v3824
        %v3826 = vpop.f32.mrb[0].mxu0
        %v3827 = vpop.f32.mrb[0].mxu0
        %v3828 = vadd.f32 0.0, %v3827
        %v3829 = vpop.f32.mrb[0].mxu0
        %3830 = vmatprep.mubr.bf16.mxu0 0
        %3831 = vmatmul.mubr.bf16.gmra.mrb[0].mxu0 %v3704
        %v3832 = vpop.f32.mrb[0].mxu0
        %v3833 = vadd.f32 0.0, %v3832
        %v3834 = vpop.f32.mrb[0].mxu0
        %v3835 = vpop.f32.mrb[0].mxu0
        %v3836 = vadd.f32 0.0, %v3835
        %v3837 = vpop.f32.mrb[0].mxu0
        %3838 = vmatprep.mubr.bf16.mxu0 0
        %3839 = vmatmul.mubr.bf16.gmra.mrb[0].mxu0 %v3707
        %v3840 = vpop.f32.mrb[0].mxu0
        %v3841 = vadd.f32 0.0, %v3840
        %v3842 = vpop.f32.mrb[0].mxu0
        %v3843 = vpop.f32.mrb[0].mxu0
        %v3844 = vadd.f32 0.0, %v3843
        %v3845 = vpop.f32.mrb[0].mxu0
        %3846 = vmatprep.mubr.bf16.mxu0 0
        %3847 = vmatmul.mubr.bf16.gmra.mrb[0].mxu0 %v3710
        %v3848 = vpop.f32.mrb[0].mxu0
        %v3849 = vadd.f32 0.0, %v3848
        %v3850 = vpop.f32.mrb[0].mxu0
        %v3851 = vpop.f32.mrb[0].mxu0
        %v3852 = vadd.f32 0.0, %v3851
        %v3853 = vpop.f32.mrb[0].mxu0
        %3854 = vmatprep.mubr.bf16.mxu0 0
        %3855 = vmatmul.mubr.bf16.gmra.mrb[0].mxu0 %v3713
        %v3856 = vpop.f32.mrb[0].mxu0
        %v3857 = vadd.f32 0.0, %v3856
        %v3858 = vpop.f32.mrb[0].mxu0
        %v3859 = vpop.f32.mrb[0].mxu0
        %v3860 = vpop.f32.mrb[0].mxu0
        %3861 = vdwg.mxu0
        %v3862 = vld [vmem:[#allocation4 + $0x8] sm:$0xff]
        %v3863 = vld [vmem:[#allocation4 + $0x10] sm:$0xff]
        %v3864 = vld [vmem:[#allocation4 + $0x18] sm:$0xff]
        %v3865 = vld [vmem:[#allocation4 + $0x20] sm:$0xff]
        %v3866 = vld [vmem:[#allocation4 + $0x28] sm:$0xff]
        %v3867 = vld [vmem:[#allocation4 + $0x30] sm:$0xff]
        %v3868 = vld [vmem:[#allocation4 + $0x38] sm:$0xff]
        %v3869 = vld [vmem:[#allocation4 + $0x40] sm:$0xff]
        %v3870 = vld [vmem:[#allocation4 + $0x48] sm:$0xff]
        %v3871 = vld [vmem:[#allocation4 + $0x50] sm:$0xff]
        %v3872 = vld [vmem:[#allocation4 + $0x58] sm:$0xff]
        %v3873 = vld [vmem:[#allocation4 + $0x60] sm:$0xff]
        %v3874 = vld [vmem:[#allocation4 + $0x68] sm:$0xff]
        %v3875 = vld [vmem:[#allocation4 + $0x70] sm:$0xff]
        %v3876 = vld [vmem:[#allocation4 + $0x78] sm:$0xff]
        %v3877 = vld [vmem:[#allocation4 + $0x80] sm:$0xff]
        %v3878 = vld [vmem:[#allocation4 + $0x88] sm:$0xff]
        %v3879 = vld [vmem:[#allocation4 + $0x90] sm:$0xff]
        %v3880 = vld [vmem:[#allocation4 + $0x98] sm:$0xff]
        %v3881 = vld [vmem:[#allocation4 + $0xa0] sm:$0xff]
        %v3882 = vld [vmem:[#allocation4 + $0xa8] sm:$0xff]
        %v3883 = vld [vmem:[#allocation4 + $0xb0] sm:$0xff]
        %v3884 = vld [vmem:[#allocation4 + $0xb8] sm:$0xff]
        %v3885 = vld [vmem:[#allocation4 + $0xc0] sm:$0xff]
        %v3886 = vld [vmem:[#allocation4 + $0xc8] sm:$0xff]
        %v3887 = vld [vmem:[#allocation4 + $0xd0] sm:$0xff]
        %v3888 = vld [vmem:[#allocation4 + $0xd8] sm:$0x1]
        %v3889 = vadd.f32 %v3862, %v3753
        %v3890 = vadd.f32 %v3863, %v3756
        %v3891 = vadd.f32 %v3864, %v3761
        %v3892 = vadd.f32 %v3865, %v3764
        %v3893 = vadd.f32 %v3866, %v3769
        %v3894 = vadd.f32 %v3867, %v3772
        %v3895 = vadd.f32 %v3868, %v3777
        %v3896 = vadd.f32 %v3869, %v3780
        %v3897 = vadd.f32 %v3870, %v3785
        %v3898 = vadd.f32 %v3871, %v3788
        %v3899 = vadd.f32 %v3872, %v3793
        %v3900 = vadd.f32 %v3873, %v3796
        %v3901 = vadd.f32 %v3874, %v3801
        %v3902 = vadd.f32 %v3875, %v3804
        %v3903 = vadd.f32 %v3876, %v3809
        %v3904 = vadd.f32 %v3877, %v3812
        %v3905 = vadd.f32 %v3878, %v3817
        %v3906 = vadd.f32 %v3879, %v3820
        %v3907 = vadd.f32 %v3880, %v3825
        %v3908 = vadd.f32 %v3881, %v3828
        %v3909 = vadd.f32 %v3882, %v3833
        %v3910 = vadd.f32 %v3883, %v3836
        %v3911 = vadd.f32 %v3884, %v3841
        %v3912 = vadd.f32 %v3885, %v3844
        %v3913 = vadd.f32 %v3886, %v3849
        %v3914 = vadd.f32 %v3887, %v3852
        %v3915 = vadd.f32 %v3888, %v3857
        %3916 = vst.msk [vmem:[#allocation4 + $0x8] sm:$0xff] %vm565, %v3889
        %3917 = vst.msk [vmem:[#allocation4 + $0x10] sm:$0xff] %vm565, %v3890
        %3918 = vst.msk [vmem:[#allocation4 + $0x18] sm:$0xff] %vm565, %v3891
        %3919 = vst.msk [vmem:[#allocation4 + $0x20] sm:$0xff] %vm565, %v3892
        %3920 = vst.msk [vmem:[#allocation4 + $0x28] sm:$0xff] %vm565, %v3893
        %3921 = vst.msk [vmem:[#allocation4 + $0x30] sm:$0xff] %vm565, %v3894
        %3922 = vst.msk [vmem:[#allocation4 + $0x38] sm:$0xff] %vm565, %v3895
        %3923 = vst.msk [vmem:[#allocation4 + $0x40] sm:$0xff] %vm565, %v3896
        %3924 = vst.msk [vmem:[#allocation4 + $0x48] sm:$0xff] %vm565, %v3897
        %3925 = vst.msk [vmem:[#allocation4 + $0x50] sm:$0xff] %vm565, %v3898
        %3926 = vst.msk [vmem:[#allocation4 + $0x58] sm:$0xff] %vm565, %v3899
        %3927 = vst.msk [vmem:[#allocation4 + $0x60] sm:$0xff] %vm565, %v3900
        %3928 = vst.msk [vmem:[#allocation4 + $0x68] sm:$0xff] %vm565, %v3901
        %3929 = vst.msk [vmem:[#allocation4 + $0x70] sm:$0xff] %vm565, %v3902
        %3930 = vst.msk [vmem:[#allocation4 + $0x78] sm:$0xff] %vm565, %v3903
        %3931 = vst.msk [vmem:[#allocation4 + $0x80] sm:$0xff] %vm565, %v3904
        %3932 = vst.msk [vmem:[#allocation4 + $0x88] sm:$0xff] %vm565, %v3905
        %3933 = vst.msk [vmem:[#allocation4 + $0x90] sm:$0xff] %vm565, %v3906
        %3934 = vst.msk [vmem:[#allocation4 + $0x98] sm:$0xff] %vm565, %v3907
        %3935 = vst.msk [vmem:[#allocation4 + $0xa0] sm:$0xff] %vm565, %v3908
        %3936 = vst.msk [vmem:[#allocation4 + $0xa8] sm:$0xff] %vm565, %v3909
        %3937 = vst.msk [vmem:[#allocation4 + $0xb0] sm:$0xff] %vm565, %v3910
        %3938 = vst.msk [vmem:[#allocation4 + $0xb8] sm:$0xff] %vm565, %v3911
        %3939 = vst.msk [vmem:[#allocation4 + $0xc0] sm:$0xff] %vm565, %v3912
        %3940 = vst.msk [vmem:[#allocation4 + $0xc8] sm:$0xff] %vm565, %v3913
        %3941 = vst.msk [vmem:[#allocation4 + $0xd0] sm:$0xff] %vm565, %v3914
        %3942 = vst.msk [vmem:[#allocation4 + $0xd8] sm:$0x1] %vm592, %v3915
        %v3943 = vld [vmem:[%s176] sm:$0x1]
        %v3944 = vld [vmem:[#allocation4 + $0x9] sm:$0x1]
        %3945 = vst.msk [vmem:[#allocation4 + $0x7] sm:$0x1] %vm592, %v3944
        %s3946 = scalar_lea.vmem [#allocation4], 7
        %v3947 = vld [vmem:[%s3946] ss:$2 sm:$0xff]
        %v3948 = vmul.f32 %v3947, 0.25
        %s3949 = scalar_lea.vmem [#allocation4], 8
        %v3950 = vld [vmem:[%s3949] ss:$2 sm:$0xff]
        %v3951 = vmul.f32 %v3950, 0.5
        %v3952 = vadd.f32 %v3948, %v3951
        %s3953 = scalar_lea.vmem [#allocation4], 9
        %v3954 = vld [vmem:[%s3953] ss:$2 sm:$0xff]
        %v3955 = vmul.f32 %v3954, 0.25
        %v3956 = vadd.f32 %v3952, %v3955
        %3957 = vst.msk [vmem:[#allocation5] sm:$0xff] %vm565, %v3956
        %v3958 = vld [vmem:[#allocation4 + $0x21] sm:$0x1]
        %3959 = vst.msk [vmem:[#allocation4 + $0x1f] sm:$0x1] %vm592, %v3958
        %s3960 = scalar_lea.vmem [#allocation4], 31
        %v3961 = vld [vmem:[%s3960] ss:$2 sm:$0xff]
        %v3962 = vmul.f32 %v3961, 0.25
        %s3963 = scalar_lea.vmem [#allocation4], 32
        %v3964 = vld [vmem:[%s3963] ss:$2 sm:$0xff]
        %v3965 = vmul.f32 %v3964, 0.5
        %v3966 = vadd.f32 %v3962, %v3965
        %s3967 = scalar_lea.vmem [#allocation4], 33
        %v3968 = vld [vmem:[%s3967] ss:$2 sm:$0xff]
        %v3969 = vmul.f32 %v3968, 0.25
        %v3970 = vadd.f32 %v3966, %v3969
        %s3971 = scalar_lea.vmem [#allocation5], 8
        %3972 = vst.msk [vmem:[%s3971] sm:$0xff] %vm565, %v3970
        %v3973 = vld [vmem:[#allocation4 + $0x39] sm:$0x1]
        %3974 = vst.msk [vmem:[#allocation4 + $0x37] sm:$0x1] %vm592, %v3973
        %s3975 = scalar_lea.vmem [#allocation4], 55
        %v3976 = vld [vmem:[%s3975] ss:$2 sm:$0xff]
        %v3977 = vmul.f32 %v3976, 0.25
        %s3978 = scalar_lea.vmem [#allocation4], 56
        %v3979 = vld [vmem:[%s3978] ss:$2 sm:$0xff]
        %v3980 = vmul.f32 %v3979, 0.5
        %v3981 = vadd.f32 %v3977, %v3980
        %s3982 = scalar_lea.vmem [#allocation4], 57
        %v3983 = vld [vmem:[%s3982] ss:$2 sm:$0xff]
        %v3984 = vmul.f32 %v3983, 0.25
        %v3985 = vadd.f32 %v3981, %v3984
        %s3986 = scalar_lea.vmem [#allocation5], 16
        %3987 = vst.msk [vmem:[%s3986] sm:$0xff] %vm565, %v3985
        %v3988 = vld [vmem:[#allocation4 + $0x51] sm:$0x1]
        %3989 = vst.msk [vmem:[#allocation4 + $0x4f] sm:$0x1] %vm592, %v3988
        %s3990 = scalar_lea.vmem [#allocation4], 79
        %v3991 = vld [vmem:[%s3990] ss:$2 sm:$0xff]
        %v3992 = vmul.f32 %v3991, 0.25
        %s3993 = scalar_lea.vmem [#allocation4], 80
        %v3994 = vld [vmem:[%s3993] ss:$2 sm:$0xff]
        %v3995 = vmul.f32 %v3994, 0.5
        %v3996 = vadd.f32 %v3992, %v3995
        %s3997 = scalar_lea.vmem [#allocation4], 81
        %v3998 = vld [vmem:[%s3997] ss:$2 sm:$0xff]
        %v3999 = vmul.f32 %v3998, 0.25
        %v4000 = vadd.f32 %v3996, %v3999
        %s4001 = scalar_lea.vmem [#allocation5], 24
        %4002 = vst.msk [vmem:[%s4001] sm:$0xff] %vm565, %v4000
        %v4003 = vld [vmem:[#allocation4 + $0x69] sm:$0x1]
        %4004 = vst.msk [vmem:[#allocation4 + $0x67] sm:$0x1] %vm592, %v4003
        %s4005 = scalar_lea.vmem [#allocation4], 103
        %v4006 = vld [vmem:[%s4005] ss:$2 sm:$0xff]
        %v4007 = vmul.f32 %v4006, 0.25
        %s4008 = scalar_lea.vmem [#allocation4], 104
        %v4009 = vld [vmem:[%s4008] ss:$2 sm:$0xff]
        %v4010 = vmul.f32 %v4009, 0.5
        %v4011 = vadd.f32 %v4007, %v4010
        %s4012 = scalar_lea.vmem [#allocation4], 105
        %v4013 = vld [vmem:[%s4012] ss:$2 sm:$0xff]
        %v4014 = vmul.f32 %v4013, 0.25
        %v4015 = vadd.f32 %v4011, %v4014
        %s4016 = scalar_lea.vmem [#allocation5], 32
        %4017 = vst.msk [vmem:[%s4016] sm:$0xff] %vm565, %v4015
        %v4018 = vld [vmem:[#allocation4 + $0x81] sm:$0x1]
        %4019 = vst.msk [vmem:[#allocation4 + $0x7f] sm:$0x1] %vm592, %v4018
        %s4020 = scalar_lea.vmem [#allocation4], 127
        %v4021 = vld [vmem:[%s4020] ss:$2 sm:$0xff]
        %v4022 = vmul.f32 %v4021, 0.25
        %s4023 = scalar_lea.vmem [#allocation4], 128
        %v4024 = vld [vmem:[%s4023] ss:$2 sm:$0xff]
        %v4025 = vmul.f32 %v4024, 0.5
        %v4026 = vadd.f32 %v4022, %v4025
        %s4027 = scalar_lea.vmem [#allocation4], 129
        %v4028 = vld [vmem:[%s4027] ss:$2 sm:$0xff]
        %v4029 = vmul.f32 %v4028, 0.25
        %v4030 = vadd.f32 %v4026, %v4029
        %s4031 = scalar_lea.vmem [#allocation5], 40
        %4032 = vst.msk [vmem:[%s4031] sm:$0xff] %vm565, %v4030
        %v4033 = vld [vmem:[#allocation4 + $0x99] sm:$0x1]
        %4034 = vst.msk [vmem:[#allocation4 + $0x97] sm:$0x1] %vm592, %v4033
        %s4035 = scalar_lea.vmem [#allocation4], 151
        %v4036 = vld [vmem:[%s4035] ss:$2 sm:$0xff]
        %v4037 = vmul.f32 %v4036, 0.25
        %s4038 = scalar_lea.vmem [#allocation4], 152
        %v4039 = vld [vmem:[%s4038] ss:$2 sm:$0xff]
        %v4040 = vmul.f32 %v4039, 0.5
        %v4041 = vadd.f32 %v4037, %v4040
        %s4042 = scalar_lea.vmem [#allocation4], 153
        %v4043 = vld [vmem:[%s4042] ss:$2 sm:$0xff]
        %v4044 = vmul.f32 %v4043, 0.25
        %v4045 = vadd.f32 %v4041, %v4044
        %s4046 = scalar_lea.vmem [#allocation5], 48
        %4047 = vst.msk [vmem:[%s4046] sm:$0xff] %vm565, %v4045
        %v4048 = vld [vmem:[#allocation4 + $0xb1] sm:$0x1]
        %4049 = vst.msk [vmem:[#allocation4 + $0xaf] sm:$0x1] %vm592, %v4048
        %s4050 = scalar_lea.vmem [#allocation4], 175
        %v4051 = vld [vmem:[%s4050] ss:$2 sm:$0xff]
        %v4052 = vmul.f32 %v4051, 0.25
        %s4053 = scalar_lea.vmem [#allocation4], 176
        %v4054 = vld [vmem:[%s4053] ss:$2 sm:$0xff]
        %v4055 = vmul.f32 %v4054, 0.5
        %v4056 = vadd.f32 %v4052, %v4055
        %s4057 = scalar_lea.vmem [#allocation4], 177
        %v4058 = vld [vmem:[%s4057] ss:$2 sm:$0xff]
        %v4059 = vmul.f32 %v4058, 0.25
        %v4060 = vadd.f32 %v4056, %v4059
        %s4061 = scalar_lea.vmem [#allocation5], 56
        %4062 = vst.msk [vmem:[%s4061] sm:$0xff] %vm565, %v4060
        %v4063 = vld [vmem:[#allocation4 + $0xc9] sm:$0x1]
        %4064 = vst.msk [vmem:[#allocation4 + $0xc7] sm:$0x1] %vm592, %v4063
        %s4065 = scalar_lea.vmem [#allocation4], 199
        %v4066 = vld [vmem:[%s4065] ss:$2 sm:$0xff]
        %v4067 = vmul.f32 %v4066, 0.25
        %s4068 = scalar_lea.vmem [#allocation4], 200
        %v4069 = vld [vmem:[%s4068] ss:$2 sm:$0xff]
        %v4070 = vmul.f32 %v4069, 0.5
        %v4071 = vadd.f32 %v4067, %v4070
        %s4072 = scalar_lea.vmem [#allocation4], 201
        %v4073 = vld [vmem:[%s4072] ss:$2 sm:$0xff]
        %v4074 = vmul.f32 %v4073, 0.25
        %v4075 = vadd.f32 %v4071, %v4074
        %s4076 = scalar_lea.vmem [#allocation5], 64
        %4077 = vst.msk [vmem:[%s4076] sm:$0xff] %vm565, %v4075
        %p4078 = scmp.eq.s32.totalorder %s23, 0
        // Predicated region
        $region70: #{tpu_custom_call.1} parent=27 // pred_check
          %p4079 = pneg %p4078
        $region71: #{tpu_custom_call.1} parent=27 // pred_check_branch
          %4081 = sbr.rel (%p4079) target = $region73
        $region72: #{tpu_custom_call.1} parent=27 // pred_region
          %v4082 = vld [vmem:[%s3986] sm:$0xff]
          %4083 = vst.msk [vmem:[#allocation5] sm:$0xff] %vm565, %v4082
        $region73: #{tpu_custom_call.1} parent=27 // pred_fallthru
          _
        %v4084 = vld [vmem:[#allocation5] sm:$0xff]
        %v4085 = vld [vmem:[#allocation5 + $0x10] sm:$0xff]
        %v4086 = vld [vmem:[#allocation5 + $0x20] sm:$0xff]
        %v4087 = vld [vmem:[#allocation5 + $0x30] sm:$0xff]
        %v4088 = vmul.f32 %v4084, 0.25
        %v4089 = vmul.f32 %v4085, 0.25
        %v4090 = vmul.f32 %v4086, 0.25
        %v4091 = vmul.f32 %v4087, 0.25
        %v4092 = vld [vmem:[%s3971] sm:$0xff]
        %v4093 = vld [vmem:[%s3971 + $0x10] sm:$0xff]
        %v4094 = vld [vmem:[%s3971 + $0x20] sm:$0xff]
        %v4095 = vld [vmem:[%s3971 + $0x30] sm:$0xff]
        %v4096 = vmul.f32 %v4092, 0.5
        %v4097 = vmul.f32 %v4093, 0.5
        %v4098 = vmul.f32 %v4094, 0.5
        %v4099 = vmul.f32 %v4095, 0.5
        %v4100 = vadd.f32 %v4088, %v4096
        %v4101 = vadd.f32 %v4089, %v4097
        %v4102 = vadd.f32 %v4090, %v4098
        %v4103 = vadd.f32 %v4091, %v4099
        %v4104 = vld [vmem:[%s3986] sm:$0xff]
        %v4105 = vld [vmem:[%s3986 + $0x10] sm:$0xff]
        %v4106 = vld [vmem:[%s3986 + $0x20] sm:$0xff]
        %v4107 = vld [vmem:[%s3986 + $0x30] sm:$0xff]
        %v4108 = vmul.f32 %v4104, 0.25
        %v4109 = vmul.f32 %v4105, 0.25
        %v4110 = vmul.f32 %v4106, 0.25
        %v4111 = vmul.f32 %v4107, 0.25
        %v4112 = vadd.f32 %v4100, %v4108
        %v4113 = vadd.f32 %v4101, %v4109
        %v4114 = vadd.f32 %v4102, %v4110
        %v4115 = vadd.f32 %v4103, %v4111
        %v4117 = vlaneseq
        %v4118 = vshrl.u32 %v4117, 7
        %v4119 = vsub.s32 0, %v4118
        %v4120 = vrot.slane %v3943, %v4119
        %v4122 = vadd.f32 %v4112, %v4120
        %v4123 = vadd.f32 %v4113, %v4120
        %v4124 = vadd.f32 %v4114, %v4120
        %v4125 = vadd.f32 %v4115, %v4120
        %v4126 = vmax.f32 %v4122, 0.0
        %v4127 = vmax.f32 %v4123, 0.0
        %v4128 = vmax.f32 %v4124, 0.0
        %v4129 = vmax.f32 %v4125, 0.0
        %4130 = vst.msk [vmem:[%s169] sm:$0xff] %vm565, %v4126
        %4131 = vst.msk [vmem:[%s169 + $0x8] sm:$0xff] %vm565, %v4127
        %4132 = vst.msk [vmem:[%s169 + $0x10] sm:$0xff] %vm565, %v4128
        %4133 = vst.msk [vmem:[%s169 + $0x18] sm:$0xff] %vm565, %v4129
        %s4134 = sand.u32 %s100, 1
        %s4135 = scalar_lea.sflag [#allocation7], %s4134
        %s4136 = sand.u32 %s100, 1
        %s4137 = smul.addr %s4136, 32
        %s4138 = scalar_lea.vmem [#allocation6], %s4137
        // Predicated region
        $region74: #{tpu_custom_call.1} parent=27 // pred_check
          %p4139 = pneg %p110
        $region75: #{tpu_custom_call.1} parent=27 // pred_check_branch
          %4141 = sbr.rel (%p4139) target = $region77
        $region76: #{tpu_custom_call.1} parent=27 // pred_region
          %s4142 = smul.u32 4, %s23
          %s4144 = ssub.s32 512, 512
          %4145 = vsyncadd %s4135, %s4144
          %s4146 = sadd.s32 %s24, %s4142
          %s4147 = smul.addr %s22, 8
          %s4148 = sadd.s32 %s4146, %s4147
          %s4149 = smul.addr %s4148, 128
          %s4150 = scalar_lea.hbm %s3, %s4149
          %s4151 = sshll.u32 %s4138, 4
          %s4152 = int_to_ptr.vmem [resolvable:$true] %s4151
          %4157 = dma.vmem_to_hbm [thread:$0]  %s4152, 512, %s4150, %s4135, 128, 128, 8
        $region77: #{tpu_custom_call.1} parent=27 // pred_fallthru
          _
      $region28: #{tpu_custom_call.1} parent=5 // pred_fallthru
        _
      %p4158 = scmp.le.s32.totalorder 2, %s12
      // Predicated region
      $region78: #{tpu_custom_call.1} parent=5 // pred_check
        %p4159 = pneg %p4158
      $region79: #{tpu_custom_call.1} parent=5 // pred_check_branch
        %4161 = sbr.rel (%p4159) target = $region81
      $region80: #{tpu_custom_call.1} parent=5 // pred_region
        %s4162 = ssub.s32 %s12, 2
        // Predicated region
        $region82: #{tpu_custom_call.1} parent=80 // pred_check
          %p4163 = pneg %p116
        $region83: #{tpu_custom_call.1} parent=80 // pred_check_branch
          %4165 = sbr.rel (%p4163) target = $region85
        $region84: #{tpu_custom_call.1} parent=80 // pred_region
          %s4166 = sand.u32 %s101, 1
          %s4167 = scalar_lea.sflag [#allocation7], %s4166
          %s4168 = sand.u32 %s101, 1
          %s4169 = smul.addr %s4168, 32
          %s4170 = scalar_lea.vmem [#allocation6], %s4169
          %4171 = dma.done %s4167, 512
        $region85: #{tpu_custom_call.1} parent=80 // pred_fallthru
          _
      $region81: #{tpu_custom_call.1} parent=5 // pred_fallthru
        _
    $region6: #{tpu_custom_call.1} parent=1 // loop_footer
      %s16 = sadd.s32 1, %s12
    $region7: #{tpu_custom_call.1} parent=1 // loop_footer_branch
      %11 = sbr.rel target = $region3
    $region8: #{tpu_custom_call.1} parent=1 // loop_exit
      _
    %4172 = vsyncpa [#allocation7], 1
    %s4173 = scalar_lea.sflag [#allocation7], 1
    %4174 = vsyncpa %s4173, 1
  %4175 = vsyncmov [#allocation3]
  %s4176 = vpop.sfrf %4175
  %p4177 = scmp.eq.s32.totalorder %s4176, 0
  %p4178 = pneg %p4177
  %4180 = shalt.err (%p4178)

</llo_original>
